<compile_context>
chip_gen: v7x
topology: tpu7x:2x2x1
jax: 0.10.0
libtpu: 0.0.40
codegen_flags: <defaults>
</compile_context>

<pallas_src>
import functools

import numpy as np
import jax
import jax.numpy as jnp
from jax import lax
from jax.experimental import pallas as pl
from jax.experimental.pallas import tpu as pltpu


# ---------------------------------------------------------------------------
# static (shape-derived) constants built at trace time
# ---------------------------------------------------------------------------
@functools.lru_cache(maxsize=None)
def _gather_mats(in_w, kh, kw, stride, out_h, out_w, in_rows, out_cols):
    """0/1 selection matrices G[t] of shape (in_rows, out_cols).

    Column p of (A @ G[t]) picks the input pixel hit by tap t=(i,j) of output
    position p, i.e. stride-2 patch extraction expressed as a lane-dense matmul
    (no strided slicing inside the kernel).  Rows >= in_h*in_w and columns
    >= out_h*out_w are zero padding."""
    g = np.zeros((kh * kw, in_rows, out_cols), np.float32)
    for i in range(kh):
        for j in range(kw):
            t = i * kw + j
            for oh in range(out_h):
                for ow in range(out_w):
                    q = (stride * oh + i) * in_w + (stride * ow + j)
                    g[t, q, oh * out_w + ow] = 1.0
    return g


def _im2col_nchw(x, kh, kw, stride):
    """im2col of the raw NCHW input (host/XLA side; one small fused op).

    Returns (C*KH*KW, N, OH*OW) with rows in PyTorch (c, kh, kw) order so it
    matches conv1_w.reshape(OC, -1)."""
    n, c, h, w = x.shape
    oh = (h - kh) // stride + 1
    ow = (w - kw) // stride + 1
    taps = []
    for i in range(kh):
        for j in range(kw):
            taps.append(x[:, :, i:i + stride * oh:stride, j:j + stride * ow:stride])
    p = jnp.stack(taps, axis=0).reshape(kh, kw, n, c, oh, ow)
    p = jnp.transpose(p, (3, 0, 1, 2, 4, 5))          # (c, kh, kw, n, oh, ow)
    return p.reshape(c * kh * kw, n, oh * ow), oh, ow


# ---------------------------------------------------------------------------
# the fused Pallas kernel (one grid step == B_TILE samples)
# ---------------------------------------------------------------------------
def _cnn_fused_kernel(cols_ref, w1_ref, b1_ref, g2_ref, w2c_ref, b2_ref,
                      g3_ref, w3c_ref, b3_ref, lw_ref, lb_ref, out_ref,
                      *, b_tile, m1p):
    f32 = jnp.float32

    # ---- conv1 + ReLU for all b_tile samples at once: (OC1, b_tile*m1p) ----
    a1 = jnp.dot(w1_ref[...], cols_ref[...], preferred_element_type=f32)
    a1 = jnp.maximum(a1 + b1_ref[...], 0.0)

    # 0/1 gather matrices live in HBM/VMEM as bf16 (halves DMA); cast is exact.
    g2 = g2_ref[...].astype(f32)                       # (T2, m1p, m2p)
    g3 = g3_ref[...].astype(f32)                       # (T3, m2p, m3)
    w2c = w2c_ref[...]                                 # (OC2, T2*OC1)
    w3c = w3c_ref[...]                                 # (OC3, T3*OC2)
    lw = lw_ref[...]                                   # (n_out, OC3, m3)
    nt2 = g2_ref.shape[0]
    nt3 = g3_ref.shape[0]

    ys = []
    for b in range(b_tile):                            # static unroll; 128-aligned slices
        a1_b = a1[:, b * m1p:(b + 1) * m1p]            # (OC1, m1p)

        # ---- conv2 + ReLU: 9 gather matmuls, sublane concat, one K=72 mix ----
        p2 = jnp.concatenate(
            [jnp.dot(a1_b, g2[t], preferred_element_type=f32) for t in range(nt2)],
            axis=0)                                    # (T2*OC1, m2p)
        a2 = jnp.maximum(jnp.dot(w2c, p2, preferred_element_type=f32) + b2_ref[...], 0.0)

        # ---- conv3 + ReLU: 9 gather matmuls, sublane concat, one K=144 mix ---
        p3 = jnp.concatenate(
            [jnp.dot(a2, g3[t], preferred_element_type=f32) for t in range(nt3)],
            axis=0)                                    # (T3*OC2, m3)
        a3 = jnp.maximum(jnp.dot(w3c, p3, preferred_element_type=f32) + b3_ref[...], 0.0)

        # ---- Linear(512, 2): contraction over (OC3, m3), no flatten/reshape --
        prod = lw * a3[None, :, :]                     # (n_out, OC3, m3)
        y = jnp.sum(jnp.sum(prod, axis=2), axis=1, keepdims=True) + lb_ref[...]  # (n_out, 1)
        ys.append(y)

    # single slab store per grid step: (1, n_out, b_tile)
    out_ref[...] = jnp.concatenate(ys, axis=1)[None, :, :].astype(out_ref.dtype)


# ---------------------------------------------------------------------------
# cnn_net forward
# ---------------------------------------------------------------------------
@jax.jit
def cnn_net_forward(params, x):
    n = x.shape[0]
    w1 = params["conv1_w"]
    w2 = params["conv2_w"]
    w3 = params["conv3_w"]
    oc1, c1, kh1, kw1 = w1.shape
    oc2, _, kh2, kw2 = w2.shape
    oc3, _, kh3, kw3 = w3.shape
    s = 2  # all three convs use stride 2

    # conv1 im2col of the raw input; pad M1 to a multiple of 128 lanes.
    cols, oh1, ow1 = _im2col_nchw(x, kh1, kw1, s)      # (c1*kh1*kw1, n, m1)
    m1 = oh1 * ow1
    m1p = ((m1 + 127) // 128) * 128

    oh2, ow2 = (oh1 - kh2) // s + 1, (ow1 - kw2) // s + 1
    oh3, ow3 = (oh2 - kh3) // s + 1, (ow2 - kw3) // s + 1
    m2, m3 = oh2 * ow2, oh3 * ow3
    m2p = ((m2 + 127) // 128) * 128

    # Batch several samples per grid step; keep >= 2 steps when possible so the
    # "parallel" grid axis can shard across v7x's two TensorCores.
    b_tile = int(min(8, max(1, -(-n // 2))))
    grid = int(-(-n // b_tile))
    n_pad = grid * b_tile

    cols = jnp.pad(cols, ((0, 0), (0, n_pad - n), (0, m1p - m1)))
    cols = cols.reshape(c1 * kh1 * kw1, n_pad * m1p)

    g2_np = _gather_mats(ow1, kh2, kw2, s, oh2, ow2, m1p, m2p)   # (9, m1p, m2p)
    g3_np = _gather_mats(ow2, kh3, kw3, s, oh3, ow3, m2p, m3)    # (9, m2p, m3)
    # Padded lanes of a1/a2 hold relu(bias) != 0; correctness requires the gather
    # matrices to be zero on all padded rows (true by construction — assert it).
    assert not g2_np[:, m1:, :].any() and not g3_np[:, m2:, :].any()
    g2 = jnp.asarray(g2_np, dtype=jnp.bfloat16)        # entries are 0/1 -> exact in bf16
    g3 = jnp.asarray(g3_np, dtype=jnp.bfloat16)

    w1_2d = w1.reshape(oc1, c1 * kh1 * kw1)
    # fused channel-mix weights: rows (oc), cols in (kh, kw, ic) order to match the
    # sublane-concat of per-tap gather outputs.
    w2c = jnp.transpose(w2, (0, 2, 3, 1)).reshape(oc2, kh2 * kw2 * oc1)   # (16, 72)
    w3c = jnp.transpose(w3, (0, 2, 3, 1)).reshape(oc3, kh3 * kw3 * oc2)   # (32, 144)
    b1 = params["conv1_b"].reshape(oc1, 1)
    b2 = params["conv2_b"].reshape(oc2, 1)
    b3 = params["conv3_b"].reshape(oc3, 1)

    # TODO(synk): the PyTorch forward applies self.linear1 directly to the 4D conv
    # output (and uses nn.linear, which doesn't exist); in_features=512 only makes
    # sense after an NCHW view(N, -1) flatten, so that is what we implement.
    lw = params["lin1_w"]
    n_out = lw.shape[0]
    assert lw.shape[1] == oc3 * m3, (lw.shape, oc3, m3)
    lw3 = lw.reshape(n_out, oc3, m3)
    lb = params["lin1_b"].reshape(n_out, 1)

    kern = functools.partial(_cnn_fused_kernel, b_tile=b_tile, m1p=m1p)
    out = pl.pallas_call(
        kern,
        out_shape=jax.ShapeDtypeStruct((grid, n_out, b_tile), jnp.float32),
        grid=(grid,),
        in_specs=[
            pl.BlockSpec((c1 * kh1 * kw1, b_tile * m1p), lambda i: (0, i)),  # per-step cols
            pl.BlockSpec(w1_2d.shape, lambda i: (0, 0)),
            pl.BlockSpec(b1.shape, lambda i: (0, 0)),
            pl.BlockSpec(g2.shape, lambda i: (0, 0, 0)),
            pl.BlockSpec(w2c.shape, lambda i: (0, 0)),
            pl.BlockSpec(b2.shape, lambda i: (0, 0)),
            pl.BlockSpec(g3.shape, lambda i: (0, 0, 0)),
            pl.BlockSpec(w3c.shape, lambda i: (0, 0)),
            pl.BlockSpec(b3.shape, lambda i: (0, 0)),
            pl.BlockSpec(lw3.shape, lambda i: (0, 0, 0)),
            pl.BlockSpec(lb.shape, lambda i: (0, 0)),
        ],
        out_specs=pl.BlockSpec((1, n_out, b_tile), lambda i: (i, 0, 0)),
        compiler_params=pltpu.CompilerParams(
            dimension_semantics=("parallel",)),
    )(cols, w1_2d, b1, g2, w2c, b2, g3, w3c, b3, lw3, lb)

    # (grid, n_out, b_tile) -> (n_pad, n_out) -> (n, n_out)
    return jnp.transpose(out, (0, 2, 1)).reshape(n_pad, n_out)[:n]


# ---------------------------------------------------------------------------
# params & reference
# ---------------------------------------------------------------------------
def init_params(key, img_channels):
    def u(k, shape, fan_in):
        bound = 1.0 / jnp.sqrt(float(fan_in))
        return jax.random.uniform(k, shape, jnp.float32, -bound, bound)

    ks = jax.random.split(key, 8)
    return {
        "conv1_w": u(ks[0], (8, img_channels, 4, 4), img_channels * 16),
        "conv1_b": u(ks[1], (8,), img_channels * 16),
        "conv2_w": u(ks[2], (16, 8, 3, 3), 8 * 9),
        "conv2_b": u(ks[3], (16,), 8 * 9),
        "conv3_w": u(ks[4], (32, 16, 3, 3), 16 * 9),
        "conv3_b": u(ks[5], (32,), 16 * 9),
        "lin1_w": u(ks[6], (2, 512), 512),   # PyTorch Linear layout (out, in)
        "lin1_b": u(ks[7], (2,), 512),
    }


def _reference_forward(params, x):
    def conv(h, w, b, stride):
        y = lax.conv_general_dilated(
            h, w, (stride, stride), "VALID",
            dimension_numbers=("NCHW", "OIHW", "NCHW"),
            precision=lax.Precision.HIGHEST)
        return y + b[None, :, None, None]

    h = jnp.maximum(conv(x, params["conv1_w"], params["conv1_b"], 2), 0.0)
    h = jnp.maximum(conv(h, params["conv2_w"], params["conv2_b"], 2), 0.0)
    h = jnp.maximum(conv(h, params["conv3_w"], params["conv3_b"], 2), 0.0)
    flat = h.reshape(h.shape[0], -1)
    return (jnp.dot(flat, params["lin1_w"].T, precision=lax.Precision.HIGHEST)
            + params["lin1_b"])


if __name__ == "__main__":
    key = jax.random.PRNGKey(0)
    k_param, k_x = jax.random.split(key)

    # 3-channel 40x40 camera image: conv1->19x19, conv2->9x9, conv3->4x4,
    # so 32*4*4 = 512 = Linear in_features.
    params = init_params(k_param, img_channels=3)

    # batch 2: B_TILE=1, grid=2 (same per-step shape as before, 2 parallel steps)
    x2 = jax.random.normal(k_x, (2, 3, 40, 40), dtype=jnp.float32)
    out2 = jax.block_until_ready(cnn_net_forward(params, x2))
    assert out2.shape == (2, 2) and out2.dtype == jnp.float32
    ref2 = jax.block_until_ready(_reference_forward(params, x2))
    assert jnp.allclose(out2, ref2, atol=2e-2, rtol=2e-2), (out2, ref2)

    # batch 5 (odd): B_TILE=3, grid=2, exercises batch padding + inner sample loop
    x5 = jax.random.normal(jax.random.PRNGKey(1), (5, 3, 40, 40), dtype=jnp.float32)
    out5 = jax.block_until_ready(cnn_net_forward(params, x5))
    assert out5.shape == (5, 2)
    ref5 = jax.block_until_ready(_reference_forward(params, x5))
    assert jnp.allclose(out5, ref5, atol=2e-2, rtol=2e-2), (out5, ref5)

    print("KERNEL_OK")
</pallas_src>

<mosaic_0001>
module attributes {stable_mosaic.version = 11 : i64} {
  func.func @_cnn_fused_kernel(%arg0: i32, %arg1: memref<48x384xf32, #tpu.memory_space<vmem>>, %arg2: memref<8x48xf32, #tpu.memory_space<vmem>>, %arg3: memref<8x1xf32, #tpu.memory_space<vmem>>, %arg4: memref<9x384x128xbf16, #tpu.memory_space<vmem>>, %arg5: memref<16x72xf32, #tpu.memory_space<vmem>>, %arg6: memref<16x1xf32, #tpu.memory_space<vmem>>, %arg7: memref<9x128x16xbf16, #tpu.memory_space<vmem>>, %arg8: memref<32x144xf32, #tpu.memory_space<vmem>>, %arg9: memref<32x1xf32, #tpu.memory_space<vmem>>, %arg10: memref<2x32x16xf32, #tpu.memory_space<vmem>>, %arg11: memref<2x1xf32, #tpu.memory_space<vmem>>, %arg12: memref<1x2x1xf32, #tpu.memory_space<vmem>>) attributes {dimension_semantics = [#tpu.dimension_semantics<parallel>], iteration_bounds = array<i64: 2>, scalar_prefetch = 0 : i64, scratch_operands = 0 : i64, tpu.core_type = #tpu.core_type<tc>, window_params = [{transform_indices = @transform_0, window_bounds = array<i64: 48, 384>}, {pipeline_mode = #tpu.pipeline_mode<synchronous>, transform_indices = @transform_1, window_bounds = array<i64: 8, 48>}, {pipeline_mode = #tpu.pipeline_mode<synchronous>, transform_indices = @transform_2, window_bounds = array<i64: 8, 1>}, {pipeline_mode = #tpu.pipeline_mode<synchronous>, transform_indices = @transform_3, window_bounds = array<i64: 9, 384, 128>}, {pipeline_mode = #tpu.pipeline_mode<synchronous>, transform_indices = @transform_4, window_bounds = array<i64: 16, 72>}, {pipeline_mode = #tpu.pipeline_mode<synchronous>, transform_indices = @transform_5, window_bounds = array<i64: 16, 1>}, {pipeline_mode = #tpu.pipeline_mode<synchronous>, transform_indices = @transform_6, window_bounds = array<i64: 9, 128, 16>}, {pipeline_mode = #tpu.pipeline_mode<synchronous>, transform_indices = @transform_7, window_bounds = array<i64: 32, 144>}, {pipeline_mode = #tpu.pipeline_mode<synchronous>, transform_indices = @transform_8, window_bounds = array<i64: 32, 1>}, {pipeline_mode = #tpu.pipeline_mode<synchronous>, transform_indices = @transform_9, window_bounds = array<i64: 2, 32, 16>}, {pipeline_mode = #tpu.pipeline_mode<synchronous>, transform_indices = @transform_10, window_bounds = array<i64: 2, 1>}, {transform_indices = @transform_11, window_bounds = array<i64: 1, 2, 1>}]} {
    %c0 = arith.constant 0 : index
    %c0_0 = arith.constant 0 : index
    %0 = vector.load %arg2[%c0, %c0_0] : memref<8x48xf32, #tpu.memory_space<vmem>>, vector<8x48xf32>
    %c0_1 = arith.constant 0 : index
    %c0_2 = arith.constant 0 : index
    %1 = vector.load %arg1[%c0_1, %c0_2] : memref<48x384xf32, #tpu.memory_space<vmem>>, vector<48x384xf32>
    %cst = arith.constant dense<0.000000e+00> : vector<8x384xf32>
    %2 = tpu.matmul %0, %1, %cst {dimension_numbers = #tpu.dot_dimension_numbers<[1], [0], [0], [1], [0, 0, 1, 1], [], []>} : vector<8x48xf32>, vector<48x384xf32>, vector<8x384xf32> -> vector<8x384xf32>
    %c0_3 = arith.constant 0 : index
    %c0_4 = arith.constant 0 : index
    %3 = vector.load %arg3[%c0_3, %c0_4] : memref<8x1xf32, #tpu.memory_space<vmem>>, vector<8x1xf32>
    %4 = vector.broadcast %3 : vector<8x1xf32> to vector<8x384xf32>
    %5 = arith.addf %2, %4 : vector<8x384xf32>
    %cst_5 = arith.constant 0.000000e+00 : f32
    %6 = vector.broadcast %cst_5 : f32 to vector<8x384xf32>
    %7 = arith.maximumf %5, %6 : vector<8x384xf32>
    %c0_6 = arith.constant 0 : index
    %c0_7 = arith.constant 0 : index
    %c0_8 = arith.constant 0 : index
    %8 = vector.load %arg4[%c0_6, %c0_7, %c0_8] : memref<9x384x128xbf16, #tpu.memory_space<vmem>>, vector<9x384x128xbf16>
    %9 = arith.extf %8 : vector<9x384x128xbf16> to vector<9x384x128xf32>
    %c0_9 = arith.constant 0 : index
    %c0_10 = arith.constant 0 : index
    %c0_11 = arith.constant 0 : index
    %10 = vector.load %arg7[%c0_9, %c0_10, %c0_11] : memref<9x128x16xbf16, #tpu.memory_space<vmem>>, vector<9x128x16xbf16>
    %11 = arith.extf %10 : vector<9x128x16xbf16> to vector<9x128x16xf32>
    %c0_12 = arith.constant 0 : index
    %c0_13 = arith.constant 0 : index
    %12 = vector.load %arg5[%c0_12, %c0_13] : memref<16x72xf32, #tpu.memory_space<vmem>>, vector<16x72xf32>
    %c0_14 = arith.constant 0 : index
    %c0_15 = arith.constant 0 : index
    %13 = vector.load %arg8[%c0_14, %c0_15] : memref<32x144xf32, #tpu.memory_space<vmem>>, vector<32x144xf32>
    %c0_16 = arith.constant 0 : index
    %c0_17 = arith.constant 0 : index
    %c0_18 = arith.constant 0 : index
    %14 = vector.load %arg10[%c0_16, %c0_17, %c0_18] : memref<2x32x16xf32, #tpu.memory_space<vmem>>, vector<2x32x16xf32>
    %15 = vector.extract_strided_slice %9 {offsets = [0, 0, 0], sizes = [1, 384, 128], strides = [1, 1, 1]} : vector<9x384x128xf32> to vector<1x384x128xf32>
    %16 = vector.shape_cast %15 : vector<1x384x128xf32> to vector<384x128xf32>
    %cst_19 = arith.constant dense<0.000000e+00> : vector<8x128xf32>
    %17 = tpu.matmul %7, %16, %cst_19 {dimension_numbers = #tpu.dot_dimension_numbers<[1], [0], [0], [1], [0, 0, 1, 1], [], []>} : vector<8x384xf32>, vector<384x128xf32>, vector<8x128xf32> -> vector<8x128xf32>
    %18 = vector.extract_strided_slice %9 {offsets = [1, 0, 0], sizes = [1, 384, 128], strides = [1, 1, 1]} : vector<9x384x128xf32> to vector<1x384x128xf32>
    %19 = vector.shape_cast %18 : vector<1x384x128xf32> to vector<384x128xf32>
    %cst_20 = arith.constant dense<0.000000e+00> : vector<8x128xf32>
    %20 = tpu.matmul %7, %19, %cst_20 {dimension_numbers = #tpu.dot_dimension_numbers<[1], [0], [0], [1], [0, 0, 1, 1], [], []>} : vector<8x384xf32>, vector<384x128xf32>, vector<8x128xf32> -> vector<8x128xf32>
    %21 = vector.extract_strided_slice %9 {offsets = [2, 0, 0], sizes = [1, 384, 128], strides = [1, 1, 1]} : vector<9x384x128xf32> to vector<1x384x128xf32>
    %22 = vector.shape_cast %21 : vector<1x384x128xf32> to vector<384x128xf32>
    %cst_21 = arith.constant dense<0.000000e+00> : vector<8x128xf32>
    %23 = tpu.matmul %7, %22, %cst_21 {dimension_numbers = #tpu.dot_dimension_numbers<[1], [0], [0], [1], [0, 0, 1, 1], [], []>} : vector<8x384xf32>, vector<384x128xf32>, vector<8x128xf32> -> vector<8x128xf32>
    %24 = vector.extract_strided_slice %9 {offsets = [3, 0, 0], sizes = [1, 384, 128], strides = [1, 1, 1]} : vector<9x384x128xf32> to vector<1x384x128xf32>
    %25 = vector.shape_cast %24 : vector<1x384x128xf32> to vector<384x128xf32>
    %cst_22 = arith.constant dense<0.000000e+00> : vector<8x128xf32>
    %26 = tpu.matmul %7, %25, %cst_22 {dimension_numbers = #tpu.dot_dimension_numbers<[1], [0], [0], [1], [0, 0, 1, 1], [], []>} : vector<8x384xf32>, vector<384x128xf32>, vector<8x128xf32> -> vector<8x128xf32>
    %27 = vector.extract_strided_slice %9 {offsets = [4, 0, 0], sizes = [1, 384, 128], strides = [1, 1, 1]} : vector<9x384x128xf32> to vector<1x384x128xf32>
    %28 = vector.shape_cast %27 : vector<1x384x128xf32> to vector<384x128xf32>
    %cst_23 = arith.constant dense<0.000000e+00> : vector<8x128xf32>
    %29 = tpu.matmul %7, %28, %cst_23 {dimension_numbers = #tpu.dot_dimension_numbers<[1], [0], [0], [1], [0, 0, 1, 1], [], []>} : vector<8x384xf32>, vector<384x128xf32>, vector<8x128xf32> -> vector<8x128xf32>
    %30 = vector.extract_strided_slice %9 {offsets = [5, 0, 0], sizes = [1, 384, 128], strides = [1, 1, 1]} : vector<9x384x128xf32> to vector<1x384x128xf32>
    %31 = vector.shape_cast %30 : vector<1x384x128xf32> to vector<384x128xf32>
    %cst_24 = arith.constant dense<0.000000e+00> : vector<8x128xf32>
    %32 = tpu.matmul %7, %31, %cst_24 {dimension_numbers = #tpu.dot_dimension_numbers<[1], [0], [0], [1], [0, 0, 1, 1], [], []>} : vector<8x384xf32>, vector<384x128xf32>, vector<8x128xf32> -> vector<8x128xf32>
    %33 = vector.extract_strided_slice %9 {offsets = [6, 0, 0], sizes = [1, 384, 128], strides = [1, 1, 1]} : vector<9x384x128xf32> to vector<1x384x128xf32>
    %34 = vector.shape_cast %33 : vector<1x384x128xf32> to vector<384x128xf32>
    %cst_25 = arith.constant dense<0.000000e+00> : vector<8x128xf32>
    %35 = tpu.matmul %7, %34, %cst_25 {dimension_numbers = #tpu.dot_dimension_numbers<[1], [0], [0], [1], [0, 0, 1, 1], [], []>} : vector<8x384xf32>, vector<384x128xf32>, vector<8x128xf32> -> vector<8x128xf32>
    %36 = vector.extract_strided_slice %9 {offsets = [7, 0, 0], sizes = [1, 384, 128], strides = [1, 1, 1]} : vector<9x384x128xf32> to vector<1x384x128xf32>
    %37 = vector.shape_cast %36 : vector<1x384x128xf32> to vector<384x128xf32>
    %cst_26 = arith.constant dense<0.000000e+00> : vector<8x128xf32>
    %38 = tpu.matmul %7, %37, %cst_26 {dimension_numbers = #tpu.dot_dimension_numbers<[1], [0], [0], [1], [0, 0, 1, 1], [], []>} : vector<8x384xf32>, vector<384x128xf32>, vector<8x128xf32> -> vector<8x128xf32>
    %39 = vector.extract_strided_slice %9 {offsets = [8, 0, 0], sizes = [1, 384, 128], strides = [1, 1, 1]} : vector<9x384x128xf32> to vector<1x384x128xf32>
    %40 = vector.shape_cast %39 : vector<1x384x128xf32> to vector<384x128xf32>
    %cst_27 = arith.constant dense<0.000000e+00> : vector<8x128xf32>
    %41 = tpu.matmul %7, %40, %cst_27 {dimension_numbers = #tpu.dot_dimension_numbers<[1], [0], [0], [1], [0, 0, 1, 1], [], []>} : vector<8x384xf32>, vector<384x128xf32>, vector<8x128xf32> -> vector<8x128xf32>
    %42 = tpu.concatenate %17, %20, %23, %26, %29, %32, %35, %38, %41 in 0 : vector<8x128xf32>, vector<8x128xf32>, vector<8x128xf32>, vector<8x128xf32>, vector<8x128xf32>, vector<8x128xf32>, vector<8x128xf32>, vector<8x128xf32>, vector<8x128xf32> -> vector<72x128xf32>
    %cst_28 = arith.constant dense<0.000000e+00> : vector<16x128xf32>
    %43 = tpu.matmul %12, %42, %cst_28 {dimension_numbers = #tpu.dot_dimension_numbers<[1], [0], [0], [1], [0, 0, 1, 1], [], []>} : vector<16x72xf32>, vector<72x128xf32>, vector<16x128xf32> -> vector<16x128xf32>
    %c0_29 = arith.constant 0 : index
    %c0_30 = arith.constant 0 : index
    %44 = vector.load %arg6[%c0_29, %c0_30] : memref<16x1xf32, #tpu.memory_space<vmem>>, vector<16x1xf32>
    %45 = vector.broadcast %44 : vector<16x1xf32> to vector<16x128xf32>
    %46 = arith.addf %43, %45 : vector<16x128xf32>
    %cst_31 = arith.constant 0.000000e+00 : f32
    %47 = vector.broadcast %cst_31 : f32 to vector<16x128xf32>
    %48 = arith.maximumf %46, %47 : vector<16x128xf32>
    %49 = vector.extract_strided_slice %11 {offsets = [0, 0, 0], sizes = [1, 128, 16], strides = [1, 1, 1]} : vector<9x128x16xf32> to vector<1x128x16xf32>
    %50 = vector.shape_cast %49 : vector<1x128x16xf32> to vector<128x16xf32>
    %cst_32 = arith.constant dense<0.000000e+00> : vector<16x16xf32>
    %51 = tpu.matmul %48, %50, %cst_32 {dimension_numbers = #tpu.dot_dimension_numbers<[1], [0], [0], [1], [0, 0, 1, 1], [], []>} : vector<16x128xf32>, vector<128x16xf32>, vector<16x16xf32> -> vector<16x16xf32>
    %52 = vector.extract_strided_slice %11 {offsets = [1, 0, 0], sizes = [1, 128, 16], strides = [1, 1, 1]} : vector<9x128x16xf32> to vector<1x128x16xf32>
    %53 = vector.shape_cast %52 : vector<1x128x16xf32> to vector<128x16xf32>
    %cst_33 = arith.constant dense<0.000000e+00> : vector<16x16xf32>
    %54 = tpu.matmul %48, %53, %cst_33 {dimension_numbers = #tpu.dot_dimension_numbers<[1], [0], [0], [1], [0, 0, 1, 1], [], []>} : vector<16x128xf32>, vector<128x16xf32>, vector<16x16xf32> -> vector<16x16xf32>
    %55 = vector.extract_strided_slice %11 {offsets = [2, 0, 0], sizes = [1, 128, 16], strides = [1, 1, 1]} : vector<9x128x16xf32> to vector<1x128x16xf32>
    %56 = vector.shape_cast %55 : vector<1x128x16xf32> to vector<128x16xf32>
    %cst_34 = arith.constant dense<0.000000e+00> : vector<16x16xf32>
    %57 = tpu.matmul %48, %56, %cst_34 {dimension_numbers = #tpu.dot_dimension_numbers<[1], [0], [0], [1], [0, 0, 1, 1], [], []>} : vector<16x128xf32>, vector<128x16xf32>, vector<16x16xf32> -> vector<16x16xf32>
    %58 = vector.extract_strided_slice %11 {offsets = [3, 0, 0], sizes = [1, 128, 16], strides = [1, 1, 1]} : vector<9x128x16xf32> to vector<1x128x16xf32>
    %59 = vector.shape_cast %58 : vector<1x128x16xf32> to vector<128x16xf32>
    %cst_35 = arith.constant dense<0.000000e+00> : vector<16x16xf32>
    %60 = tpu.matmul %48, %59, %cst_35 {dimension_numbers = #tpu.dot_dimension_numbers<[1], [0], [0], [1], [0, 0, 1, 1], [], []>} : vector<16x128xf32>, vector<128x16xf32>, vector<16x16xf32> -> vector<16x16xf32>
    %61 = vector.extract_strided_slice %11 {offsets = [4, 0, 0], sizes = [1, 128, 16], strides = [1, 1, 1]} : vector<9x128x16xf32> to vector<1x128x16xf32>
    %62 = vector.shape_cast %61 : vector<1x128x16xf32> to vector<128x16xf32>
    %cst_36 = arith.constant dense<0.000000e+00> : vector<16x16xf32>
    %63 = tpu.matmul %48, %62, %cst_36 {dimension_numbers = #tpu.dot_dimension_numbers<[1], [0], [0], [1], [0, 0, 1, 1], [], []>} : vector<16x128xf32>, vector<128x16xf32>, vector<16x16xf32> -> vector<16x16xf32>
    %64 = vector.extract_strided_slice %11 {offsets = [5, 0, 0], sizes = [1, 128, 16], strides = [1, 1, 1]} : vector<9x128x16xf32> to vector<1x128x16xf32>
    %65 = vector.shape_cast %64 : vector<1x128x16xf32> to vector<128x16xf32>
    %cst_37 = arith.constant dense<0.000000e+00> : vector<16x16xf32>
    %66 = tpu.matmul %48, %65, %cst_37 {dimension_numbers = #tpu.dot_dimension_numbers<[1], [0], [0], [1], [0, 0, 1, 1], [], []>} : vector<16x128xf32>, vector<128x16xf32>, vector<16x16xf32> -> vector<16x16xf32>
    %67 = vector.extract_strided_slice %11 {offsets = [6, 0, 0], sizes = [1, 128, 16], strides = [1, 1, 1]} : vector<9x128x16xf32> to vector<1x128x16xf32>
    %68 = vector.shape_cast %67 : vector<1x128x16xf32> to vector<128x16xf32>
    %cst_38 = arith.constant dense<0.000000e+00> : vector<16x16xf32>
    %69 = tpu.matmul %48, %68, %cst_38 {dimension_numbers = #tpu.dot_dimension_numbers<[1], [0], [0], [1], [0, 0, 1, 1], [], []>} : vector<16x128xf32>, vector<128x16xf32>, vector<16x16xf32> -> vector<16x16xf32>
    %70 = vector.extract_strided_slice %11 {offsets = [7, 0, 0], sizes = [1, 128, 16], strides = [1, 1, 1]} : vector<9x128x16xf32> to vector<1x128x16xf32>
    %71 = vector.shape_cast %70 : vector<1x128x16xf32> to vector<128x16xf32>
    %cst_39 = arith.constant dense<0.000000e+00> : vector<16x16xf32>
    %72 = tpu.matmul %48, %71, %cst_39 {dimension_numbers = #tpu.dot_dimension_numbers<[1], [0], [0], [1], [0, 0, 1, 1], [], []>} : vector<16x128xf32>, vector<128x16xf32>, vector<16x16xf32> -> vector<16x16xf32>
    %73 = vector.extract_strided_slice %11 {offsets = [8, 0, 0], sizes = [1, 128, 16], strides = [1, 1, 1]} : vector<9x128x16xf32> to vector<1x128x16xf32>
    %74 = vector.shape_cast %73 : vector<1x128x16xf32> to vector<128x16xf32>
    %cst_40 = arith.constant dense<0.000000e+00> : vector<16x16xf32>
    %75 = tpu.matmul %48, %74, %cst_40 {dimension_numbers = #tpu.dot_dimension_numbers<[1], [0], [0], [1], [0, 0, 1, 1], [], []>} : vector<16x128xf32>, vector<128x16xf32>, vector<16x16xf32> -> vector<16x16xf32>
    %76 = tpu.concatenate %51, %54, %57, %60, %63, %66, %69, %72, %75 in 0 : vector<16x16xf32>, vector<16x16xf32>, vector<16x16xf32>, vector<16x16xf32>, vector<16x16xf32>, vector<16x16xf32>, vector<16x16xf32>, vector<16x16xf32>, vector<16x16xf32> -> vector<144x16xf32>
    %cst_41 = arith.constant dense<0.000000e+00> : vector<32x16xf32>
    %77 = tpu.matmul %13, %76, %cst_41 {dimension_numbers = #tpu.dot_dimension_numbers<[1], [0], [0], [1], [0, 0, 1, 1], [], []>} : vector<32x144xf32>, vector<144x16xf32>, vector<32x16xf32> -> vector<32x16xf32>
    %c0_42 = arith.constant 0 : index
    %c0_43 = arith.constant 0 : index
    %78 = vector.load %arg9[%c0_42, %c0_43] : memref<32x1xf32, #tpu.memory_space<vmem>>, vector<32x1xf32>
    %79 = vector.broadcast %78 : vector<32x1xf32> to vector<32x16xf32>
    %80 = arith.addf %77, %79 : vector<32x16xf32>
    %cst_44 = arith.constant 0.000000e+00 : f32
    %81 = vector.broadcast %cst_44 : f32 to vector<32x16xf32>
    %82 = arith.maximumf %80, %81 : vector<32x16xf32>
    %83 = vector.shape_cast %82 : vector<32x16xf32> to vector<1x32x16xf32>
    %84 = vector.broadcast %83 : vector<1x32x16xf32> to vector<2x32x16xf32>
    %85 = arith.mulf %14, %84 : vector<2x32x16xf32>
    %cst_45 = arith.constant dense<0.000000e+00> : vector<2x32xf32>
    %86 = vector.multi_reduction <add>, %85, %cst_45 [2] : vector<2x32x16xf32> to vector<2x32xf32>
    %cst_46 = arith.constant dense<0.000000e+00> : vector<2xf32>
    %87 = vector.multi_reduction <add>, %86, %cst_46 [1] : vector<2x32xf32> to vector<2xf32>
    %88 = vector.shape_cast %87 : vector<2xf32> to vector<2x1xf32>
    %c0_47 = arith.constant 0 : index
    %c0_48 = arith.constant 0 : index
    %89 = vector.load %arg11[%c0_47, %c0_48] : memref<2x1xf32, #tpu.memory_space<vmem>>, vector<2x1xf32>
    %90 = arith.addf %88, %89 : vector<2x1xf32>
    %91 = vector.shape_cast %90 : vector<2x1xf32> to vector<1x2x1xf32>
    %c0_49 = arith.constant 0 : index
    %c0_50 = arith.constant 0 : index
    %c0_51 = arith.constant 0 : index
    %92 = vector.load %arg12[%c0_49, %c0_50, %c0_51] : memref<1x2x1xf32, #tpu.memory_space<vmem>>, vector<1x2x1xf32>
    tpu.vector_store %arg12[%c0_49, %c0_50, %c0_51], %91 {strides = array<i32>} : memref<1x2x1xf32, #tpu.memory_space<vmem>>, vector<1x2x1xf32>,
    return
  }
  func.func @transform_0(%arg0: i32) -> (i32, i32) {
    %c0_i32 = arith.constant 0 : i32
    %c0_i32_0 = arith.constant 0 : i32
    return %c0_i32, %arg0 : i32, i32
  }
  func.func @transform_1(%arg0: i32) -> (i32, i32) {
    %c0_i32 = arith.constant 0 : i32
    %c0_i32_0 = arith.constant 0 : i32
    %c0_i32_1 = arith.constant 0 : i32
    return %c0_i32, %c0_i32_0 : i32, i32
  }
  func.func @transform_2(%arg0: i32) -> (i32, i32) {
    %c0_i32 = arith.constant 0 : i32
    %c0_i32_0 = arith.constant 0 : i32
    %c0_i32_1 = arith.constant 0 : i32
    return %c0_i32, %c0_i32_0 : i32, i32
  }
  func.func @transform_3(%arg0: i32) -> (i32, i32, i32) {
    %c0_i32 = arith.constant 0 : i32
    %c0_i32_0 = arith.constant 0 : i32
    %c0_i32_1 = arith.constant 0 : i32
    %c0_i32_2 = arith.constant 0 : i32
    return %c0_i32, %c0_i32_0, %c0_i32_1 : i32, i32, i32
  }
  func.func @transform_4(%arg0: i32) -> (i32, i32) {
    %c0_i32 = arith.constant 0 : i32
    %c0_i32_0 = arith.constant 0 : i32
    %c0_i32_1 = arith.constant 0 : i32
    return %c0_i32, %c0_i32_0 : i32, i32
  }
  func.func @transform_5(%arg0: i32) -> (i32, i32) {
    %c0_i32 = arith.constant 0 : i32
    %c0_i32_0 = arith.constant 0 : i32
    %c0_i32_1 = arith.constant 0 : i32
    return %c0_i32, %c0_i32_0 : i32, i32
  }
  func.func @transform_6(%arg0: i32) -> (i32, i32, i32) {
    %c0_i32 = arith.constant 0 : i32
    %c0_i32_0 = arith.constant 0 : i32
    %c0_i32_1 = arith.constant 0 : i32
    %c0_i32_2 = arith.constant 0 : i32
    return %c0_i32, %c0_i32_0, %c0_i32_1 : i32, i32, i32
  }
  func.func @transform_7(%arg0: i32) -> (i32, i32) {
    %c0_i32 = arith.constant 0 : i32
    %c0_i32_0 = arith.constant 0 : i32
    %c0_i32_1 = arith.constant 0 : i32
    return %c0_i32, %c0_i32_0 : i32, i32
  }
  func.func @transform_8(%arg0: i32) -> (i32, i32) {
    %c0_i32 = arith.constant 0 : i32
    %c0_i32_0 = arith.constant 0 : i32
    %c0_i32_1 = arith.constant 0 : i32
    return %c0_i32, %c0_i32_0 : i32, i32
  }
  func.func @transform_9(%arg0: i32) -> (i32, i32, i32) {
    %c0_i32 = arith.constant 0 : i32
    %c0_i32_0 = arith.constant 0 : i32
    %c0_i32_1 = arith.constant 0 : i32
    %c0_i32_2 = arith.constant 0 : i32
    return %c0_i32, %c0_i32_0, %c0_i32_1 : i32, i32, i32
  }
  func.func @transform_10(%arg0: i32) -> (i32, i32) {
    %c0_i32 = arith.constant 0 : i32
    %c0_i32_0 = arith.constant 0 : i32
    %c0_i32_1 = arith.constant 0 : i32
    return %c0_i32, %c0_i32_0 : i32, i32
  }
  func.func @transform_11(%arg0: i32) -> (i32, i32, i32) {
    %c0_i32 = arith.constant 0 : i32
    %c0_i32_0 = arith.constant 0 : i32
    %c0_i32_1 = arith.constant 0 : i32
    return %arg0, %c0_i32, %c0_i32_0 : i32, i32, i32
  }
}

</mosaic_0001>

<llo_original>
// kernel: cnn_net_forward.1
$region0: #{cnn_net_forward.1}
  #allocation0 [shape = 'u32[]', space=smem, size = 0x4, offset = 0x4, fixed_abs, tag = 'smem constant byte address 0x4 - core index']
  #allocation1 [shape = 'u32[144,128]{1,0:T(1,128)}', space=vmem, size = 0x12000, scoped, tag = 'internal scratch']
  %s0 = inlined_call_operand.vmem [shape: f32[48,768], index: 0, kind: input, shape index: {}]
  %s1 = inlined_call_operand.vmem [shape: f32[8,48], index: 1, kind: input, shape index: {}]
  %s2 = inlined_call_operand.vmem [shape: f32[8,1], index: 2, kind: input, shape index: {}]
  %s3 = inlined_call_operand.vmem [shape: bf16[9,384,128], index: 3, kind: input, shape index: {}]
  %s4 = inlined_call_operand.vmem [shape: f32[16,72], index: 4, kind: input, shape index: {}]
  %s5 = inlined_call_operand.vmem [shape: f32[16,1], index: 5, kind: input, shape index: {}]
  %s6 = inlined_call_operand.vmem [shape: bf16[9,128,16], index: 6, kind: input, shape index: {}]
  %s7 = inlined_call_operand.vmem [shape: f32[32,144], index: 7, kind: input, shape index: {}]
  %s8 = inlined_call_operand.vmem [shape: f32[32,1], index: 8, kind: input, shape index: {}]
  %s9 = inlined_call_operand.vmem [shape: f32[2,32,16], index: 9, kind: input, shape index: {}]
  %s10 = inlined_call_operand.vmem [shape: f32[2,1], index: 10, kind: input, shape index: {}]
  %s11 = inlined_call_operand.vmem [shape: f32[2,2,1], index: 11, kind: output, shape index: {}]
  %s12 = sld [smem:[#allocation0]]
  $region100: #{cnn_net_forward.1} parent=0
    _
  %s14 = ssub.s32 1, %s12
  %s15 = scalar_select 0, %s14, %s12
  $region1: #{cnn_net_forward.1} parent=0
    #allocation2 [shape = 'u8[147456]{0}', space=vmem, size = 0x24000, scoped, tag = 'input window, operand 0']
    loop: start=0, step=1, limit=4
    $region2: #{cnn_net_forward.1} parent=1 // loop_pre_header
      _
    $region3: #{cnn_net_forward.1} parent=1 // loop_header
      %s17 = sphi 0, %s21
      %p18 = scmp.ge.s32.totalorder %s17, 4
      %s27 = sphi 0, %s29
      %s30 = sphi 0, %s27
      %s31 = sphi 0, %s30
      %s47 = sphi 0, %s31
      %s51 = sphi 0, %s51
      %s53 = sphi 0, %s51
      %s54 = sphi 0, %s53
      %s68 = sphi 0, %s54
      %s72 = sphi 0, %s72
      %s74 = sphi 0, %s72
      %s75 = sphi 0, %s74
      %s89 = sphi 0, %s75
      %s93 = sphi 0, %s93
      %s95 = sphi 0, %s93
      %s96 = sphi 0, %s95
      %s110 = sphi 0, %s96
      %s114 = sphi 0, %s114
      %s116 = sphi 0, %s114
      %s117 = sphi 0, %s116
      %s131 = sphi 0, %s117
      %s135 = sphi 0, %s135
      %s137 = sphi 0, %s135
      %s138 = sphi 0, %s137
      %s152 = sphi 0, %s138
      %s156 = sphi 0, %s156
      %s158 = sphi 0, %s156
      %s159 = sphi 0, %s158
      %s173 = sphi 0, %s159
      %s177 = sphi 0, %s177
      %s179 = sphi 0, %s177
      %s180 = sphi 0, %s179
      %s194 = sphi 0, %s180
      %s198 = sphi 0, %s198
      %s200 = sphi 0, %s198
      %s201 = sphi 0, %s200
      %s215 = sphi 0, %s201
      %s219 = sphi 0, %s219
      %s221 = sphi 0, %s219
      %s222 = sphi 0, %s221
      %s236 = sphi 0, %s222
      %s240 = sphi 0, %s240
      %s242 = sphi 0, %s240
      %s243 = sphi 0, %s242
      %s257 = sphi 0, %s243
      %s263 = sphi 0, %s265
      %s266 = sphi 0, %s263
      %s267 = sphi 0, %s266
      %s283 = sphi 0, %s267
    $region4: #{cnn_net_forward.1} parent=1 // loop_header_branch
      %20 = sbr.rel (%p18) target = $region8
    $region5: #{cnn_net_forward.1} parent=1 // loop_body
      %s22 = ssub.s32 %s17, 1
      %s23 = ssub.s32 %s17, 2
      %s24 = sadd.s32 %s17, 1
      %s25 = ssub.s32 %s17, %s24
      %p26 = scmp.eq.s32.totalorder %s25, 0
      %s28 = sadd.s32 %s27, 1
      %s29 = scalar_select %p26, %s27, %s28
      %p32 = pneg %p26
      %p33 = scmp.eq.s32.totalorder %s17, 1
      %p34 = por %p32, %p33
      %p35 = scmp.ne.s32.totalorder %s27, %s30
      %p36 = scmp.eq.s32.totalorder %s17, 0
      %p37 = por %p35, %p36
      %p38 = scmp.ne.s32.totalorder %s27, %s30
      %p39 = scmp.eq.s32.totalorder %s22, 1
      %p40 = por %p38, %p39
      %p41 = scmp.ne.s32.totalorder %s30, %s31
      %p42 = scmp.eq.s32.totalorder %s22, 0
      %p43 = por %p41, %p42
      %p44 = scmp.ne.s32.totalorder %s30, %s31
      %p45 = scmp.eq.s32.totalorder %s23, 1
      %p46 = por %p44, %p45
      %p48 = scmp.ne.s32.totalorder %s31, %s47
      %p49 = scmp.eq.s32.totalorder %s23, 0
      %p50 = por %p48, %p49
      %s52 = sadd.s32 %s51, 1
      %p55 = scmp.eq.s32.totalorder %s17, 1
      %p56 = scmp.ne.s32.totalorder %s51, %s53
      %p57 = scmp.eq.s32.totalorder %s17, 0
      %p58 = por %p56, %p57
      %p59 = scmp.ne.s32.totalorder %s51, %s53
      %p60 = scmp.eq.s32.totalorder %s22, 1
      %p61 = por %p59, %p60
      %p62 = scmp.ne.s32.totalorder %s53, %s54
      %p63 = scmp.eq.s32.totalorder %s22, 0
      %p64 = por %p62, %p63
      %p65 = scmp.ne.s32.totalorder %s53, %s54
      %p66 = scmp.eq.s32.totalorder %s23, 1
      %p67 = por %p65, %p66
      %p69 = scmp.ne.s32.totalorder %s54, %s68
      %p70 = scmp.eq.s32.totalorder %s23, 0
      %p71 = por %p69, %p70
      %s73 = sadd.s32 %s72, 1
      %p76 = scmp.eq.s32.totalorder %s17, 1
      %p77 = scmp.ne.s32.totalorder %s72, %s74
      %p78 = scmp.eq.s32.totalorder %s17, 0
      %p79 = por %p77, %p78
      %p80 = scmp.ne.s32.totalorder %s72, %s74
      %p81 = scmp.eq.s32.totalorder %s22, 1
      %p82 = por %p80, %p81
      %p83 = scmp.ne.s32.totalorder %s74, %s75
      %p84 = scmp.eq.s32.totalorder %s22, 0
      %p85 = por %p83, %p84
      %p86 = scmp.ne.s32.totalorder %s74, %s75
      %p87 = scmp.eq.s32.totalorder %s23, 1
      %p88 = por %p86, %p87
      %p90 = scmp.ne.s32.totalorder %s75, %s89
      %p91 = scmp.eq.s32.totalorder %s23, 0
      %p92 = por %p90, %p91
      %s94 = sadd.s32 %s93, 1
      %p97 = scmp.eq.s32.totalorder %s17, 1
      %p98 = scmp.ne.s32.totalorder %s93, %s95
      %p99 = scmp.eq.s32.totalorder %s17, 0
      %p100 = por %p98, %p99
      %p101 = scmp.ne.s32.totalorder %s93, %s95
      %p102 = scmp.eq.s32.totalorder %s22, 1
      %p103 = por %p101, %p102
      %p104 = scmp.ne.s32.totalorder %s95, %s96
      %p105 = scmp.eq.s32.totalorder %s22, 0
      %p106 = por %p104, %p105
      %p107 = scmp.ne.s32.totalorder %s95, %s96
      %p108 = scmp.eq.s32.totalorder %s23, 1
      %p109 = por %p107, %p108
      %p111 = scmp.ne.s32.totalorder %s96, %s110
      %p112 = scmp.eq.s32.totalorder %s23, 0
      %p113 = por %p111, %p112
      %s115 = sadd.s32 %s114, 1
      %p118 = scmp.eq.s32.totalorder %s17, 1
      %p119 = scmp.ne.s32.totalorder %s114, %s116
      %p120 = scmp.eq.s32.totalorder %s17, 0
      %p121 = por %p119, %p120
      %p122 = scmp.ne.s32.totalorder %s114, %s116
      %p123 = scmp.eq.s32.totalorder %s22, 1
      %p124 = por %p122, %p123
      %p125 = scmp.ne.s32.totalorder %s116, %s117
      %p126 = scmp.eq.s32.totalorder %s22, 0
      %p127 = por %p125, %p126
      %p128 = scmp.ne.s32.totalorder %s116, %s117
      %p129 = scmp.eq.s32.totalorder %s23, 1
      %p130 = por %p128, %p129
      %p132 = scmp.ne.s32.totalorder %s117, %s131
      %p133 = scmp.eq.s32.totalorder %s23, 0
      %p134 = por %p132, %p133
      %s136 = sadd.s32 %s135, 1
      %p139 = scmp.eq.s32.totalorder %s17, 1
      %p140 = scmp.ne.s32.totalorder %s135, %s137
      %p141 = scmp.eq.s32.totalorder %s17, 0
      %p142 = por %p140, %p141
      %p143 = scmp.ne.s32.totalorder %s135, %s137
      %p144 = scmp.eq.s32.totalorder %s22, 1
      %p145 = por %p143, %p144
      %p146 = scmp.ne.s32.totalorder %s137, %s138
      %p147 = scmp.eq.s32.totalorder %s22, 0
      %p148 = por %p146, %p147
      %p149 = scmp.ne.s32.totalorder %s137, %s138
      %p150 = scmp.eq.s32.totalorder %s23, 1
      %p151 = por %p149, %p150
      %p153 = scmp.ne.s32.totalorder %s138, %s152
      %p154 = scmp.eq.s32.totalorder %s23, 0
      %p155 = por %p153, %p154
      %s157 = sadd.s32 %s156, 1
      %p160 = scmp.eq.s32.totalorder %s17, 1
      %p161 = scmp.ne.s32.totalorder %s156, %s158
      %p162 = scmp.eq.s32.totalorder %s17, 0
      %p163 = por %p161, %p162
      %p164 = scmp.ne.s32.totalorder %s156, %s158
      %p165 = scmp.eq.s32.totalorder %s22, 1
      %p166 = por %p164, %p165
      %p167 = scmp.ne.s32.totalorder %s158, %s159
      %p168 = scmp.eq.s32.totalorder %s22, 0
      %p169 = por %p167, %p168
      %p170 = scmp.ne.s32.totalorder %s158, %s159
      %p171 = scmp.eq.s32.totalorder %s23, 1
      %p172 = por %p170, %p171
      %p174 = scmp.ne.s32.totalorder %s159, %s173
      %p175 = scmp.eq.s32.totalorder %s23, 0
      %p176 = por %p174, %p175
      %s178 = sadd.s32 %s177, 1
      %p181 = scmp.eq.s32.totalorder %s17, 1
      %p182 = scmp.ne.s32.totalorder %s177, %s179
      %p183 = scmp.eq.s32.totalorder %s17, 0
      %p184 = por %p182, %p183
      %p185 = scmp.ne.s32.totalorder %s177, %s179
      %p186 = scmp.eq.s32.totalorder %s22, 1
      %p187 = por %p185, %p186
      %p188 = scmp.ne.s32.totalorder %s179, %s180
      %p189 = scmp.eq.s32.totalorder %s22, 0
      %p190 = por %p188, %p189
      %p191 = scmp.ne.s32.totalorder %s179, %s180
      %p192 = scmp.eq.s32.totalorder %s23, 1
      %p193 = por %p191, %p192
      %p195 = scmp.ne.s32.totalorder %s180, %s194
      %p196 = scmp.eq.s32.totalorder %s23, 0
      %p197 = por %p195, %p196
      %s199 = sadd.s32 %s198, 1
      %p202 = scmp.eq.s32.totalorder %s17, 1
      %p203 = scmp.ne.s32.totalorder %s198, %s200
      %p204 = scmp.eq.s32.totalorder %s17, 0
      %p205 = por %p203, %p204
      %p206 = scmp.ne.s32.totalorder %s198, %s200
      %p207 = scmp.eq.s32.totalorder %s22, 1
      %p208 = por %p206, %p207
      %p209 = scmp.ne.s32.totalorder %s200, %s201
      %p210 = scmp.eq.s32.totalorder %s22, 0
      %p211 = por %p209, %p210
      %p212 = scmp.ne.s32.totalorder %s200, %s201
      %p213 = scmp.eq.s32.totalorder %s23, 1
      %p214 = por %p212, %p213
      %p216 = scmp.ne.s32.totalorder %s201, %s215
      %p217 = scmp.eq.s32.totalorder %s23, 0
      %p218 = por %p216, %p217
      %s220 = sadd.s32 %s219, 1
      %p223 = scmp.eq.s32.totalorder %s17, 1
      %p224 = scmp.ne.s32.totalorder %s219, %s221
      %p225 = scmp.eq.s32.totalorder %s17, 0
      %p226 = por %p224, %p225
      %p227 = scmp.ne.s32.totalorder %s219, %s221
      %p228 = scmp.eq.s32.totalorder %s22, 1
      %p229 = por %p227, %p228
      %p230 = scmp.ne.s32.totalorder %s221, %s222
      %p231 = scmp.eq.s32.totalorder %s22, 0
      %p232 = por %p230, %p231
      %p233 = scmp.ne.s32.totalorder %s221, %s222
      %p234 = scmp.eq.s32.totalorder %s23, 1
      %p235 = por %p233, %p234
      %p237 = scmp.ne.s32.totalorder %s222, %s236
      %p238 = scmp.eq.s32.totalorder %s23, 0
      %p239 = por %p237, %p238
      %s241 = sadd.s32 %s240, 1
      %p244 = scmp.eq.s32.totalorder %s17, 1
      %p245 = scmp.ne.s32.totalorder %s240, %s242
      %p246 = scmp.eq.s32.totalorder %s17, 0
      %p247 = por %p245, %p246
      %p248 = scmp.ne.s32.totalorder %s240, %s242
      %p249 = scmp.eq.s32.totalorder %s22, 1
      %p250 = por %p248, %p249
      %p251 = scmp.ne.s32.totalorder %s242, %s243
      %p252 = scmp.eq.s32.totalorder %s22, 0
      %p253 = por %p251, %p252
      %p254 = scmp.ne.s32.totalorder %s242, %s243
      %p255 = scmp.eq.s32.totalorder %s23, 1
      %p256 = por %p254, %p255
      %p258 = scmp.ne.s32.totalorder %s243, %s257
      %p259 = scmp.eq.s32.totalorder %s23, 0
      %p260 = por %p258, %p259
      %s261 = ssub.s32 %s17, %s24
      %p262 = scmp.eq.s32.totalorder %s261, 0
      %s264 = sadd.s32 %s263, 1
      %s265 = scalar_select %p262, %s263, %s264
      %p268 = pneg %p262
      %p269 = scmp.eq.s32.totalorder %s17, 1
      %p270 = por %p268, %p269
      %p271 = scmp.ne.s32.totalorder %s263, %s266
      %p272 = scmp.eq.s32.totalorder %s17, 0
      %p273 = por %p271, %p272
      %p274 = scmp.ne.s32.totalorder %s263, %s266
      %p275 = scmp.eq.s32.totalorder %s22, 1
      %p276 = por %p274, %p275
      %p277 = scmp.ne.s32.totalorder %s266, %s267
      %p278 = scmp.eq.s32.totalorder %s22, 0
      %p279 = por %p277, %p278
      %p280 = scmp.ne.s32.totalorder %s266, %s267
      %p281 = scmp.eq.s32.totalorder %s23, 1
      %p282 = por %p280, %p281
      %p284 = scmp.ne.s32.totalorder %s267, %s283
      %p285 = scmp.eq.s32.totalorder %s23, 0
      %p286 = por %p284, %p285
      %p287 = scmp.le.s32.totalorder 1, %s17
      %p288 = scmp.lt.s32.totalorder %s17, 3
      %p289 = pnand %p287, %p288
      %p290 = pneg %p289
      // Predicated region
      $region9: #{cnn_net_forward.1} parent=5 // pred_check
        _
      $region10: #{cnn_net_forward.1} parent=5 // pred_check_branch
        %292 = sbr.rel (%p289) target = $region12
      $region11: #{cnn_net_forward.1} parent=5 // pred_region
        %s293 = ssub.s32 %s17, 1
        // Predicated region
        $region13: #{cnn_net_forward.1} parent=11 // pred_check
          %p294 = pneg %p64
        $region14: #{cnn_net_forward.1} parent=11 // pred_check_branch
          %296 = sbr.rel (%p294) target = $region16
        $region15: #{cnn_net_forward.1} parent=11 // pred_region
          _
        $region16: #{cnn_net_forward.1} parent=11 // pred_fallthru
          _
        // Predicated region
        $region17: #{cnn_net_forward.1} parent=11 // pred_check
          %p297 = pneg %p85
        $region18: #{cnn_net_forward.1} parent=11 // pred_check_branch
          %299 = sbr.rel (%p297) target = $region20
        $region19: #{cnn_net_forward.1} parent=11 // pred_region
          _
        $region20: #{cnn_net_forward.1} parent=11 // pred_fallthru
          _
        // Predicated region
        $region21: #{cnn_net_forward.1} parent=11 // pred_check
          %p300 = pneg %p106
        $region22: #{cnn_net_forward.1} parent=11 // pred_check_branch
          %302 = sbr.rel (%p300) target = $region24
        $region23: #{cnn_net_forward.1} parent=11 // pred_region
          _
        $region24: #{cnn_net_forward.1} parent=11 // pred_fallthru
          _
        // Predicated region
        $region25: #{cnn_net_forward.1} parent=11 // pred_check
          %p303 = pneg %p127
        $region26: #{cnn_net_forward.1} parent=11 // pred_check_branch
          %305 = sbr.rel (%p303) target = $region28
        $region27: #{cnn_net_forward.1} parent=11 // pred_region
          _
        $region28: #{cnn_net_forward.1} parent=11 // pred_fallthru
          _
        // Predicated region
        $region29: #{cnn_net_forward.1} parent=11 // pred_check
          %p306 = pneg %p148
        $region30: #{cnn_net_forward.1} parent=11 // pred_check_branch
          %308 = sbr.rel (%p306) target = $region32
        $region31: #{cnn_net_forward.1} parent=11 // pred_region
          _
        $region32: #{cnn_net_forward.1} parent=11 // pred_fallthru
          _
        // Predicated region
        $region33: #{cnn_net_forward.1} parent=11 // pred_check
          %p309 = pneg %p169
        $region34: #{cnn_net_forward.1} parent=11 // pred_check_branch
          %311 = sbr.rel (%p309) target = $region36
        $region35: #{cnn_net_forward.1} parent=11 // pred_region
          _
        $region36: #{cnn_net_forward.1} parent=11 // pred_fallthru
          _
        // Predicated region
        $region37: #{cnn_net_forward.1} parent=11 // pred_check
          %p312 = pneg %p190
        $region38: #{cnn_net_forward.1} parent=11 // pred_check_branch
          %314 = sbr.rel (%p312) target = $region40
        $region39: #{cnn_net_forward.1} parent=11 // pred_region
          _
        $region40: #{cnn_net_forward.1} parent=11 // pred_fallthru
          _
        // Predicated region
        $region41: #{cnn_net_forward.1} parent=11 // pred_check
          %p315 = pneg %p211
        $region42: #{cnn_net_forward.1} parent=11 // pred_check_branch
          %317 = sbr.rel (%p315) target = $region44
        $region43: #{cnn_net_forward.1} parent=11 // pred_region
          _
        $region44: #{cnn_net_forward.1} parent=11 // pred_fallthru
          _
        // Predicated region
        $region45: #{cnn_net_forward.1} parent=11 // pred_check
          %p318 = pneg %p232
        $region46: #{cnn_net_forward.1} parent=11 // pred_check_branch
          %320 = sbr.rel (%p318) target = $region48
        $region47: #{cnn_net_forward.1} parent=11 // pred_region
          _
        $region48: #{cnn_net_forward.1} parent=11 // pred_fallthru
          _
        // Predicated region
        $region49: #{cnn_net_forward.1} parent=11 // pred_check
          %p321 = pneg %p253
        $region50: #{cnn_net_forward.1} parent=11 // pred_check_branch
          %323 = sbr.rel (%p321) target = $region52
        $region51: #{cnn_net_forward.1} parent=11 // pred_region
          _
        $region52: #{cnn_net_forward.1} parent=11 // pred_fallthru
          _
      $region12: #{cnn_net_forward.1} parent=5 // pred_fallthru
        _
      %p324 = scmp.lt.s32.totalorder %s17, 2
      // Predicated region
      $region53: #{cnn_net_forward.1} parent=5 // pred_check
        %p325 = pneg %p324
      $region54: #{cnn_net_forward.1} parent=5 // pred_check_branch
        %327 = sbr.rel (%p325) target = $region56
      $region55: #{cnn_net_forward.1} parent=5 // pred_region
        // Predicated region
        $region57: #{cnn_net_forward.1} parent=55 // pred_check
          %p328 = pneg %p37
        $region58: #{cnn_net_forward.1} parent=55 // pred_check_branch
          %330 = sbr.rel (%p328) target = $region60
        $region59: #{cnn_net_forward.1} parent=55 // pred_region
          %s331 = sand.u32 %s27, 1
          %s332 = sand.u32 %s27, 1
          %s333 = smul.addr %s332, 144
          %s334 = scalar_lea.vmem [#allocation2], %s333
          %s335 = smul.u32 3, %s17
          %s336 = smul.addr %s335, 8
          %s337 = scalar_lea.vmem %s0, %s336
          // Predicated region
          $region61: #{cnn_net_forward.1} parent=59 // pred_check
            _
          $region62: #{cnn_net_forward.1} parent=59 // pred_check_branch
            %339 = sbr.rel (0) target = $region64
          $region63: #{cnn_net_forward.1} parent=59 // pred_region
            // Predicated region
            $region65: #{cnn_net_forward.1} parent=63 // pred_check
              _
            $region66: #{cnn_net_forward.1} parent=63 // pred_check_branch
              %341 = sbr.rel (0) target = $region68
            $region67: #{cnn_net_forward.1} parent=63 // pred_region
              loop: start=0, step=1, limit=1
              $region69: #{cnn_net_forward.1} parent=67 // loop_pre_header
                _
              $region70: #{cnn_net_forward.1} parent=67 // loop_header
                %s343 = sphi 0, %s347
                %p344 = scmp.ge.s32.totalorder %s343, 1
                %s348 = sphi %s337, %s337
                %s349 = sphi %s334, %s334
              $region71: #{cnn_net_forward.1} parent=67 // loop_header_branch
                %346 = sbr.rel (%p344) target = $region75
              $region72: #{cnn_net_forward.1} parent=67 // loop_body
                %v350 = vld [vmem:[%s348] sm:$0xff]
                %351 = vst [vmem:[%s349] sm:$0xff] %v350
                %v352 = vld [vmem:[%s348 + $0x8] sm:$0xff]
                %353 = vst [vmem:[%s349 + $0x8] sm:$0xff] %v352
                %v354 = vld [vmem:[%s348 + $0x10] sm:$0xff]
                %355 = vst [vmem:[%s349 + $0x10] sm:$0xff] %v354
                %v356 = vld [vmem:[%s348 + $0x30] sm:$0xff]
                %357 = vst [vmem:[%s349 + $0x18] sm:$0xff] %v356
                %v358 = vld [vmem:[%s348 + $0x38] sm:$0xff]
                %359 = vst [vmem:[%s349 + $0x20] sm:$0xff] %v358
                %v360 = vld [vmem:[%s348 + $0x40] sm:$0xff]
                %361 = vst [vmem:[%s349 + $0x28] sm:$0xff] %v360
                %v362 = vld [vmem:[%s348 + $0x60] sm:$0xff]
                %363 = vst [vmem:[%s349 + $0x30] sm:$0xff] %v362
                %v364 = vld [vmem:[%s348 + $0x68] sm:$0xff]
                %365 = vst [vmem:[%s349 + $0x38] sm:$0xff] %v364
                %v366 = vld [vmem:[%s348 + $0x70] sm:$0xff]
                %367 = vst [vmem:[%s349 + $0x40] sm:$0xff] %v366
                %v368 = vld [vmem:[%s348 + $0x90] sm:$0xff]
                %369 = vst [vmem:[%s349 + $0x48] sm:$0xff] %v368
                %v370 = vld [vmem:[%s348 + $0x98] sm:$0xff]
                %371 = vst [vmem:[%s349 + $0x50] sm:$0xff] %v370
                %v372 = vld [vmem:[%s348 + $0xa0] sm:$0xff]
                %373 = vst [vmem:[%s349 + $0x58] sm:$0xff] %v372
                %v374 = vld [vmem:[%s348 + $0xc0] sm:$0xff]
                %375 = vst [vmem:[%s349 + $0x60] sm:$0xff] %v374
                %v376 = vld [vmem:[%s348 + $0xc8] sm:$0xff]
                %377 = vst [vmem:[%s349 + $0x68] sm:$0xff] %v376
                %v378 = vld [vmem:[%s348 + $0xd0] sm:$0xff]
                %379 = vst [vmem:[%s349 + $0x70] sm:$0xff] %v378
                %v380 = vld [vmem:[%s348 + $0xf0] sm:$0xff]
                %381 = vst [vmem:[%s349 + $0x78] sm:$0xff] %v380
                %v382 = vld [vmem:[%s348 + $0xf8] sm:$0xff]
                %383 = vst [vmem:[%s349 + $0x80] sm:$0xff] %v382
                %v384 = vld [vmem:[%s348 + $0x100] sm:$0xff]
                %385 = vst [vmem:[%s349 + $0x88] sm:$0xff] %v384
              $region73: #{cnn_net_forward.1} parent=67 // loop_footer
                %s347 = sadd.s32 1, %s343
              $region74: #{cnn_net_forward.1} parent=67 // loop_footer_branch
                %342 = sbr.rel target = $region70
              $region75: #{cnn_net_forward.1} parent=67 // loop_exit
                _
            $region68: #{cnn_net_forward.1} parent=63 // pred_fallthru
              _
            // Predicated region
            $region76: #{cnn_net_forward.1} parent=63 // pred_check
              _
            $region77: #{cnn_net_forward.1} parent=63 // pred_check_branch
              %387 = sbr.rel target = $region79
            $region78: #{cnn_net_forward.1} parent=63 // pred_region
              _
            $region79: #{cnn_net_forward.1} parent=63 // pred_fallthru
              _
          $region64: #{cnn_net_forward.1} parent=59 // pred_fallthru
            _
          %388 = vnop
        $region60: #{cnn_net_forward.1} parent=55 // pred_fallthru
          _
      $region56: #{cnn_net_forward.1} parent=5 // pred_fallthru
        _
      %p389 = scmp.le.s32.totalorder 1, %s17
      %p390 = scmp.lt.s32.totalorder %s17, 3
      %p391 = pnand %p389, %p390
      %p392 = pneg %p391
      // Predicated region
      $region80: #{cnn_net_forward.1} parent=5 // pred_check
        _
      $region81: #{cnn_net_forward.1} parent=5 // pred_check_branch
        %394 = sbr.rel (%p391) target = $region83
      $region82: #{cnn_net_forward.1} parent=5 // pred_region
        %s395 = ssub.s32 %s17, 1
        %s396 = sand.u32 %s30, 1
        %s397 = sand.u32 %s30, 1
        %s398 = smul.addr %s397, 144
        %s399 = scalar_lea.vmem [#allocation2], %s398
        // Predicated region
        $region84: #{cnn_net_forward.1} parent=82 // pred_check
          %p400 = pneg %p43
        $region85: #{cnn_net_forward.1} parent=82 // pred_check_branch
          %402 = sbr.rel (%p400) target = $region87
        $region86: #{cnn_net_forward.1} parent=82 // pred_region
          _
        $region87: #{cnn_net_forward.1} parent=82 // pred_fallthru
          _
        %s403 = sand.u32 %s30, 1
        %s404 = sand.u32 %s30, 1
        %s405 = smul.addr %s404, 144
        %s406 = scalar_lea.vmem [#allocation2], %s405
        %p407 = pneg %p43
        %p408 = pneg %p40
        %p409 = pneg %p64
        %p410 = pneg %p61
        %p411 = pneg %p85
        %p412 = pneg %p82
        %p413 = pneg %p106
        %p414 = pneg %p103
        %p415 = pneg %p127
        %p416 = pneg %p124
        %p417 = pneg %p148
        %p418 = pneg %p145
        %p419 = pneg %p169
        %p420 = pneg %p166
        %p421 = pneg %p190
        %p422 = pneg %p187
        %p423 = pneg %p211
        %p424 = pneg %p208
        %p425 = pneg %p232
        %p426 = pneg %p229
        %p427 = pneg %p253
        %p428 = pneg %p250
        %p429 = pneg %p279
        %p430 = pneg %p276
        %p431 = scmp.lt.s32.totalorder %s22, 1
        %s432 = scalar_select %p431, %s22, 1
        %s433 = smul.addr %s432, 2
        %s434 = scalar_lea.vmem %s11, %s433
        %s435 = smul.u32 3, %s22
        %p436 = scmp.lt.s32.totalorder %s22, 1
        %s437 = scalar_select %p436, %s22, 1
        %s438 = smul.addr %s437, 2
        %s439 = scalar_lea.vmem %s11, %s438
        %v440 = vld [vmem:[%s1] sm:$0xff]
        %v441 = vld [vmem:[%s399] sm:$0xff]
        %v442 = vld [vmem:[%s399 + $0x8] sm:$0xff]
        %v443 = vld [vmem:[%s399 + $0x10] sm:$0xff]
        %v444 = vld [vmem:[%s399 + $0x18] sm:$0xff]
        %v445 = vld [vmem:[%s399 + $0x20] sm:$0xff]
        %v446 = vld [vmem:[%s399 + $0x28] sm:$0xff]
        %v447 = vld [vmem:[%s399 + $0x30] sm:$0xff]
        %v448 = vld [vmem:[%s399 + $0x38] sm:$0xff]
        %v449 = vld [vmem:[%s399 + $0x40] sm:$0xff]
        %v450 = vld [vmem:[%s399 + $0x48] sm:$0xff]
        %v451 = vld [vmem:[%s399 + $0x50] sm:$0xff]
        %v452 = vld [vmem:[%s399 + $0x58] sm:$0xff]
        %v453 = vld [vmem:[%s399 + $0x60] sm:$0xff]
        %v454 = vld [vmem:[%s399 + $0x68] sm:$0xff]
        %v455 = vld [vmem:[%s399 + $0x70] sm:$0xff]
        %v456 = vld [vmem:[%s399 + $0x78] sm:$0xff]
        %v457 = vld [vmem:[%s399 + $0x80] sm:$0xff]
        %v458 = vld [vmem:[%s399 + $0x88] sm:$0xff]
        %v459 = vld [vmem:[%s2] sm:$0xff]
        %461 = vset.pattern.permute.xlu0 0
        %462 = vperm.xlu0 %461, %v459
        %v463 = vpop.permute.xlu0 %462
        %vm465 = vcmask 392192
        %v467 = vsel %vm465, %v440, 0
        %469 = vmatprep.subr.mxu0 %v442
        %470 = vmatpush1.msra.mxu0 %v441
        %471 = vmatprep.subr.mxu0 %v445
        %472 = vmatpush1.msra.mxu0 %v444
        %473 = vmatprep.subr.mxu0 %v448
        %474 = vmatpush1.msra.mxu0 %v447
        %475 = vmatprep.subr.mxu0 %v451
        %476 = vmatpush1.msra.mxu0 %v450
        %477 = vmatprep.subr.mxu0 %v454
        %478 = vmatpush1.msra.mxu0 %v453
        %479 = vmatprep.subr.mxu0 %v457
        %480 = vmatpush1.msra.mxu0 %v456
        %481 = vmatprep.subr.mxu0 0.0
        %482 = vmatpush1.msra.mxu0 0.0
        %483 = vmatprep.subr.mxu0 0.0
        %484 = vmatpush1.msra.mxu0 0.0
        %485 = vmatprep.subr.mxu0 0.0
        %486 = vmatpush1.msra.mxu0 0.0
        %487 = vmatprep.subr.mxu0 0.0
        %488 = vmatpush1.msra.mxu0 0.0
        %489 = vmatprep.subr.mxu0 0.0
        %490 = vmatpush1.msra.mxu0 0.0
        %491 = vmatprep.subr.mxu0 0.0
        %492 = vmatpush1.msra.mxu0 0.0
        %493 = vmatprep.subr.mxu0 0.0
        %494 = vmatpush1.msra.mxu0 0.0
        %495 = vmatprep.subr.mxu0 0.0
        %496 = vmatpush1.msra.mxu0 0.0
        %497 = vmatprep.subr.mxu0 0.0
        %498 = vmatpush1.msra.mxu0 0.0
        %499 = vmatprep.subr.mxu0 0.0
        %500 = vmatpush1.msra.mxu0 0.0
        %501 = vmatprep.subr.mxu0 0.0
        %502 = vmatpush1.msra.mxu0 0.0
        %503 = vmatprep.subr.mxu0 0.0
        %504 = vmatpush1.msra.mxu0 0.0
        %505 = vmatprep.subr.mxu0 0.0
        %506 = vmatpush1.msra.mxu0 0.0
        %507 = vmatprep.subr.mxu0 0.0
        %508 = vmatpush1.msra.mxu0 0.0
        %509 = vmatprep.subr.mxu0 0.0
        %510 = vmatpush1.msra.mxu0 0.0
        %511 = vmatprep.subr.mxu0 0.0
        %512 = vmatpush1.msra.mxu0 0.0
        %513 = vmatprep.subr.mxu0 0.0
        %514 = vmatpush1.msra.mxu0 0.0
        %515 = vmatprep.subr.mxu0 0.0
        %516 = vmatpush1.msra.mxu0 0.0
        %517 = vmatprep.subr.mxu0 0.0
        %518 = vmatpush1.msra.mxu0 0.0
        %519 = vmatprep.subr.mxu0 0.0
        %520 = vmatpush1.msra.mxu0 0.0
        %521 = vmatprep.subr.mxu0 0.0
        %522 = vmatpush1.msra.mxu0 0.0
        %523 = vmatprep.subr.mxu0 0.0
        %524 = vmatpush1.msra.mxu0 0.0
        %525 = vmatprep.subr.mxu0 0.0
        %526 = vmatpush1.msra.mxu0 0.0
        %527 = vmatprep.subr.mxu0 0.0
        %528 = vmatpush1.msra.mxu0 0.0
        %529 = vmatprep.subr.mxu0 0.0
        %530 = vmatpush1.msra.mxu0 0.0
        %531 = vmatprep.subr.mxu0 0.0
        %532 = vmatpush1.msra.mxu0 0.0
        %533 = vmatprep.mubr.f32.mxu0 0.0
        %534 = vmatmul.mubr.f32.gmra.mrb[0].mxu0 %v467
        %v535 = vpop.f32.mrb[0].mxu0
        %v536 = vadd.f32 %v463, %v535
        %v537 = vpop.f32.mrb[0].mxu0
        %v538 = vadd.f32 %v463, %v537
        %539 = vdwg.mxu0
        %540 = vmatprep.subr.mxu0 0.0
        %541 = vmatpush1.msra.mxu0 %v443
        %542 = vmatprep.subr.mxu0 0.0
        %543 = vmatpush1.msra.mxu0 %v446
        %544 = vmatprep.subr.mxu0 0.0
        %545 = vmatpush1.msra.mxu0 %v449
        %546 = vmatprep.subr.mxu0 0.0
        %547 = vmatpush1.msra.mxu0 %v452
        %548 = vmatprep.subr.mxu0 0.0
        %549 = vmatpush1.msra.mxu0 %v455
        %550 = vmatprep.subr.mxu0 0.0
        %551 = vmatpush1.msra.mxu0 %v458
        %552 = vmatprep.subr.mxu0 0.0
        %553 = vmatpush1.msra.mxu0 0.0
        %554 = vmatprep.subr.mxu0 0.0
        %555 = vmatpush1.msra.mxu0 0.0
        %556 = vmatprep.subr.mxu0 0.0
        %557 = vmatpush1.msra.mxu0 0.0
        %558 = vmatprep.subr.mxu0 0.0
        %559 = vmatpush1.msra.mxu0 0.0
        %560 = vmatprep.subr.mxu0 0.0
        %561 = vmatpush1.msra.mxu0 0.0
        %562 = vmatprep.subr.mxu0 0.0
        %563 = vmatpush1.msra.mxu0 0.0
        %564 = vmatprep.subr.mxu0 0.0
        %565 = vmatpush1.msra.mxu0 0.0
        %566 = vmatprep.subr.mxu0 0.0
        %567 = vmatpush1.msra.mxu0 0.0
        %568 = vmatprep.subr.mxu0 0.0
        %569 = vmatpush1.msra.mxu0 0.0
        %570 = vmatprep.subr.mxu0 0.0
        %571 = vmatpush1.msra.mxu0 0.0
        %572 = vmatprep.subr.mxu0 0.0
        %573 = vmatpush1.msra.mxu0 0.0
        %574 = vmatprep.subr.mxu0 0.0
        %575 = vmatpush1.msra.mxu0 0.0
        %576 = vmatprep.subr.mxu0 0.0
        %577 = vmatpush1.msra.mxu0 0.0
        %578 = vmatprep.subr.mxu0 0.0
        %579 = vmatpush1.msra.mxu0 0.0
        %580 = vmatprep.subr.mxu0 0.0
        %581 = vmatpush1.msra.mxu0 0.0
        %582 = vmatprep.subr.mxu0 0.0
        %583 = vmatpush1.msra.mxu0 0.0
        %584 = vmatprep.subr.mxu0 0.0
        %585 = vmatpush1.msra.mxu0 0.0
        %586 = vmatprep.subr.mxu0 0.0
        %587 = vmatpush1.msra.mxu0 0.0
        %588 = vmatprep.subr.mxu0 0.0
        %589 = vmatpush1.msra.mxu0 0.0
        %590 = vmatprep.subr.mxu0 0.0
        %591 = vmatpush1.msra.mxu0 0.0
        %592 = vmatprep.subr.mxu0 0.0
        %593 = vmatpush1.msra.mxu0 0.0
        %594 = vmatprep.subr.mxu0 0.0
        %595 = vmatpush1.msra.mxu0 0.0
        %596 = vmatprep.subr.mxu0 0.0
        %597 = vmatpush1.msra.mxu0 0.0
        %598 = vmatprep.subr.mxu0 0.0
        %599 = vmatpush1.msra.mxu0 0.0
        %600 = vmatprep.subr.mxu0 0.0
        %601 = vmatpush1.msra.mxu0 0.0
        %602 = vmatprep.subr.mxu0 0.0
        %603 = vmatpush1.msra.mxu0 0.0
        %604 = vmatprep.mubr.f32.mxu0 0.0
        %605 = vmatmul.mubr.f32.gmra.mrb[0].mxu0 %v467
        %v606 = vpop.f32.mrb[0].mxu0
        %v607 = vadd.f32 %v463, %v606
        %v608 = vpop.f32.mrb[0].mxu0
        %609 = vdwg.mxu0
        %v610 = vmax.f32 %v536, 0.0
        %v611 = vmax.f32 %v538, 0.0
        %v612 = vmax.f32 %v607, 0.0
        %v613 = vld [vmem:[%s3] sm:$0xf]
        %v614 = vld [vmem:[%s3 + $0x4] sm:$0xf]
        %v615 = vld [vmem:[%s3 + $0x8] sm:$0xf]
        %v616 = vld [vmem:[%s3 + $0xc] sm:$0xf]
        %v617 = vld [vmem:[%s3 + $0x10] sm:$0xf]
        %v618 = vld [vmem:[%s3 + $0x14] sm:$0xf]
        %v619 = vld [vmem:[%s3 + $0x18] sm:$0xf]
        %v620 = vld [vmem:[%s3 + $0x1c] sm:$0xf]
        %v621 = vld [vmem:[%s3 + $0x20] sm:$0xf]
        %v622 = vld [vmem:[%s3 + $0x24] sm:$0xf]
        %v623 = vld [vmem:[%s3 + $0x28] sm:$0xf]
        %v624 = vld [vmem:[%s3 + $0x2c] sm:$0xf]
        %v625 = vld [vmem:[%s3 + $0x30] sm:$0xf]
        %v626 = vld [vmem:[%s3 + $0x34] sm:$0xf]
        %v627 = vld [vmem:[%s3 + $0x38] sm:$0xf]
        %v628 = vld [vmem:[%s3 + $0x3c] sm:$0xf]
        %v629 = vld [vmem:[%s3 + $0x40] sm:$0xf]
        %v630 = vld [vmem:[%s3 + $0x44] sm:$0xf]
        %v631 = vld [vmem:[%s3 + $0x48] sm:$0xf]
        %v632 = vld [vmem:[%s3 + $0x4c] sm:$0xf]
        %v633 = vld [vmem:[%s3 + $0x50] sm:$0xf]
        %v634 = vld [vmem:[%s3 + $0x54] sm:$0xf]
        %v635 = vld [vmem:[%s3 + $0x58] sm:$0xf]
        %v636 = vld [vmem:[%s3 + $0x5c] sm:$0xf]
        %v637 = vld [vmem:[%s3 + $0x60] sm:$0xf]
        %v638 = vld [vmem:[%s3 + $0x64] sm:$0xf]
        %v639 = vld [vmem:[%s3 + $0x68] sm:$0xf]
        %v640 = vld [vmem:[%s3 + $0x6c] sm:$0xf]
        %v641 = vld [vmem:[%s3 + $0x70] sm:$0xf]
        %v642 = vld [vmem:[%s3 + $0x74] sm:$0xf]
        %v643 = vld [vmem:[%s3 + $0x78] sm:$0xf]
        %v644 = vld [vmem:[%s3 + $0x7c] sm:$0xf]
        %v645 = vld [vmem:[%s3 + $0x80] sm:$0xf]
        %v646 = vld [vmem:[%s3 + $0x84] sm:$0xf]
        %v647 = vld [vmem:[%s3 + $0x88] sm:$0xf]
        %v648 = vld [vmem:[%s3 + $0x8c] sm:$0xf]
        %v649 = vld [vmem:[%s3 + $0x90] sm:$0xf]
        %v650 = vld [vmem:[%s3 + $0x94] sm:$0xf]
        %v651 = vld [vmem:[%s3 + $0x98] sm:$0xf]
        %v652 = vld [vmem:[%s3 + $0x9c] sm:$0xf]
        %v653 = vld [vmem:[%s3 + $0xa0] sm:$0xf]
        %v654 = vld [vmem:[%s3 + $0xa4] sm:$0xf]
        %v655 = vld [vmem:[%s3 + $0xa8] sm:$0xf]
        %v656 = vld [vmem:[%s3 + $0xac] sm:$0xf]
        %v657 = vld [vmem:[%s3 + $0xb0] sm:$0xf]
        %v658 = vld [vmem:[%s3 + $0xb4] sm:$0xf]
        %v659 = vld [vmem:[%s3 + $0xb8] sm:$0xf]
        %v660 = vld [vmem:[%s3 + $0xbc] sm:$0xf]
        %v661 = vld [vmem:[%s3 + $0xc0] sm:$0xf]
        %v662 = vld [vmem:[%s3 + $0xc4] sm:$0xf]
        %v663 = vld [vmem:[%s3 + $0xc8] sm:$0xf]
        %v664 = vld [vmem:[%s3 + $0xcc] sm:$0xf]
        %v665 = vld [vmem:[%s3 + $0xd0] sm:$0xf]
        %v666 = vld [vmem:[%s3 + $0xd4] sm:$0xf]
        %v667 = vld [vmem:[%s3 + $0xd8] sm:$0xf]
        %v668 = vld [vmem:[%s3 + $0xdc] sm:$0xf]
        %v669 = vld [vmem:[%s3 + $0xe0] sm:$0xf]
        %v670 = vld [vmem:[%s3 + $0xe4] sm:$0xf]
        %v671 = vld [vmem:[%s3 + $0xe8] sm:$0xf]
        %v672 = vld [vmem:[%s3 + $0xec] sm:$0xf]
        %v673 = vld [vmem:[%s3 + $0xf0] sm:$0xf]
        %v674 = vld [vmem:[%s3 + $0xf4] sm:$0xf]
        %v675 = vld [vmem:[%s3 + $0xf8] sm:$0xf]
        %v676 = vld [vmem:[%s3 + $0xfc] sm:$0xf]
        %v677 = vld [vmem:[%s3 + $0x100] sm:$0xf]
        %v678 = vld [vmem:[%s3 + $0x104] sm:$0xf]
        %v679 = vld [vmem:[%s3 + $0x108] sm:$0xf]
        %v680 = vld [vmem:[%s3 + $0x10c] sm:$0xf]
        %v681 = vld [vmem:[%s3 + $0x110] sm:$0xf]
        %v682 = vld [vmem:[%s3 + $0x114] sm:$0xf]
        %v683 = vld [vmem:[%s3 + $0x118] sm:$0xf]
        %v684 = vld [vmem:[%s3 + $0x11c] sm:$0xf]
        %v685 = vld [vmem:[%s3 + $0x120] sm:$0xf]
        %v686 = vld [vmem:[%s3 + $0x124] sm:$0xf]
        %v687 = vld [vmem:[%s3 + $0x128] sm:$0xf]
        %v688 = vld [vmem:[%s3 + $0x12c] sm:$0xf]
        %v689 = vld [vmem:[%s3 + $0x130] sm:$0xf]
        %v690 = vld [vmem:[%s3 + $0x134] sm:$0xf]
        %v691 = vld [vmem:[%s3 + $0x138] sm:$0xf]
        %v692 = vld [vmem:[%s3 + $0x13c] sm:$0xf]
        %v693 = vld [vmem:[%s3 + $0x140] sm:$0xf]
        %v694 = vld [vmem:[%s3 + $0x144] sm:$0xf]
        %v695 = vld [vmem:[%s3 + $0x148] sm:$0xf]
        %v696 = vld [vmem:[%s3 + $0x14c] sm:$0xf]
        %v697 = vld [vmem:[%s3 + $0x150] sm:$0xf]
        %v698 = vld [vmem:[%s3 + $0x154] sm:$0xf]
        %v699 = vld [vmem:[%s3 + $0x158] sm:$0xf]
        %v700 = vld [vmem:[%s3 + $0x15c] sm:$0xf]
        %v701 = vld [vmem:[%s3 + $0x160] sm:$0xf]
        %v702 = vld [vmem:[%s3 + $0x164] sm:$0xf]
        %v703 = vld [vmem:[%s3 + $0x168] sm:$0xf]
        %v704 = vld [vmem:[%s3 + $0x16c] sm:$0xf]
        %v705 = vld [vmem:[%s3 + $0x170] sm:$0xf]
        %v706 = vld [vmem:[%s3 + $0x174] sm:$0xf]
        %v707 = vld [vmem:[%s3 + $0x178] sm:$0xf]
        %v708 = vld [vmem:[%s3 + $0x17c] sm:$0xf]
        %v709 = vld [vmem:[%s3 + $0x180] sm:$0xf]
        %v710 = vld [vmem:[%s3 + $0x184] sm:$0xf]
        %v711 = vld [vmem:[%s3 + $0x188] sm:$0xf]
        %v712 = vld [vmem:[%s3 + $0x18c] sm:$0xf]
        %v713 = vld [vmem:[%s3 + $0x190] sm:$0xf]
        %v714 = vld [vmem:[%s3 + $0x194] sm:$0xf]
        %v715 = vld [vmem:[%s3 + $0x198] sm:$0xf]
        %v716 = vld [vmem:[%s3 + $0x19c] sm:$0xf]
        %v717 = vld [vmem:[%s3 + $0x1a0] sm:$0xf]
        %v718 = vld [vmem:[%s3 + $0x1a4] sm:$0xf]
        %v719 = vld [vmem:[%s3 + $0x1a8] sm:$0xf]
        %v720 = vld [vmem:[%s3 + $0x1ac] sm:$0xf]
        %v721 = vld [vmem:[%s3 + $0x1b0] sm:$0xf]
        %v722 = vld [vmem:[%s3 + $0x1b4] sm:$0xf]
        %v723 = vld [vmem:[%s3 + $0x1b8] sm:$0xf]
        %v724 = vld [vmem:[%s3 + $0x1bc] sm:$0xf]
        %v725 = vld [vmem:[%s3 + $0x1c0] sm:$0xf]
        %v726 = vld [vmem:[%s3 + $0x1c4] sm:$0xf]
        %v727 = vld [vmem:[%s3 + $0x1c8] sm:$0xf]
        %v728 = vld [vmem:[%s3 + $0x1cc] sm:$0xf]
        %v729 = vld [vmem:[%s3 + $0x1d0] sm:$0xf]
        %v730 = vld [vmem:[%s3 + $0x1d4] sm:$0xf]
        %v731 = vld [vmem:[%s3 + $0x1d8] sm:$0xf]
        %v732 = vld [vmem:[%s3 + $0x1dc] sm:$0xf]
        %v733 = vld [vmem:[%s3 + $0x1e0] sm:$0xf]
        %v734 = vld [vmem:[%s3 + $0x1e4] sm:$0xf]
        %v735 = vld [vmem:[%s3 + $0x1e8] sm:$0xf]
        %v736 = vld [vmem:[%s3 + $0x1ec] sm:$0xf]
        %v737 = vld [vmem:[%s3 + $0x1f0] sm:$0xf]
        %v738 = vld [vmem:[%s3 + $0x1f4] sm:$0xf]
        %v739 = vld [vmem:[%s3 + $0x1f8] sm:$0xf]
        %v740 = vld [vmem:[%s3 + $0x1fc] sm:$0xf]
        %v741 = vld [vmem:[%s3 + $0x200] sm:$0xf]
        %v742 = vld [vmem:[%s3 + $0x204] sm:$0xf]
        %v743 = vld [vmem:[%s3 + $0x208] sm:$0xf]
        %v744 = vld [vmem:[%s3 + $0x20c] sm:$0xf]
        %v745 = vld [vmem:[%s3 + $0x210] sm:$0xf]
        %v746 = vld [vmem:[%s3 + $0x214] sm:$0xf]
        %v747 = vld [vmem:[%s3 + $0x218] sm:$0xf]
        %v748 = vld [vmem:[%s3 + $0x21c] sm:$0xf]
        %v749 = vld [vmem:[%s3 + $0x220] sm:$0xf]
        %v750 = vld [vmem:[%s3 + $0x224] sm:$0xf]
        %v751 = vld [vmem:[%s3 + $0x228] sm:$0xf]
        %v752 = vld [vmem:[%s3 + $0x22c] sm:$0xf]
        %v753 = vld [vmem:[%s3 + $0x230] sm:$0xf]
        %v754 = vld [vmem:[%s3 + $0x234] sm:$0xf]
        %v755 = vld [vmem:[%s3 + $0x238] sm:$0xf]
        %v756 = vld [vmem:[%s3 + $0x23c] sm:$0xf]
        %v757 = vld [vmem:[%s3 + $0x240] sm:$0xf]
        %v758 = vld [vmem:[%s3 + $0x244] sm:$0xf]
        %v759 = vld [vmem:[%s3 + $0x248] sm:$0xf]
        %v760 = vld [vmem:[%s3 + $0x24c] sm:$0xf]
        %v761 = vld [vmem:[%s3 + $0x250] sm:$0xf]
        %v762 = vld [vmem:[%s3 + $0x254] sm:$0xf]
        %v763 = vld [vmem:[%s3 + $0x258] sm:$0xf]
        %v764 = vld [vmem:[%s3 + $0x25c] sm:$0xf]
        %v765 = vld [vmem:[%s3 + $0x260] sm:$0xf]
        %v766 = vld [vmem:[%s3 + $0x264] sm:$0xf]
        %v767 = vld [vmem:[%s3 + $0x268] sm:$0xf]
        %v768 = vld [vmem:[%s3 + $0x26c] sm:$0xf]
        %v769 = vld [vmem:[%s3 + $0x270] sm:$0xf]
        %v770 = vld [vmem:[%s3 + $0x274] sm:$0xf]
        %v771 = vld [vmem:[%s3 + $0x278] sm:$0xf]
        %v772 = vld [vmem:[%s3 + $0x27c] sm:$0xf]
        %v773 = vld [vmem:[%s3 + $0x280] sm:$0xf]
        %v774 = vld [vmem:[%s3 + $0x284] sm:$0xf]
        %v775 = vld [vmem:[%s3 + $0x288] sm:$0xf]
        %v776 = vld [vmem:[%s3 + $0x28c] sm:$0xf]
        %v777 = vld [vmem:[%s3 + $0x290] sm:$0xf]
        %v778 = vld [vmem:[%s3 + $0x294] sm:$0xf]
        %v779 = vld [vmem:[%s3 + $0x298] sm:$0xf]
        %v780 = vld [vmem:[%s3 + $0x29c] sm:$0xf]
        %v781 = vld [vmem:[%s3 + $0x2a0] sm:$0xf]
        %v782 = vld [vmem:[%s3 + $0x2a4] sm:$0xf]
        %v783 = vld [vmem:[%s3 + $0x2a8] sm:$0xf]
        %v784 = vld [vmem:[%s3 + $0x2ac] sm:$0xf]
        %v785 = vld [vmem:[%s3 + $0x2b0] sm:$0xf]
        %v786 = vld [vmem:[%s3 + $0x2b4] sm:$0xf]
        %v787 = vld [vmem:[%s3 + $0x2b8] sm:$0xf]
        %v788 = vld [vmem:[%s3 + $0x2bc] sm:$0xf]
        %v789 = vld [vmem:[%s3 + $0x2c0] sm:$0xf]
        %v790 = vld [vmem:[%s3 + $0x2c4] sm:$0xf]
        %v791 = vld [vmem:[%s3 + $0x2c8] sm:$0xf]
        %v792 = vld [vmem:[%s3 + $0x2cc] sm:$0xf]
        %v793 = vld [vmem:[%s3 + $0x2d0] sm:$0xf]
        %v794 = vld [vmem:[%s3 + $0x2d4] sm:$0xf]
        %v795 = vld [vmem:[%s3 + $0x2d8] sm:$0xf]
        %v796 = vld [vmem:[%s3 + $0x2dc] sm:$0xf]
        %v797 = vld [vmem:[%s3 + $0x2e0] sm:$0xf]
        %v798 = vld [vmem:[%s3 + $0x2e4] sm:$0xf]
        %v799 = vld [vmem:[%s3 + $0x2e8] sm:$0xf]
        %v800 = vld [vmem:[%s3 + $0x2ec] sm:$0xf]
        %v801 = vld [vmem:[%s3 + $0x2f0] sm:$0xf]
        %v802 = vld [vmem:[%s3 + $0x2f4] sm:$0xf]
        %v803 = vld [vmem:[%s3 + $0x2f8] sm:$0xf]
        %v804 = vld [vmem:[%s3 + $0x2fc] sm:$0xf]
        %v805 = vld [vmem:[%s3 + $0x300] sm:$0xf]
        %v806 = vld [vmem:[%s3 + $0x304] sm:$0xf]
        %v807 = vld [vmem:[%s3 + $0x308] sm:$0xf]
        %v808 = vld [vmem:[%s3 + $0x30c] sm:$0xf]
        %v809 = vld [vmem:[%s3 + $0x310] sm:$0xf]
        %v810 = vld [vmem:[%s3 + $0x314] sm:$0xf]
        %v811 = vld [vmem:[%s3 + $0x318] sm:$0xf]
        %v812 = vld [vmem:[%s3 + $0x31c] sm:$0xf]
        %v813 = vld [vmem:[%s3 + $0x320] sm:$0xf]
        %v814 = vld [vmem:[%s3 + $0x324] sm:$0xf]
        %v815 = vld [vmem:[%s3 + $0x328] sm:$0xf]
        %v816 = vld [vmem:[%s3 + $0x32c] sm:$0xf]
        %v817 = vld [vmem:[%s3 + $0x330] sm:$0xf]
        %v818 = vld [vmem:[%s3 + $0x334] sm:$0xf]
        %v819 = vld [vmem:[%s3 + $0x338] sm:$0xf]
        %v820 = vld [vmem:[%s3 + $0x33c] sm:$0xf]
        %v821 = vld [vmem:[%s3 + $0x340] sm:$0xf]
        %v822 = vld [vmem:[%s3 + $0x344] sm:$0xf]
        %v823 = vld [vmem:[%s3 + $0x348] sm:$0xf]
        %v824 = vld [vmem:[%s3 + $0x34c] sm:$0xf]
        %v825 = vld [vmem:[%s3 + $0x350] sm:$0xf]
        %v826 = vld [vmem:[%s3 + $0x354] sm:$0xf]
        %v827 = vld [vmem:[%s3 + $0x358] sm:$0xf]
        %v828 = vld [vmem:[%s3 + $0x35c] sm:$0xf]
        %v829 = vld [vmem:[%s3 + $0x360] sm:$0xf]
        %v830 = vld [vmem:[%s3 + $0x364] sm:$0xf]
        %v831 = vld [vmem:[%s3 + $0x368] sm:$0xf]
        %v832 = vld [vmem:[%s3 + $0x36c] sm:$0xf]
        %v833 = vld [vmem:[%s3 + $0x370] sm:$0xf]
        %v834 = vld [vmem:[%s3 + $0x374] sm:$0xf]
        %v835 = vld [vmem:[%s3 + $0x378] sm:$0xf]
        %v836 = vld [vmem:[%s3 + $0x37c] sm:$0xf]
        %v837 = vld [vmem:[%s3 + $0x380] sm:$0xf]
        %v838 = vld [vmem:[%s3 + $0x384] sm:$0xf]
        %v839 = vld [vmem:[%s3 + $0x388] sm:$0xf]
        %v840 = vld [vmem:[%s3 + $0x38c] sm:$0xf]
        %v841 = vld [vmem:[%s3 + $0x390] sm:$0xf]
        %v842 = vld [vmem:[%s3 + $0x394] sm:$0xf]
        %v843 = vld [vmem:[%s3 + $0x398] sm:$0xf]
        %v844 = vld [vmem:[%s3 + $0x39c] sm:$0xf]
        %v845 = vld [vmem:[%s3 + $0x3a0] sm:$0xf]
        %v846 = vld [vmem:[%s3 + $0x3a4] sm:$0xf]
        %v847 = vld [vmem:[%s3 + $0x3a8] sm:$0xf]
        %v848 = vld [vmem:[%s3 + $0x3ac] sm:$0xf]
        %v849 = vld [vmem:[%s3 + $0x3b0] sm:$0xf]
        %v850 = vld [vmem:[%s3 + $0x3b4] sm:$0xf]
        %v851 = vld [vmem:[%s3 + $0x3b8] sm:$0xf]
        %v852 = vld [vmem:[%s3 + $0x3bc] sm:$0xf]
        %v853 = vld [vmem:[%s3 + $0x3c0] sm:$0xf]
        %v854 = vld [vmem:[%s3 + $0x3c4] sm:$0xf]
        %v855 = vld [vmem:[%s3 + $0x3c8] sm:$0xf]
        %v856 = vld [vmem:[%s3 + $0x3cc] sm:$0xf]
        %v857 = vld [vmem:[%s3 + $0x3d0] sm:$0xf]
        %v858 = vld [vmem:[%s3 + $0x3d4] sm:$0xf]
        %v859 = vld [vmem:[%s3 + $0x3d8] sm:$0xf]
        %v860 = vld [vmem:[%s3 + $0x3dc] sm:$0xf]
        %v861 = vld [vmem:[%s3 + $0x3e0] sm:$0xf]
        %v862 = vld [vmem:[%s3 + $0x3e4] sm:$0xf]
        %v863 = vld [vmem:[%s3 + $0x3e8] sm:$0xf]
        %v864 = vld [vmem:[%s3 + $0x3ec] sm:$0xf]
        %v865 = vld [vmem:[%s3 + $0x3f0] sm:$0xf]
        %v866 = vld [vmem:[%s3 + $0x3f4] sm:$0xf]
        %v867 = vld [vmem:[%s3 + $0x3f8] sm:$0xf]
        %v868 = vld [vmem:[%s3 + $0x3fc] sm:$0xf]
        %v869 = vld [vmem:[%s3 + $0x400] sm:$0xf]
        %v870 = vld [vmem:[%s3 + $0x404] sm:$0xf]
        %v871 = vld [vmem:[%s3 + $0x408] sm:$0xf]
        %v872 = vld [vmem:[%s3 + $0x40c] sm:$0xf]
        %v873 = vld [vmem:[%s3 + $0x410] sm:$0xf]
        %v874 = vld [vmem:[%s3 + $0x414] sm:$0xf]
        %v875 = vld [vmem:[%s3 + $0x418] sm:$0xf]
        %v876 = vld [vmem:[%s3 + $0x41c] sm:$0xf]
        %v877 = vld [vmem:[%s3 + $0x420] sm:$0xf]
        %v878 = vld [vmem:[%s3 + $0x424] sm:$0xf]
        %v879 = vld [vmem:[%s3 + $0x428] sm:$0xf]
        %v880 = vld [vmem:[%s3 + $0x42c] sm:$0xf]
        %v881 = vld [vmem:[%s3 + $0x430] sm:$0xf]
        %v882 = vld [vmem:[%s3 + $0x434] sm:$0xf]
        %v883 = vld [vmem:[%s3 + $0x438] sm:$0xf]
        %v884 = vld [vmem:[%s3 + $0x43c] sm:$0xf]
        %v885 = vld [vmem:[%s3 + $0x440] sm:$0xf]
        %v886 = vld [vmem:[%s3 + $0x444] sm:$0xf]
        %v887 = vld [vmem:[%s3 + $0x448] sm:$0xf]
        %v888 = vld [vmem:[%s3 + $0x44c] sm:$0xf]
        %v889 = vld [vmem:[%s3 + $0x450] sm:$0xf]
        %v890 = vld [vmem:[%s3 + $0x454] sm:$0xf]
        %v891 = vld [vmem:[%s3 + $0x458] sm:$0xf]
        %v892 = vld [vmem:[%s3 + $0x45c] sm:$0xf]
        %v893 = vld [vmem:[%s3 + $0x460] sm:$0xf]
        %v894 = vld [vmem:[%s3 + $0x464] sm:$0xf]
        %v895 = vld [vmem:[%s3 + $0x468] sm:$0xf]
        %v896 = vld [vmem:[%s3 + $0x46c] sm:$0xf]
        %v897 = vld [vmem:[%s3 + $0x470] sm:$0xf]
        %v898 = vld [vmem:[%s3 + $0x474] sm:$0xf]
        %v899 = vld [vmem:[%s3 + $0x478] sm:$0xf]
        %v900 = vld [vmem:[%s3 + $0x47c] sm:$0xf]
        %v901 = vld [vmem:[%s3 + $0x480] sm:$0xf]
        %v902 = vld [vmem:[%s3 + $0x484] sm:$0xf]
        %v903 = vld [vmem:[%s3 + $0x488] sm:$0xf]
        %v904 = vld [vmem:[%s3 + $0x48c] sm:$0xf]
        %v905 = vld [vmem:[%s3 + $0x490] sm:$0xf]
        %v906 = vld [vmem:[%s3 + $0x494] sm:$0xf]
        %v907 = vld [vmem:[%s3 + $0x498] sm:$0xf]
        %v908 = vld [vmem:[%s3 + $0x49c] sm:$0xf]
        %v909 = vld [vmem:[%s3 + $0x4a0] sm:$0xf]
        %v910 = vld [vmem:[%s3 + $0x4a4] sm:$0xf]
        %v911 = vld [vmem:[%s3 + $0x4a8] sm:$0xf]
        %v912 = vld [vmem:[%s3 + $0x4ac] sm:$0xf]
        %v913 = vld [vmem:[%s3 + $0x4b0] sm:$0xf]
        %v914 = vld [vmem:[%s3 + $0x4b4] sm:$0xf]
        %v915 = vld [vmem:[%s3 + $0x4b8] sm:$0xf]
        %v916 = vld [vmem:[%s3 + $0x4bc] sm:$0xf]
        %v917 = vld [vmem:[%s3 + $0x4c0] sm:$0xf]
        %v918 = vld [vmem:[%s3 + $0x4c4] sm:$0xf]
        %v919 = vld [vmem:[%s3 + $0x4c8] sm:$0xf]
        %v920 = vld [vmem:[%s3 + $0x4cc] sm:$0xf]
        %v921 = vld [vmem:[%s3 + $0x4d0] sm:$0xf]
        %v922 = vld [vmem:[%s3 + $0x4d4] sm:$0xf]
        %v923 = vld [vmem:[%s3 + $0x4d8] sm:$0xf]
        %v924 = vld [vmem:[%s3 + $0x4dc] sm:$0xf]
        %v925 = vld [vmem:[%s3 + $0x4e0] sm:$0xf]
        %v926 = vld [vmem:[%s3 + $0x4e4] sm:$0xf]
        %v927 = vld [vmem:[%s3 + $0x4e8] sm:$0xf]
        %v928 = vld [vmem:[%s3 + $0x4ec] sm:$0xf]
        %v929 = vld [vmem:[%s3 + $0x4f0] sm:$0xf]
        %v930 = vld [vmem:[%s3 + $0x4f4] sm:$0xf]
        %v931 = vld [vmem:[%s3 + $0x4f8] sm:$0xf]
        %v932 = vld [vmem:[%s3 + $0x4fc] sm:$0xf]
        %v933 = vld [vmem:[%s3 + $0x500] sm:$0xf]
        %v934 = vld [vmem:[%s3 + $0x504] sm:$0xf]
        %v935 = vld [vmem:[%s3 + $0x508] sm:$0xf]
        %v936 = vld [vmem:[%s3 + $0x50c] sm:$0xf]
        %v937 = vld [vmem:[%s3 + $0x510] sm:$0xf]
        %v938 = vld [vmem:[%s3 + $0x514] sm:$0xf]
        %v939 = vld [vmem:[%s3 + $0x518] sm:$0xf]
        %v940 = vld [vmem:[%s3 + $0x51c] sm:$0xf]
        %v941 = vld [vmem:[%s3 + $0x520] sm:$0xf]
        %v942 = vld [vmem:[%s3 + $0x524] sm:$0xf]
        %v943 = vld [vmem:[%s3 + $0x528] sm:$0xf]
        %v944 = vld [vmem:[%s3 + $0x52c] sm:$0xf]
        %v945 = vld [vmem:[%s3 + $0x530] sm:$0xf]
        %v946 = vld [vmem:[%s3 + $0x534] sm:$0xf]
        %v947 = vld [vmem:[%s3 + $0x538] sm:$0xf]
        %v948 = vld [vmem:[%s3 + $0x53c] sm:$0xf]
        %v949 = vld [vmem:[%s3 + $0x540] sm:$0xf]
        %v950 = vld [vmem:[%s3 + $0x544] sm:$0xf]
        %v951 = vld [vmem:[%s3 + $0x548] sm:$0xf]
        %v952 = vld [vmem:[%s3 + $0x54c] sm:$0xf]
        %v953 = vld [vmem:[%s3 + $0x550] sm:$0xf]
        %v954 = vld [vmem:[%s3 + $0x554] sm:$0xf]
        %v955 = vld [vmem:[%s3 + $0x558] sm:$0xf]
        %v956 = vld [vmem:[%s3 + $0x55c] sm:$0xf]
        %v957 = vld [vmem:[%s3 + $0x560] sm:$0xf]
        %v958 = vld [vmem:[%s3 + $0x564] sm:$0xf]
        %v959 = vld [vmem:[%s3 + $0x568] sm:$0xf]
        %v960 = vld [vmem:[%s3 + $0x56c] sm:$0xf]
        %v961 = vld [vmem:[%s3 + $0x570] sm:$0xf]
        %v962 = vld [vmem:[%s3 + $0x574] sm:$0xf]
        %v963 = vld [vmem:[%s3 + $0x578] sm:$0xf]
        %v964 = vld [vmem:[%s3 + $0x57c] sm:$0xf]
        %v965 = vld [vmem:[%s3 + $0x580] sm:$0xf]
        %v966 = vld [vmem:[%s3 + $0x584] sm:$0xf]
        %v967 = vld [vmem:[%s3 + $0x588] sm:$0xf]
        %v968 = vld [vmem:[%s3 + $0x58c] sm:$0xf]
        %v969 = vld [vmem:[%s3 + $0x590] sm:$0xf]
        %v970 = vld [vmem:[%s3 + $0x594] sm:$0xf]
        %v971 = vld [vmem:[%s3 + $0x598] sm:$0xf]
        %v972 = vld [vmem:[%s3 + $0x59c] sm:$0xf]
        %v973 = vld [vmem:[%s3 + $0x5a0] sm:$0xf]
        %v974 = vld [vmem:[%s3 + $0x5a4] sm:$0xf]
        %v975 = vld [vmem:[%s3 + $0x5a8] sm:$0xf]
        %v976 = vld [vmem:[%s3 + $0x5ac] sm:$0xf]
        %v977 = vld [vmem:[%s3 + $0x5b0] sm:$0xf]
        %v978 = vld [vmem:[%s3 + $0x5b4] sm:$0xf]
        %v979 = vld [vmem:[%s3 + $0x5b8] sm:$0xf]
        %v980 = vld [vmem:[%s3 + $0x5bc] sm:$0xf]
        %v981 = vld [vmem:[%s3 + $0x5c0] sm:$0xf]
        %v982 = vld [vmem:[%s3 + $0x5c4] sm:$0xf]
        %v983 = vld [vmem:[%s3 + $0x5c8] sm:$0xf]
        %v984 = vld [vmem:[%s3 + $0x5cc] sm:$0xf]
        %v985 = vld [vmem:[%s3 + $0x5d0] sm:$0xf]
        %v986 = vld [vmem:[%s3 + $0x5d4] sm:$0xf]
        %v987 = vld [vmem:[%s3 + $0x5d8] sm:$0xf]
        %v988 = vld [vmem:[%s3 + $0x5dc] sm:$0xf]
        %v989 = vld [vmem:[%s3 + $0x5e0] sm:$0xf]
        %v990 = vld [vmem:[%s3 + $0x5e4] sm:$0xf]
        %v991 = vld [vmem:[%s3 + $0x5e8] sm:$0xf]
        %v992 = vld [vmem:[%s3 + $0x5ec] sm:$0xf]
        %v993 = vld [vmem:[%s3 + $0x5f0] sm:$0xf]
        %v994 = vld [vmem:[%s3 + $0x5f4] sm:$0xf]
        %v995 = vld [vmem:[%s3 + $0x5f8] sm:$0xf]
        %v996 = vld [vmem:[%s3 + $0x5fc] sm:$0xf]
        %v997 = vld [vmem:[%s3 + $0x600] sm:$0xf]
        %v998 = vld [vmem:[%s3 + $0x604] sm:$0xf]
        %v999 = vld [vmem:[%s3 + $0x608] sm:$0xf]
        %v1000 = vld [vmem:[%s3 + $0x60c] sm:$0xf]
        %v1001 = vld [vmem:[%s3 + $0x610] sm:$0xf]
        %v1002 = vld [vmem:[%s3 + $0x614] sm:$0xf]
        %v1003 = vld [vmem:[%s3 + $0x618] sm:$0xf]
        %v1004 = vld [vmem:[%s3 + $0x61c] sm:$0xf]
        %v1005 = vld [vmem:[%s3 + $0x620] sm:$0xf]
        %v1006 = vld [vmem:[%s3 + $0x624] sm:$0xf]
        %v1007 = vld [vmem:[%s3 + $0x628] sm:$0xf]
        %v1008 = vld [vmem:[%s3 + $0x62c] sm:$0xf]
        %v1009 = vld [vmem:[%s3 + $0x630] sm:$0xf]
        %v1010 = vld [vmem:[%s3 + $0x634] sm:$0xf]
        %v1011 = vld [vmem:[%s3 + $0x638] sm:$0xf]
        %v1012 = vld [vmem:[%s3 + $0x63c] sm:$0xf]
        %v1013 = vld [vmem:[%s3 + $0x640] sm:$0xf]
        %v1014 = vld [vmem:[%s3 + $0x644] sm:$0xf]
        %v1015 = vld [vmem:[%s3 + $0x648] sm:$0xf]
        %v1016 = vld [vmem:[%s3 + $0x64c] sm:$0xf]
        %v1017 = vld [vmem:[%s3 + $0x650] sm:$0xf]
        %v1018 = vld [vmem:[%s3 + $0x654] sm:$0xf]
        %v1019 = vld [vmem:[%s3 + $0x658] sm:$0xf]
        %v1020 = vld [vmem:[%s3 + $0x65c] sm:$0xf]
        %v1021 = vld [vmem:[%s3 + $0x660] sm:$0xf]
        %v1022 = vld [vmem:[%s3 + $0x664] sm:$0xf]
        %v1023 = vld [vmem:[%s3 + $0x668] sm:$0xf]
        %v1024 = vld [vmem:[%s3 + $0x66c] sm:$0xf]
        %v1025 = vld [vmem:[%s3 + $0x670] sm:$0xf]
        %v1026 = vld [vmem:[%s3 + $0x674] sm:$0xf]
        %v1027 = vld [vmem:[%s3 + $0x678] sm:$0xf]
        %v1028 = vld [vmem:[%s3 + $0x67c] sm:$0xf]
        %v1029 = vld [vmem:[%s3 + $0x680] sm:$0xf]
        %v1030 = vld [vmem:[%s3 + $0x684] sm:$0xf]
        %v1031 = vld [vmem:[%s3 + $0x688] sm:$0xf]
        %v1032 = vld [vmem:[%s3 + $0x68c] sm:$0xf]
        %v1033 = vld [vmem:[%s3 + $0x690] sm:$0xf]
        %v1034 = vld [vmem:[%s3 + $0x694] sm:$0xf]
        %v1035 = vld [vmem:[%s3 + $0x698] sm:$0xf]
        %v1036 = vld [vmem:[%s3 + $0x69c] sm:$0xf]
        %v1037 = vld [vmem:[%s3 + $0x6a0] sm:$0xf]
        %v1038 = vld [vmem:[%s3 + $0x6a4] sm:$0xf]
        %v1039 = vld [vmem:[%s3 + $0x6a8] sm:$0xf]
        %v1040 = vld [vmem:[%s3 + $0x6ac] sm:$0xf]
        %v1041 = vld [vmem:[%s3 + $0x6b0] sm:$0xf]
        %v1042 = vld [vmem:[%s3 + $0x6b4] sm:$0xf]
        %v1043 = vld [vmem:[%s3 + $0x6b8] sm:$0xf]
        %v1044 = vld [vmem:[%s3 + $0x6bc] sm:$0xf]
        %v1045 = vunpack.c.l.bf16 %v613
        %v1046 = vunpack.c.l.bf16 %v614
        %v1047 = vunpack.c.l.bf16 %v615
        %v1048 = vunpack.c.l.bf16 %v616
        %v1049 = vunpack.c.l.bf16 %v617
        %v1050 = vunpack.c.l.bf16 %v618
        %v1051 = vunpack.c.l.bf16 %v619
        %v1052 = vunpack.c.l.bf16 %v620
        %v1053 = vunpack.c.l.bf16 %v621
        %v1054 = vunpack.c.l.bf16 %v622
        %v1055 = vunpack.c.l.bf16 %v623
        %v1056 = vunpack.c.l.bf16 %v624
        %v1057 = vunpack.c.l.bf16 %v625
        %v1058 = vunpack.c.l.bf16 %v626
        %v1059 = vunpack.c.l.bf16 %v627
        %v1060 = vunpack.c.l.bf16 %v628
        %v1061 = vunpack.c.l.bf16 %v629
        %v1062 = vunpack.c.l.bf16 %v630
        %v1063 = vunpack.c.l.bf16 %v631
        %v1064 = vunpack.c.l.bf16 %v632
        %v1065 = vunpack.c.l.bf16 %v633
        %v1066 = vunpack.c.l.bf16 %v634
        %v1067 = vunpack.c.l.bf16 %v635
        %v1068 = vunpack.c.l.bf16 %v636
        %v1069 = vunpack.c.l.bf16 %v637
        %v1070 = vunpack.c.l.bf16 %v638
        %v1071 = vunpack.c.l.bf16 %v639
        %v1072 = vunpack.c.l.bf16 %v640
        %v1073 = vunpack.c.l.bf16 %v641
        %v1074 = vunpack.c.l.bf16 %v642
        %v1075 = vunpack.c.l.bf16 %v643
        %v1076 = vunpack.c.l.bf16 %v644
        %v1077 = vunpack.c.l.bf16 %v645
        %v1078 = vunpack.c.l.bf16 %v646
        %v1079 = vunpack.c.l.bf16 %v647
        %v1080 = vunpack.c.l.bf16 %v648
        %v1081 = vunpack.c.l.bf16 %v649
        %v1082 = vunpack.c.l.bf16 %v650
        %v1083 = vunpack.c.l.bf16 %v651
        %v1084 = vunpack.c.l.bf16 %v652
        %v1085 = vunpack.c.l.bf16 %v653
        %v1086 = vunpack.c.l.bf16 %v654
        %v1087 = vunpack.c.l.bf16 %v655
        %v1088 = vunpack.c.l.bf16 %v656
        %v1089 = vunpack.c.l.bf16 %v657
        %v1090 = vunpack.c.l.bf16 %v658
        %v1091 = vunpack.c.l.bf16 %v659
        %v1092 = vunpack.c.l.bf16 %v660
        %v1093 = vunpack.c.l.bf16 %v661
        %v1094 = vunpack.c.l.bf16 %v662
        %v1095 = vunpack.c.l.bf16 %v663
        %v1096 = vunpack.c.l.bf16 %v664
        %v1097 = vunpack.c.l.bf16 %v665
        %v1098 = vunpack.c.l.bf16 %v666
        %v1099 = vunpack.c.l.bf16 %v667
        %v1100 = vunpack.c.l.bf16 %v668
        %v1101 = vunpack.c.l.bf16 %v669
        %v1102 = vunpack.c.l.bf16 %v670
        %v1103 = vunpack.c.l.bf16 %v671
        %v1104 = vunpack.c.l.bf16 %v672
        %v1105 = vunpack.c.l.bf16 %v673
        %v1106 = vunpack.c.l.bf16 %v674
        %v1107 = vunpack.c.l.bf16 %v675
        %v1108 = vunpack.c.l.bf16 %v676
        %v1109 = vunpack.c.l.bf16 %v677
        %v1110 = vunpack.c.l.bf16 %v678
        %v1111 = vunpack.c.l.bf16 %v679
        %v1112 = vunpack.c.l.bf16 %v680
        %v1113 = vunpack.c.l.bf16 %v681
        %v1114 = vunpack.c.l.bf16 %v682
        %v1115 = vunpack.c.l.bf16 %v683
        %v1116 = vunpack.c.l.bf16 %v684
        %v1117 = vunpack.c.l.bf16 %v685
        %v1118 = vunpack.c.l.bf16 %v686
        %v1119 = vunpack.c.l.bf16 %v687
        %v1120 = vunpack.c.l.bf16 %v688
        %v1121 = vunpack.c.l.bf16 %v689
        %v1122 = vunpack.c.l.bf16 %v690
        %v1123 = vunpack.c.l.bf16 %v691
        %v1124 = vunpack.c.l.bf16 %v692
        %v1125 = vunpack.c.l.bf16 %v693
        %v1126 = vunpack.c.l.bf16 %v694
        %v1127 = vunpack.c.l.bf16 %v695
        %v1128 = vunpack.c.l.bf16 %v696
        %v1129 = vunpack.c.l.bf16 %v697
        %v1130 = vunpack.c.l.bf16 %v698
        %v1131 = vunpack.c.l.bf16 %v699
        %v1132 = vunpack.c.l.bf16 %v700
        %v1133 = vunpack.c.l.bf16 %v701
        %v1134 = vunpack.c.l.bf16 %v702
        %v1135 = vunpack.c.l.bf16 %v703
        %v1136 = vunpack.c.l.bf16 %v704
        %v1137 = vunpack.c.l.bf16 %v705
        %v1138 = vunpack.c.l.bf16 %v706
        %v1139 = vunpack.c.l.bf16 %v707
        %v1140 = vunpack.c.l.bf16 %v708
        %v1141 = vunpack.c.l.bf16 %v709
        %v1142 = vunpack.c.l.bf16 %v710
        %v1143 = vunpack.c.l.bf16 %v711
        %v1144 = vunpack.c.l.bf16 %v712
        %v1145 = vunpack.c.l.bf16 %v713
        %v1146 = vunpack.c.l.bf16 %v714
        %v1147 = vunpack.c.l.bf16 %v715
        %v1148 = vunpack.c.l.bf16 %v716
        %v1149 = vunpack.c.l.bf16 %v717
        %v1150 = vunpack.c.l.bf16 %v718
        %v1151 = vunpack.c.l.bf16 %v719
        %v1152 = vunpack.c.l.bf16 %v720
        %v1153 = vunpack.c.l.bf16 %v721
        %v1154 = vunpack.c.l.bf16 %v722
        %v1155 = vunpack.c.l.bf16 %v723
        %v1156 = vunpack.c.l.bf16 %v724
        %v1157 = vunpack.c.l.bf16 %v725
        %v1158 = vunpack.c.l.bf16 %v726
        %v1159 = vunpack.c.l.bf16 %v727
        %v1160 = vunpack.c.l.bf16 %v728
        %v1161 = vunpack.c.l.bf16 %v729
        %v1162 = vunpack.c.l.bf16 %v730
        %v1163 = vunpack.c.l.bf16 %v731
        %v1164 = vunpack.c.l.bf16 %v732
        %v1165 = vunpack.c.l.bf16 %v733
        %v1166 = vunpack.c.l.bf16 %v734
        %v1167 = vunpack.c.l.bf16 %v735
        %v1168 = vunpack.c.l.bf16 %v736
        %v1169 = vunpack.c.l.bf16 %v737
        %v1170 = vunpack.c.l.bf16 %v738
        %v1171 = vunpack.c.l.bf16 %v739
        %v1172 = vunpack.c.l.bf16 %v740
        %v1173 = vunpack.c.l.bf16 %v741
        %v1174 = vunpack.c.l.bf16 %v742
        %v1175 = vunpack.c.l.bf16 %v743
        %v1176 = vunpack.c.l.bf16 %v744
        %v1177 = vunpack.c.l.bf16 %v745
        %v1178 = vunpack.c.l.bf16 %v746
        %v1179 = vunpack.c.l.bf16 %v747
        %v1180 = vunpack.c.l.bf16 %v748
        %v1181 = vunpack.c.l.bf16 %v749
        %v1182 = vunpack.c.l.bf16 %v750
        %v1183 = vunpack.c.l.bf16 %v751
        %v1184 = vunpack.c.l.bf16 %v752
        %v1185 = vunpack.c.l.bf16 %v753
        %v1186 = vunpack.c.l.bf16 %v754
        %v1187 = vunpack.c.l.bf16 %v755
        %v1188 = vunpack.c.l.bf16 %v756
        %v1189 = vunpack.c.l.bf16 %v757
        %v1190 = vunpack.c.l.bf16 %v758
        %v1191 = vunpack.c.l.bf16 %v759
        %v1192 = vunpack.c.l.bf16 %v760
        %v1193 = vunpack.c.l.bf16 %v761
        %v1194 = vunpack.c.l.bf16 %v762
        %v1195 = vunpack.c.l.bf16 %v763
        %v1196 = vunpack.c.l.bf16 %v764
        %v1197 = vunpack.c.l.bf16 %v765
        %v1198 = vunpack.c.l.bf16 %v766
        %v1199 = vunpack.c.l.bf16 %v767
        %v1200 = vunpack.c.l.bf16 %v768
        %v1201 = vunpack.c.l.bf16 %v769
        %v1202 = vunpack.c.l.bf16 %v770
        %v1203 = vunpack.c.l.bf16 %v771
        %v1204 = vunpack.c.l.bf16 %v772
        %v1205 = vunpack.c.l.bf16 %v773
        %v1206 = vunpack.c.l.bf16 %v774
        %v1207 = vunpack.c.l.bf16 %v775
        %v1208 = vunpack.c.l.bf16 %v776
        %v1209 = vunpack.c.l.bf16 %v777
        %v1210 = vunpack.c.l.bf16 %v778
        %v1211 = vunpack.c.l.bf16 %v779
        %v1212 = vunpack.c.l.bf16 %v780
        %v1213 = vunpack.c.l.bf16 %v781
        %v1214 = vunpack.c.l.bf16 %v782
        %v1215 = vunpack.c.l.bf16 %v783
        %v1216 = vunpack.c.l.bf16 %v784
        %v1217 = vunpack.c.l.bf16 %v785
        %v1218 = vunpack.c.l.bf16 %v786
        %v1219 = vunpack.c.l.bf16 %v787
        %v1220 = vunpack.c.l.bf16 %v788
        %v1221 = vunpack.c.l.bf16 %v789
        %v1222 = vunpack.c.l.bf16 %v790
        %v1223 = vunpack.c.l.bf16 %v791
        %v1224 = vunpack.c.l.bf16 %v792
        %v1225 = vunpack.c.l.bf16 %v793
        %v1226 = vunpack.c.l.bf16 %v794
        %v1227 = vunpack.c.l.bf16 %v795
        %v1228 = vunpack.c.l.bf16 %v796
        %v1229 = vunpack.c.l.bf16 %v797
        %v1230 = vunpack.c.l.bf16 %v798
        %v1231 = vunpack.c.l.bf16 %v799
        %v1232 = vunpack.c.l.bf16 %v800
        %v1233 = vunpack.c.l.bf16 %v801
        %v1234 = vunpack.c.l.bf16 %v802
        %v1235 = vunpack.c.l.bf16 %v803
        %v1236 = vunpack.c.l.bf16 %v804
        %v1237 = vunpack.c.l.bf16 %v805
        %v1238 = vunpack.c.l.bf16 %v806
        %v1239 = vunpack.c.l.bf16 %v807
        %v1240 = vunpack.c.l.bf16 %v808
        %v1241 = vunpack.c.l.bf16 %v809
        %v1242 = vunpack.c.l.bf16 %v810
        %v1243 = vunpack.c.l.bf16 %v811
        %v1244 = vunpack.c.l.bf16 %v812
        %v1245 = vunpack.c.l.bf16 %v813
        %v1246 = vunpack.c.l.bf16 %v814
        %v1247 = vunpack.c.l.bf16 %v815
        %v1248 = vunpack.c.l.bf16 %v816
        %v1249 = vunpack.c.l.bf16 %v817
        %v1250 = vunpack.c.l.bf16 %v818
        %v1251 = vunpack.c.l.bf16 %v819
        %v1252 = vunpack.c.l.bf16 %v820
        %v1253 = vunpack.c.l.bf16 %v821
        %v1254 = vunpack.c.l.bf16 %v822
        %v1255 = vunpack.c.l.bf16 %v823
        %v1256 = vunpack.c.l.bf16 %v824
        %v1257 = vunpack.c.l.bf16 %v825
        %v1258 = vunpack.c.l.bf16 %v826
        %v1259 = vunpack.c.l.bf16 %v827
        %v1260 = vunpack.c.l.bf16 %v828
        %v1261 = vunpack.c.l.bf16 %v829
        %v1262 = vunpack.c.l.bf16 %v830
        %v1263 = vunpack.c.l.bf16 %v831
        %v1264 = vunpack.c.l.bf16 %v832
        %v1265 = vunpack.c.l.bf16 %v833
        %v1266 = vunpack.c.l.bf16 %v834
        %v1267 = vunpack.c.l.bf16 %v835
        %v1268 = vunpack.c.l.bf16 %v836
        %v1269 = vunpack.c.l.bf16 %v837
        %v1270 = vunpack.c.l.bf16 %v838
        %v1271 = vunpack.c.l.bf16 %v839
        %v1272 = vunpack.c.l.bf16 %v840
        %v1273 = vunpack.c.l.bf16 %v841
        %v1274 = vunpack.c.l.bf16 %v842
        %v1275 = vunpack.c.l.bf16 %v843
        %v1276 = vunpack.c.l.bf16 %v844
        %v1277 = vunpack.c.l.bf16 %v845
        %v1278 = vunpack.c.l.bf16 %v846
        %v1279 = vunpack.c.l.bf16 %v847
        %v1280 = vunpack.c.l.bf16 %v848
        %v1281 = vunpack.c.l.bf16 %v849
        %v1282 = vunpack.c.l.bf16 %v850
        %v1283 = vunpack.c.l.bf16 %v851
        %v1284 = vunpack.c.l.bf16 %v852
        %v1285 = vunpack.c.l.bf16 %v853
        %v1286 = vunpack.c.l.bf16 %v854
        %v1287 = vunpack.c.l.bf16 %v855
        %v1288 = vunpack.c.l.bf16 %v856
        %v1289 = vunpack.c.l.bf16 %v857
        %v1290 = vunpack.c.l.bf16 %v858
        %v1291 = vunpack.c.l.bf16 %v859
        %v1292 = vunpack.c.l.bf16 %v860
        %v1293 = vunpack.c.l.bf16 %v861
        %v1294 = vunpack.c.l.bf16 %v862
        %v1295 = vunpack.c.l.bf16 %v863
        %v1296 = vunpack.c.l.bf16 %v864
        %v1297 = vunpack.c.l.bf16 %v865
        %v1298 = vunpack.c.l.bf16 %v866
        %v1299 = vunpack.c.l.bf16 %v867
        %v1300 = vunpack.c.l.bf16 %v868
        %v1301 = vunpack.c.l.bf16 %v869
        %v1302 = vunpack.c.l.bf16 %v870
        %v1303 = vunpack.c.l.bf16 %v871
        %v1304 = vunpack.c.l.bf16 %v872
        %v1305 = vunpack.c.l.bf16 %v873
        %v1306 = vunpack.c.l.bf16 %v874
        %v1307 = vunpack.c.l.bf16 %v875
        %v1308 = vunpack.c.l.bf16 %v876
        %v1309 = vunpack.c.l.bf16 %v877
        %v1310 = vunpack.c.l.bf16 %v878
        %v1311 = vunpack.c.l.bf16 %v879
        %v1312 = vunpack.c.l.bf16 %v880
        %v1313 = vunpack.c.l.bf16 %v881
        %v1314 = vunpack.c.l.bf16 %v882
        %v1315 = vunpack.c.l.bf16 %v883
        %v1316 = vunpack.c.l.bf16 %v884
        %v1317 = vunpack.c.l.bf16 %v885
        %v1318 = vunpack.c.l.bf16 %v886
        %v1319 = vunpack.c.l.bf16 %v887
        %v1320 = vunpack.c.l.bf16 %v888
        %v1321 = vunpack.c.l.bf16 %v889
        %v1322 = vunpack.c.l.bf16 %v890
        %v1323 = vunpack.c.l.bf16 %v891
        %v1324 = vunpack.c.l.bf16 %v892
        %v1325 = vunpack.c.l.bf16 %v893
        %v1326 = vunpack.c.l.bf16 %v894
        %v1327 = vunpack.c.l.bf16 %v895
        %v1328 = vunpack.c.l.bf16 %v896
        %v1329 = vunpack.c.l.bf16 %v897
        %v1330 = vunpack.c.l.bf16 %v898
        %v1331 = vunpack.c.l.bf16 %v899
        %v1332 = vunpack.c.l.bf16 %v900
        %v1333 = vunpack.c.l.bf16 %v901
        %v1334 = vunpack.c.l.bf16 %v902
        %v1335 = vunpack.c.l.bf16 %v903
        %v1336 = vunpack.c.l.bf16 %v904
        %v1337 = vunpack.c.l.bf16 %v905
        %v1338 = vunpack.c.l.bf16 %v906
        %v1339 = vunpack.c.l.bf16 %v907
        %v1340 = vunpack.c.l.bf16 %v908
        %v1341 = vunpack.c.l.bf16 %v909
        %v1342 = vunpack.c.l.bf16 %v910
        %v1343 = vunpack.c.l.bf16 %v911
        %v1344 = vunpack.c.l.bf16 %v912
        %v1345 = vunpack.c.l.bf16 %v913
        %v1346 = vunpack.c.l.bf16 %v914
        %v1347 = vunpack.c.l.bf16 %v915
        %v1348 = vunpack.c.l.bf16 %v916
        %v1349 = vunpack.c.l.bf16 %v917
        %v1350 = vunpack.c.l.bf16 %v918
        %v1351 = vunpack.c.l.bf16 %v919
        %v1352 = vunpack.c.l.bf16 %v920
        %v1353 = vunpack.c.l.bf16 %v921
        %v1354 = vunpack.c.l.bf16 %v922
        %v1355 = vunpack.c.l.bf16 %v923
        %v1356 = vunpack.c.l.bf16 %v924
        %v1357 = vunpack.c.l.bf16 %v925
        %v1358 = vunpack.c.l.bf16 %v926
        %v1359 = vunpack.c.l.bf16 %v927
        %v1360 = vunpack.c.l.bf16 %v928
        %v1361 = vunpack.c.l.bf16 %v929
        %v1362 = vunpack.c.l.bf16 %v930
        %v1363 = vunpack.c.l.bf16 %v931
        %v1364 = vunpack.c.l.bf16 %v932
        %v1365 = vunpack.c.l.bf16 %v933
        %v1366 = vunpack.c.l.bf16 %v934
        %v1367 = vunpack.c.l.bf16 %v935
        %v1368 = vunpack.c.l.bf16 %v936
        %v1369 = vunpack.c.l.bf16 %v937
        %v1370 = vunpack.c.l.bf16 %v938
        %v1371 = vunpack.c.l.bf16 %v939
        %v1372 = vunpack.c.l.bf16 %v940
        %v1373 = vunpack.c.l.bf16 %v941
        %v1374 = vunpack.c.l.bf16 %v942
        %v1375 = vunpack.c.l.bf16 %v943
        %v1376 = vunpack.c.l.bf16 %v944
        %v1377 = vunpack.c.l.bf16 %v945
        %v1378 = vunpack.c.l.bf16 %v946
        %v1379 = vunpack.c.l.bf16 %v947
        %v1380 = vunpack.c.l.bf16 %v948
        %v1381 = vunpack.c.l.bf16 %v949
        %v1382 = vunpack.c.l.bf16 %v950
        %v1383 = vunpack.c.l.bf16 %v951
        %v1384 = vunpack.c.l.bf16 %v952
        %v1385 = vunpack.c.l.bf16 %v953
        %v1386 = vunpack.c.l.bf16 %v954
        %v1387 = vunpack.c.l.bf16 %v955
        %v1388 = vunpack.c.l.bf16 %v956
        %v1389 = vunpack.c.l.bf16 %v957
        %v1390 = vunpack.c.l.bf16 %v958
        %v1391 = vunpack.c.l.bf16 %v959
        %v1392 = vunpack.c.l.bf16 %v960
        %v1393 = vunpack.c.l.bf16 %v961
        %v1394 = vunpack.c.l.bf16 %v962
        %v1395 = vunpack.c.l.bf16 %v963
        %v1396 = vunpack.c.l.bf16 %v964
        %v1397 = vunpack.c.l.bf16 %v965
        %v1398 = vunpack.c.l.bf16 %v966
        %v1399 = vunpack.c.l.bf16 %v967
        %v1400 = vunpack.c.l.bf16 %v968
        %v1401 = vunpack.c.l.bf16 %v969
        %v1402 = vunpack.c.l.bf16 %v970
        %v1403 = vunpack.c.l.bf16 %v971
        %v1404 = vunpack.c.l.bf16 %v972
        %v1405 = vunpack.c.l.bf16 %v973
        %v1406 = vunpack.c.l.bf16 %v974
        %v1407 = vunpack.c.l.bf16 %v975
        %v1408 = vunpack.c.l.bf16 %v976
        %v1409 = vunpack.c.l.bf16 %v977
        %v1410 = vunpack.c.l.bf16 %v978
        %v1411 = vunpack.c.l.bf16 %v979
        %v1412 = vunpack.c.l.bf16 %v980
        %v1413 = vunpack.c.l.bf16 %v981
        %v1414 = vunpack.c.l.bf16 %v982
        %v1415 = vunpack.c.l.bf16 %v983
        %v1416 = vunpack.c.l.bf16 %v984
        %v1417 = vunpack.c.l.bf16 %v985
        %v1418 = vunpack.c.l.bf16 %v986
        %v1419 = vunpack.c.l.bf16 %v987
        %v1420 = vunpack.c.l.bf16 %v988
        %v1421 = vunpack.c.l.bf16 %v989
        %v1422 = vunpack.c.l.bf16 %v990
        %v1423 = vunpack.c.l.bf16 %v991
        %v1424 = vunpack.c.l.bf16 %v992
        %v1425 = vunpack.c.l.bf16 %v993
        %v1426 = vunpack.c.l.bf16 %v994
        %v1427 = vunpack.c.l.bf16 %v995
        %v1428 = vunpack.c.l.bf16 %v996
        %v1429 = vunpack.c.l.bf16 %v997
        %v1430 = vunpack.c.l.bf16 %v998
        %v1431 = vunpack.c.l.bf16 %v999
        %v1432 = vunpack.c.l.bf16 %v1000
        %v1433 = vunpack.c.l.bf16 %v1001
        %v1434 = vunpack.c.l.bf16 %v1002
        %v1435 = vunpack.c.l.bf16 %v1003
        %v1436 = vunpack.c.l.bf16 %v1004
        %v1437 = vunpack.c.l.bf16 %v1005
        %v1438 = vunpack.c.l.bf16 %v1006
        %v1439 = vunpack.c.l.bf16 %v1007
        %v1440 = vunpack.c.l.bf16 %v1008
        %v1441 = vunpack.c.l.bf16 %v1009
        %v1442 = vunpack.c.l.bf16 %v1010
        %v1443 = vunpack.c.l.bf16 %v1011
        %v1444 = vunpack.c.l.bf16 %v1012
        %v1445 = vunpack.c.l.bf16 %v1013
        %v1446 = vunpack.c.l.bf16 %v1014
        %v1447 = vunpack.c.l.bf16 %v1015
        %v1448 = vunpack.c.l.bf16 %v1016
        %v1449 = vunpack.c.l.bf16 %v1017
        %v1450 = vunpack.c.l.bf16 %v1018
        %v1451 = vunpack.c.l.bf16 %v1019
        %v1452 = vunpack.c.l.bf16 %v1020
        %v1453 = vunpack.c.l.bf16 %v1021
        %v1454 = vunpack.c.l.bf16 %v1022
        %v1455 = vunpack.c.l.bf16 %v1023
        %v1456 = vunpack.c.l.bf16 %v1024
        %v1457 = vunpack.c.l.bf16 %v1025
        %v1458 = vunpack.c.l.bf16 %v1026
        %v1459 = vunpack.c.l.bf16 %v1027
        %v1460 = vunpack.c.l.bf16 %v1028
        %v1461 = vunpack.c.l.bf16 %v1029
        %v1462 = vunpack.c.l.bf16 %v1030
        %v1463 = vunpack.c.l.bf16 %v1031
        %v1464 = vunpack.c.l.bf16 %v1032
        %v1465 = vunpack.c.l.bf16 %v1033
        %v1466 = vunpack.c.l.bf16 %v1034
        %v1467 = vunpack.c.l.bf16 %v1035
        %v1468 = vunpack.c.l.bf16 %v1036
        %v1469 = vunpack.c.l.bf16 %v1037
        %v1470 = vunpack.c.l.bf16 %v1038
        %v1471 = vunpack.c.l.bf16 %v1039
        %v1472 = vunpack.c.l.bf16 %v1040
        %v1473 = vunpack.c.l.bf16 %v1041
        %v1474 = vunpack.c.l.bf16 %v1042
        %v1475 = vunpack.c.l.bf16 %v1043
        %v1476 = vunpack.c.l.bf16 %v1044
        %v1477 = vld [vmem:[%s6] sm:$0xf]
        %v1478 = vld [vmem:[%s6 + $0x4] sm:$0xf]
        %v1479 = vld [vmem:[%s6 + $0x8] sm:$0xf]
        %v1480 = vld [vmem:[%s6 + $0xc] sm:$0xf]
        %v1481 = vld [vmem:[%s6 + $0x10] sm:$0xf]
        %v1482 = vld [vmem:[%s6 + $0x14] sm:$0xf]
        %v1483 = vld [vmem:[%s6 + $0x18] sm:$0xf]
        %v1484 = vld [vmem:[%s6 + $0x1c] sm:$0xf]
        %v1485 = vld [vmem:[%s6 + $0x20] sm:$0xf]
        %v1486 = vld [vmem:[%s6 + $0x24] sm:$0xf]
        %v1487 = vld [vmem:[%s6 + $0x28] sm:$0xf]
        %v1488 = vld [vmem:[%s6 + $0x2c] sm:$0xf]
        %v1489 = vld [vmem:[%s6 + $0x30] sm:$0xf]
        %v1490 = vld [vmem:[%s6 + $0x34] sm:$0xf]
        %v1491 = vld [vmem:[%s6 + $0x38] sm:$0xf]
        %v1492 = vld [vmem:[%s6 + $0x3c] sm:$0xf]
        %v1493 = vld [vmem:[%s6 + $0x40] sm:$0xf]
        %v1494 = vld [vmem:[%s6 + $0x44] sm:$0xf]
        %v1495 = vld [vmem:[%s6 + $0x48] sm:$0xf]
        %v1496 = vld [vmem:[%s6 + $0x4c] sm:$0xf]
        %v1497 = vld [vmem:[%s6 + $0x50] sm:$0xf]
        %v1498 = vld [vmem:[%s6 + $0x54] sm:$0xf]
        %v1499 = vld [vmem:[%s6 + $0x58] sm:$0xf]
        %v1500 = vld [vmem:[%s6 + $0x5c] sm:$0xf]
        %v1501 = vld [vmem:[%s6 + $0x60] sm:$0xf]
        %v1502 = vld [vmem:[%s6 + $0x64] sm:$0xf]
        %v1503 = vld [vmem:[%s6 + $0x68] sm:$0xf]
        %v1504 = vld [vmem:[%s6 + $0x6c] sm:$0xf]
        %v1505 = vld [vmem:[%s6 + $0x70] sm:$0xf]
        %v1506 = vld [vmem:[%s6 + $0x74] sm:$0xf]
        %v1507 = vld [vmem:[%s6 + $0x78] sm:$0xf]
        %v1508 = vld [vmem:[%s6 + $0x7c] sm:$0xf]
        %v1509 = vld [vmem:[%s6 + $0x80] sm:$0xf]
        %v1510 = vld [vmem:[%s6 + $0x84] sm:$0xf]
        %v1511 = vld [vmem:[%s6 + $0x88] sm:$0xf]
        %v1512 = vld [vmem:[%s6 + $0x8c] sm:$0xf]
        %v1513 = vld [vmem:[%s6 + $0x90] sm:$0xf]
        %v1514 = vld [vmem:[%s6 + $0x94] sm:$0xf]
        %v1515 = vld [vmem:[%s6 + $0x98] sm:$0xf]
        %v1516 = vld [vmem:[%s6 + $0x9c] sm:$0xf]
        %v1517 = vld [vmem:[%s6 + $0xa0] sm:$0xf]
        %v1518 = vld [vmem:[%s6 + $0xa4] sm:$0xf]
        %v1519 = vld [vmem:[%s6 + $0xa8] sm:$0xf]
        %v1520 = vld [vmem:[%s6 + $0xac] sm:$0xf]
        %v1521 = vld [vmem:[%s6 + $0xb0] sm:$0xf]
        %v1522 = vld [vmem:[%s6 + $0xb4] sm:$0xf]
        %v1523 = vld [vmem:[%s6 + $0xb8] sm:$0xf]
        %v1524 = vld [vmem:[%s6 + $0xbc] sm:$0xf]
        %v1525 = vld [vmem:[%s6 + $0xc0] sm:$0xf]
        %v1526 = vld [vmem:[%s6 + $0xc4] sm:$0xf]
        %v1527 = vld [vmem:[%s6 + $0xc8] sm:$0xf]
        %v1528 = vld [vmem:[%s6 + $0xcc] sm:$0xf]
        %v1529 = vld [vmem:[%s6 + $0xd0] sm:$0xf]
        %v1530 = vld [vmem:[%s6 + $0xd4] sm:$0xf]
        %v1531 = vld [vmem:[%s6 + $0xd8] sm:$0xf]
        %v1532 = vld [vmem:[%s6 + $0xdc] sm:$0xf]
        %v1533 = vld [vmem:[%s6 + $0xe0] sm:$0xf]
        %v1534 = vld [vmem:[%s6 + $0xe4] sm:$0xf]
        %v1535 = vld [vmem:[%s6 + $0xe8] sm:$0xf]
        %v1536 = vld [vmem:[%s6 + $0xec] sm:$0xf]
        %v1537 = vld [vmem:[%s6 + $0xf0] sm:$0xf]
        %v1538 = vld [vmem:[%s6 + $0xf4] sm:$0xf]
        %v1539 = vld [vmem:[%s6 + $0xf8] sm:$0xf]
        %v1540 = vld [vmem:[%s6 + $0xfc] sm:$0xf]
        %v1541 = vld [vmem:[%s6 + $0x100] sm:$0xf]
        %v1542 = vld [vmem:[%s6 + $0x104] sm:$0xf]
        %v1543 = vld [vmem:[%s6 + $0x108] sm:$0xf]
        %v1544 = vld [vmem:[%s6 + $0x10c] sm:$0xf]
        %v1545 = vld [vmem:[%s6 + $0x110] sm:$0xf]
        %v1546 = vld [vmem:[%s6 + $0x114] sm:$0xf]
        %v1547 = vld [vmem:[%s6 + $0x118] sm:$0xf]
        %v1548 = vld [vmem:[%s6 + $0x11c] sm:$0xf]
        %v1549 = vld [vmem:[%s6 + $0x120] sm:$0xf]
        %v1550 = vld [vmem:[%s6 + $0x124] sm:$0xf]
        %v1551 = vld [vmem:[%s6 + $0x128] sm:$0xf]
        %v1552 = vld [vmem:[%s6 + $0x12c] sm:$0xf]
        %v1553 = vld [vmem:[%s6 + $0x130] sm:$0xf]
        %v1554 = vld [vmem:[%s6 + $0x134] sm:$0xf]
        %v1555 = vld [vmem:[%s6 + $0x138] sm:$0xf]
        %v1556 = vld [vmem:[%s6 + $0x13c] sm:$0xf]
        %v1557 = vld [vmem:[%s6 + $0x140] sm:$0xf]
        %v1558 = vld [vmem:[%s6 + $0x144] sm:$0xf]
        %v1559 = vld [vmem:[%s6 + $0x148] sm:$0xf]
        %v1560 = vld [vmem:[%s6 + $0x14c] sm:$0xf]
        %v1561 = vld [vmem:[%s6 + $0x150] sm:$0xf]
        %v1562 = vld [vmem:[%s6 + $0x154] sm:$0xf]
        %v1563 = vld [vmem:[%s6 + $0x158] sm:$0xf]
        %v1564 = vld [vmem:[%s6 + $0x15c] sm:$0xf]
        %v1565 = vld [vmem:[%s6 + $0x160] sm:$0xf]
        %v1566 = vld [vmem:[%s6 + $0x164] sm:$0xf]
        %v1567 = vld [vmem:[%s6 + $0x168] sm:$0xf]
        %v1568 = vld [vmem:[%s6 + $0x16c] sm:$0xf]
        %v1569 = vld [vmem:[%s6 + $0x170] sm:$0xf]
        %v1570 = vld [vmem:[%s6 + $0x174] sm:$0xf]
        %v1571 = vld [vmem:[%s6 + $0x178] sm:$0xf]
        %v1572 = vld [vmem:[%s6 + $0x17c] sm:$0xf]
        %v1573 = vld [vmem:[%s6 + $0x180] sm:$0xf]
        %v1574 = vld [vmem:[%s6 + $0x184] sm:$0xf]
        %v1575 = vld [vmem:[%s6 + $0x188] sm:$0xf]
        %v1576 = vld [vmem:[%s6 + $0x18c] sm:$0xf]
        %v1577 = vld [vmem:[%s6 + $0x190] sm:$0xf]
        %v1578 = vld [vmem:[%s6 + $0x194] sm:$0xf]
        %v1579 = vld [vmem:[%s6 + $0x198] sm:$0xf]
        %v1580 = vld [vmem:[%s6 + $0x19c] sm:$0xf]
        %v1581 = vld [vmem:[%s6 + $0x1a0] sm:$0xf]
        %v1582 = vld [vmem:[%s6 + $0x1a4] sm:$0xf]
        %v1583 = vld [vmem:[%s6 + $0x1a8] sm:$0xf]
        %v1584 = vld [vmem:[%s6 + $0x1ac] sm:$0xf]
        %v1585 = vld [vmem:[%s6 + $0x1b0] sm:$0xf]
        %v1586 = vld [vmem:[%s6 + $0x1b4] sm:$0xf]
        %v1587 = vld [vmem:[%s6 + $0x1b8] sm:$0xf]
        %v1588 = vld [vmem:[%s6 + $0x1bc] sm:$0xf]
        %v1589 = vld [vmem:[%s6 + $0x1c0] sm:$0xf]
        %v1590 = vld [vmem:[%s6 + $0x1c4] sm:$0xf]
        %v1591 = vld [vmem:[%s6 + $0x1c8] sm:$0xf]
        %v1592 = vld [vmem:[%s6 + $0x1cc] sm:$0xf]
        %v1593 = vld [vmem:[%s6 + $0x1d0] sm:$0xf]
        %v1594 = vld [vmem:[%s6 + $0x1d4] sm:$0xf]
        %v1595 = vld [vmem:[%s6 + $0x1d8] sm:$0xf]
        %v1596 = vld [vmem:[%s6 + $0x1dc] sm:$0xf]
        %v1597 = vld [vmem:[%s6 + $0x1e0] sm:$0xf]
        %v1598 = vld [vmem:[%s6 + $0x1e4] sm:$0xf]
        %v1599 = vld [vmem:[%s6 + $0x1e8] sm:$0xf]
        %v1600 = vld [vmem:[%s6 + $0x1ec] sm:$0xf]
        %v1601 = vld [vmem:[%s6 + $0x1f0] sm:$0xf]
        %v1602 = vld [vmem:[%s6 + $0x1f4] sm:$0xf]
        %v1603 = vld [vmem:[%s6 + $0x1f8] sm:$0xf]
        %v1604 = vld [vmem:[%s6 + $0x1fc] sm:$0xf]
        %v1605 = vld [vmem:[%s6 + $0x200] sm:$0xf]
        %v1606 = vld [vmem:[%s6 + $0x204] sm:$0xf]
        %v1607 = vld [vmem:[%s6 + $0x208] sm:$0xf]
        %v1608 = vld [vmem:[%s6 + $0x20c] sm:$0xf]
        %v1609 = vld [vmem:[%s6 + $0x210] sm:$0xf]
        %v1610 = vld [vmem:[%s6 + $0x214] sm:$0xf]
        %v1611 = vld [vmem:[%s6 + $0x218] sm:$0xf]
        %v1612 = vld [vmem:[%s6 + $0x21c] sm:$0xf]
        %v1613 = vld [vmem:[%s6 + $0x220] sm:$0xf]
        %v1614 = vld [vmem:[%s6 + $0x224] sm:$0xf]
        %v1615 = vld [vmem:[%s6 + $0x228] sm:$0xf]
        %v1616 = vld [vmem:[%s6 + $0x22c] sm:$0xf]
        %v1617 = vld [vmem:[%s6 + $0x230] sm:$0xf]
        %v1618 = vld [vmem:[%s6 + $0x234] sm:$0xf]
        %v1619 = vld [vmem:[%s6 + $0x238] sm:$0xf]
        %v1620 = vld [vmem:[%s6 + $0x23c] sm:$0xf]
        %v1621 = vunpack.c.l.bf16 %v1477
        %v1622 = vunpack.c.l.bf16 %v1478
        %v1623 = vunpack.c.l.bf16 %v1479
        %v1624 = vunpack.c.l.bf16 %v1480
        %v1625 = vunpack.c.l.bf16 %v1481
        %v1626 = vunpack.c.l.bf16 %v1482
        %v1627 = vunpack.c.l.bf16 %v1483
        %v1628 = vunpack.c.l.bf16 %v1484
        %v1629 = vunpack.c.l.bf16 %v1485
        %v1630 = vunpack.c.l.bf16 %v1486
        %v1631 = vunpack.c.l.bf16 %v1487
        %v1632 = vunpack.c.l.bf16 %v1488
        %v1633 = vunpack.c.l.bf16 %v1489
        %v1634 = vunpack.c.l.bf16 %v1490
        %v1635 = vunpack.c.l.bf16 %v1491
        %v1636 = vunpack.c.l.bf16 %v1492
        %v1637 = vunpack.c.l.bf16 %v1493
        %v1638 = vunpack.c.l.bf16 %v1494
        %v1639 = vunpack.c.l.bf16 %v1495
        %v1640 = vunpack.c.l.bf16 %v1496
        %v1641 = vunpack.c.l.bf16 %v1497
        %v1642 = vunpack.c.l.bf16 %v1498
        %v1643 = vunpack.c.l.bf16 %v1499
        %v1644 = vunpack.c.l.bf16 %v1500
        %v1645 = vunpack.c.l.bf16 %v1501
        %v1646 = vunpack.c.l.bf16 %v1502
        %v1647 = vunpack.c.l.bf16 %v1503
        %v1648 = vunpack.c.l.bf16 %v1504
        %v1649 = vunpack.c.l.bf16 %v1505
        %v1650 = vunpack.c.l.bf16 %v1506
        %v1651 = vunpack.c.l.bf16 %v1507
        %v1652 = vunpack.c.l.bf16 %v1508
        %v1653 = vunpack.c.l.bf16 %v1509
        %v1654 = vunpack.c.l.bf16 %v1510
        %v1655 = vunpack.c.l.bf16 %v1511
        %v1656 = vunpack.c.l.bf16 %v1512
        %v1657 = vunpack.c.l.bf16 %v1513
        %v1658 = vunpack.c.l.bf16 %v1514
        %v1659 = vunpack.c.l.bf16 %v1515
        %v1660 = vunpack.c.l.bf16 %v1516
        %v1661 = vunpack.c.l.bf16 %v1517
        %v1662 = vunpack.c.l.bf16 %v1518
        %v1663 = vunpack.c.l.bf16 %v1519
        %v1664 = vunpack.c.l.bf16 %v1520
        %v1665 = vunpack.c.l.bf16 %v1521
        %v1666 = vunpack.c.l.bf16 %v1522
        %v1667 = vunpack.c.l.bf16 %v1523
        %v1668 = vunpack.c.l.bf16 %v1524
        %v1669 = vunpack.c.l.bf16 %v1525
        %v1670 = vunpack.c.l.bf16 %v1526
        %v1671 = vunpack.c.l.bf16 %v1527
        %v1672 = vunpack.c.l.bf16 %v1528
        %v1673 = vunpack.c.l.bf16 %v1529
        %v1674 = vunpack.c.l.bf16 %v1530
        %v1675 = vunpack.c.l.bf16 %v1531
        %v1676 = vunpack.c.l.bf16 %v1532
        %v1677 = vunpack.c.l.bf16 %v1533
        %v1678 = vunpack.c.l.bf16 %v1534
        %v1679 = vunpack.c.l.bf16 %v1535
        %v1680 = vunpack.c.l.bf16 %v1536
        %v1681 = vunpack.c.l.bf16 %v1537
        %v1682 = vunpack.c.l.bf16 %v1538
        %v1683 = vunpack.c.l.bf16 %v1539
        %v1684 = vunpack.c.l.bf16 %v1540
        %v1685 = vunpack.c.l.bf16 %v1541
        %v1686 = vunpack.c.l.bf16 %v1542
        %v1687 = vunpack.c.l.bf16 %v1543
        %v1688 = vunpack.c.l.bf16 %v1544
        %v1689 = vunpack.c.l.bf16 %v1545
        %v1690 = vunpack.c.l.bf16 %v1546
        %v1691 = vunpack.c.l.bf16 %v1547
        %v1692 = vunpack.c.l.bf16 %v1548
        %v1693 = vunpack.c.l.bf16 %v1549
        %v1694 = vunpack.c.l.bf16 %v1550
        %v1695 = vunpack.c.l.bf16 %v1551
        %v1696 = vunpack.c.l.bf16 %v1552
        %v1697 = vunpack.c.l.bf16 %v1553
        %v1698 = vunpack.c.l.bf16 %v1554
        %v1699 = vunpack.c.l.bf16 %v1555
        %v1700 = vunpack.c.l.bf16 %v1556
        %v1701 = vunpack.c.l.bf16 %v1557
        %v1702 = vunpack.c.l.bf16 %v1558
        %v1703 = vunpack.c.l.bf16 %v1559
        %v1704 = vunpack.c.l.bf16 %v1560
        %v1705 = vunpack.c.l.bf16 %v1561
        %v1706 = vunpack.c.l.bf16 %v1562
        %v1707 = vunpack.c.l.bf16 %v1563
        %v1708 = vunpack.c.l.bf16 %v1564
        %v1709 = vunpack.c.l.bf16 %v1565
        %v1710 = vunpack.c.l.bf16 %v1566
        %v1711 = vunpack.c.l.bf16 %v1567
        %v1712 = vunpack.c.l.bf16 %v1568
        %v1713 = vunpack.c.l.bf16 %v1569
        %v1714 = vunpack.c.l.bf16 %v1570
        %v1715 = vunpack.c.l.bf16 %v1571
        %v1716 = vunpack.c.l.bf16 %v1572
        %v1717 = vunpack.c.l.bf16 %v1573
        %v1718 = vunpack.c.l.bf16 %v1574
        %v1719 = vunpack.c.l.bf16 %v1575
        %v1720 = vunpack.c.l.bf16 %v1576
        %v1721 = vunpack.c.l.bf16 %v1577
        %v1722 = vunpack.c.l.bf16 %v1578
        %v1723 = vunpack.c.l.bf16 %v1579
        %v1724 = vunpack.c.l.bf16 %v1580
        %v1725 = vunpack.c.l.bf16 %v1581
        %v1726 = vunpack.c.l.bf16 %v1582
        %v1727 = vunpack.c.l.bf16 %v1583
        %v1728 = vunpack.c.l.bf16 %v1584
        %v1729 = vunpack.c.l.bf16 %v1585
        %v1730 = vunpack.c.l.bf16 %v1586
        %v1731 = vunpack.c.l.bf16 %v1587
        %v1732 = vunpack.c.l.bf16 %v1588
        %v1733 = vunpack.c.l.bf16 %v1589
        %v1734 = vunpack.c.l.bf16 %v1590
        %v1735 = vunpack.c.l.bf16 %v1591
        %v1736 = vunpack.c.l.bf16 %v1592
        %v1737 = vunpack.c.l.bf16 %v1593
        %v1738 = vunpack.c.l.bf16 %v1594
        %v1739 = vunpack.c.l.bf16 %v1595
        %v1740 = vunpack.c.l.bf16 %v1596
        %v1741 = vunpack.c.l.bf16 %v1597
        %v1742 = vunpack.c.l.bf16 %v1598
        %v1743 = vunpack.c.l.bf16 %v1599
        %v1744 = vunpack.c.l.bf16 %v1600
        %v1745 = vunpack.c.l.bf16 %v1601
        %v1746 = vunpack.c.l.bf16 %v1602
        %v1747 = vunpack.c.l.bf16 %v1603
        %v1748 = vunpack.c.l.bf16 %v1604
        %v1749 = vunpack.c.l.bf16 %v1605
        %v1750 = vunpack.c.l.bf16 %v1606
        %v1751 = vunpack.c.l.bf16 %v1607
        %v1752 = vunpack.c.l.bf16 %v1608
        %v1753 = vunpack.c.l.bf16 %v1609
        %v1754 = vunpack.c.l.bf16 %v1610
        %v1755 = vunpack.c.l.bf16 %v1611
        %v1756 = vunpack.c.l.bf16 %v1612
        %v1757 = vunpack.c.l.bf16 %v1613
        %v1758 = vunpack.c.l.bf16 %v1614
        %v1759 = vunpack.c.l.bf16 %v1615
        %v1760 = vunpack.c.l.bf16 %v1616
        %v1761 = vunpack.c.l.bf16 %v1617
        %v1762 = vunpack.c.l.bf16 %v1618
        %v1763 = vunpack.c.l.bf16 %v1619
        %v1764 = vunpack.c.l.bf16 %v1620
        %v1765 = vld [vmem:[%s4] sm:$0xff]
        %v1766 = vld [vmem:[%s4 + $0x8] sm:$0xff]
        %v1767 = vld [vmem:[%s7] sm:$0xff]
        %v1768 = vld [vmem:[%s7 + $0x8] sm:$0xff]
        %v1769 = vld [vmem:[%s7 + $0x10] sm:$0xff]
        %v1770 = vld [vmem:[%s7 + $0x18] sm:$0xff]
        %v1771 = vld [vmem:[%s7 + $0x20] sm:$0xff]
        %v1772 = vld [vmem:[%s7 + $0x28] sm:$0xff]
        %v1773 = vld [vmem:[%s7 + $0x30] sm:$0xff]
        %v1774 = vld [vmem:[%s7 + $0x38] sm:$0xff]
        %v1775 = vld [vmem:[%s9] sm:$0xff]
        %v1776 = vld [vmem:[%s9 + $0x8] sm:$0xff]
        %v1777 = vld [vmem:[%s9 + $0x10] sm:$0xff]
        %v1778 = vld [vmem:[%s9 + $0x18] sm:$0xff]
        %v1779 = vld [vmem:[%s9 + $0x20] sm:$0xff]
        %v1780 = vld [vmem:[%s9 + $0x28] sm:$0xff]
        %v1781 = vld [vmem:[%s9 + $0x30] sm:$0xff]
        %v1782 = vld [vmem:[%s9 + $0x38] sm:$0xff]
        %1783 = vmatprep.subr.mxu0 0.0
        %1784 = vmatpush1.msra.mxu0 %v1045
        %1785 = vmatprep.subr.mxu0 0.0
        %1786 = vmatpush1.msra.mxu0 %v1046
        %1787 = vmatprep.subr.mxu0 0.0
        %1788 = vmatpush1.msra.mxu0 %v1047
        %1789 = vmatprep.subr.mxu0 0.0
        %1790 = vmatpush1.msra.mxu0 %v1048
        %1791 = vmatprep.subr.mxu0 0.0
        %1792 = vmatpush1.msra.mxu0 %v1049
        %1793 = vmatprep.subr.mxu0 0.0
        %1794 = vmatpush1.msra.mxu0 %v1050
        %1795 = vmatprep.subr.mxu0 0.0
        %1796 = vmatpush1.msra.mxu0 %v1051
        %1797 = vmatprep.subr.mxu0 0.0
        %1798 = vmatpush1.msra.mxu0 %v1052
        %1799 = vmatprep.subr.mxu0 0.0
        %1800 = vmatpush1.msra.mxu0 %v1053
        %1801 = vmatprep.subr.mxu0 0.0
        %1802 = vmatpush1.msra.mxu0 %v1054
        %1803 = vmatprep.subr.mxu0 0.0
        %1804 = vmatpush1.msra.mxu0 %v1055
        %1805 = vmatprep.subr.mxu0 0.0
        %1806 = vmatpush1.msra.mxu0 %v1056
        %1807 = vmatprep.subr.mxu0 0.0
        %1808 = vmatpush1.msra.mxu0 %v1057
        %1809 = vmatprep.subr.mxu0 0.0
        %1810 = vmatpush1.msra.mxu0 %v1058
        %1811 = vmatprep.subr.mxu0 0.0
        %1812 = vmatpush1.msra.mxu0 %v1059
        %1813 = vmatprep.subr.mxu0 0.0
        %1814 = vmatpush1.msra.mxu0 %v1060
        %1815 = vmatprep.subr.mxu0 0.0
        %1816 = vmatpush1.msra.mxu0 %v1061
        %1817 = vmatprep.subr.mxu0 0.0
        %1818 = vmatpush1.msra.mxu0 %v1062
        %1819 = vmatprep.subr.mxu0 0.0
        %1820 = vmatpush1.msra.mxu0 %v1063
        %1821 = vmatprep.subr.mxu0 0.0
        %1822 = vmatpush1.msra.mxu0 %v1064
        %1823 = vmatprep.subr.mxu0 0.0
        %1824 = vmatpush1.msra.mxu0 %v1065
        %1825 = vmatprep.subr.mxu0 0.0
        %1826 = vmatpush1.msra.mxu0 %v1066
        %1827 = vmatprep.subr.mxu0 0.0
        %1828 = vmatpush1.msra.mxu0 %v1067
        %1829 = vmatprep.subr.mxu0 0.0
        %1830 = vmatpush1.msra.mxu0 %v1068
        %1831 = vmatprep.subr.mxu0 0.0
        %1832 = vmatpush1.msra.mxu0 %v1069
        %1833 = vmatprep.subr.mxu0 0.0
        %1834 = vmatpush1.msra.mxu0 %v1070
        %1835 = vmatprep.subr.mxu0 0.0
        %1836 = vmatpush1.msra.mxu0 %v1071
        %1837 = vmatprep.subr.mxu0 0.0
        %1838 = vmatpush1.msra.mxu0 %v1072
        %1839 = vmatprep.subr.mxu0 0.0
        %1840 = vmatpush1.msra.mxu0 %v1073
        %1841 = vmatprep.subr.mxu0 0.0
        %1842 = vmatpush1.msra.mxu0 %v1074
        %1843 = vmatprep.subr.mxu0 0.0
        %1844 = vmatpush1.msra.mxu0 %v1075
        %1845 = vmatprep.subr.mxu0 0.0
        %1846 = vmatpush1.msra.mxu0 %v1076
        %1847 = vmatprep.mubr.f32.mxu0 %v611
        %1848 = vmatmul.mubr.f32.gmra.mrb[0].mxu0 %v610
        %v1849 = vpop.f32.mrb[0].mxu0
        %v1850 = vadd.f32 0.0, %v1849
        %v1851 = vpop.f32.mrb[0].mxu0
        %1852 = vdwg.mxu0
        %1853 = vmatprep.subr.mxu0 0.0
        %1854 = vmatpush1.msra.mxu0 %v1077
        %1855 = vmatprep.subr.mxu0 0.0
        %1856 = vmatpush1.msra.mxu0 %v1078
        %1857 = vmatprep.subr.mxu0 0.0
        %1858 = vmatpush1.msra.mxu0 %v1079
        %1859 = vmatprep.subr.mxu0 0.0
        %1860 = vmatpush1.msra.mxu0 %v1080
        %1861 = vmatprep.subr.mxu0 0.0
        %1862 = vmatpush1.msra.mxu0 %v1081
        %1863 = vmatprep.subr.mxu0 0.0
        %1864 = vmatpush1.msra.mxu0 %v1082
        %1865 = vmatprep.subr.mxu0 0.0
        %1866 = vmatpush1.msra.mxu0 %v1083
        %1867 = vmatprep.subr.mxu0 0.0
        %1868 = vmatpush1.msra.mxu0 %v1084
        %1869 = vmatprep.subr.mxu0 0.0
        %1870 = vmatpush1.msra.mxu0 %v1085
        %1871 = vmatprep.subr.mxu0 0.0
        %1872 = vmatpush1.msra.mxu0 %v1086
        %1873 = vmatprep.subr.mxu0 0.0
        %1874 = vmatpush1.msra.mxu0 %v1087
        %1875 = vmatprep.subr.mxu0 0.0
        %1876 = vmatpush1.msra.mxu0 %v1088
        %1877 = vmatprep.subr.mxu0 0.0
        %1878 = vmatpush1.msra.mxu0 %v1089
        %1879 = vmatprep.subr.mxu0 0.0
        %1880 = vmatpush1.msra.mxu0 %v1090
        %1881 = vmatprep.subr.mxu0 0.0
        %1882 = vmatpush1.msra.mxu0 %v1091
        %1883 = vmatprep.subr.mxu0 0.0
        %1884 = vmatpush1.msra.mxu0 %v1092
        %1885 = vmatprep.subr.mxu0 0.0
        %1886 = vmatpush1.msra.mxu0 0.0
        %1887 = vmatprep.subr.mxu0 0.0
        %1888 = vmatpush1.msra.mxu0 0.0
        %1889 = vmatprep.subr.mxu0 0.0
        %1890 = vmatpush1.msra.mxu0 0.0
        %1891 = vmatprep.subr.mxu0 0.0
        %1892 = vmatpush1.msra.mxu0 0.0
        %1893 = vmatprep.subr.mxu0 0.0
        %1894 = vmatpush1.msra.mxu0 0.0
        %1895 = vmatprep.subr.mxu0 0.0
        %1896 = vmatpush1.msra.mxu0 0.0
        %1897 = vmatprep.subr.mxu0 0.0
        %1898 = vmatpush1.msra.mxu0 0.0
        %1899 = vmatprep.subr.mxu0 0.0
        %1900 = vmatpush1.msra.mxu0 0.0
        %1901 = vmatprep.subr.mxu0 0.0
        %1902 = vmatpush1.msra.mxu0 0.0
        %1903 = vmatprep.subr.mxu0 0.0
        %1904 = vmatpush1.msra.mxu0 0.0
        %1905 = vmatprep.subr.mxu0 0.0
        %1906 = vmatpush1.msra.mxu0 0.0
        %1907 = vmatprep.subr.mxu0 0.0
        %1908 = vmatpush1.msra.mxu0 0.0
        %1909 = vmatprep.subr.mxu0 0.0
        %1910 = vmatpush1.msra.mxu0 0.0
        %1911 = vmatprep.subr.mxu0 0.0
        %1912 = vmatpush1.msra.mxu0 0.0
        %1913 = vmatprep.subr.mxu0 0.0
        %1914 = vmatpush1.msra.mxu0 0.0
        %1915 = vmatprep.subr.mxu0 0.0
        %1916 = vmatpush1.msra.mxu0 0.0
        %1917 = vmatprep.mubr.f32.mxu0 0.0
        %1918 = vmatmul.mubr.f32.gmra.mrb[0].mxu0 %v612
        %v1919 = vpop.f32.mrb[0].mxu0
        %v1920 = vadd.f32 %v1850, %v1919
        %v1921 = vpop.f32.mrb[0].mxu0
        %1922 = vdwg.mxu0
        %1923 = vmatprep.subr.mxu0 0.0
        %1924 = vmatpush1.msra.mxu0 %v1093
        %1925 = vmatprep.subr.mxu0 0.0
        %1926 = vmatpush1.msra.mxu0 %v1094
        %1927 = vmatprep.subr.mxu0 0.0
        %1928 = vmatpush1.msra.mxu0 %v1095
        %1929 = vmatprep.subr.mxu0 0.0
        %1930 = vmatpush1.msra.mxu0 %v1096
        %1931 = vmatprep.subr.mxu0 0.0
        %1932 = vmatpush1.msra.mxu0 %v1097
        %1933 = vmatprep.subr.mxu0 0.0
        %1934 = vmatpush1.msra.mxu0 %v1098
        %1935 = vmatprep.subr.mxu0 0.0
        %1936 = vmatpush1.msra.mxu0 %v1099
        %1937 = vmatprep.subr.mxu0 0.0
        %1938 = vmatpush1.msra.mxu0 %v1100
        %1939 = vmatprep.subr.mxu0 0.0
        %1940 = vmatpush1.msra.mxu0 %v1101
        %1941 = vmatprep.subr.mxu0 0.0
        %1942 = vmatpush1.msra.mxu0 %v1102
        %1943 = vmatprep.subr.mxu0 0.0
        %1944 = vmatpush1.msra.mxu0 %v1103
        %1945 = vmatprep.subr.mxu0 0.0
        %1946 = vmatpush1.msra.mxu0 %v1104
        %1947 = vmatprep.subr.mxu0 0.0
        %1948 = vmatpush1.msra.mxu0 %v1105
        %1949 = vmatprep.subr.mxu0 0.0
        %1950 = vmatpush1.msra.mxu0 %v1106
        %1951 = vmatprep.subr.mxu0 0.0
        %1952 = vmatpush1.msra.mxu0 %v1107
        %1953 = vmatprep.subr.mxu0 0.0
        %1954 = vmatpush1.msra.mxu0 %v1108
        %1955 = vmatprep.subr.mxu0 0.0
        %1956 = vmatpush1.msra.mxu0 %v1109
        %1957 = vmatprep.subr.mxu0 0.0
        %1958 = vmatpush1.msra.mxu0 %v1110
        %1959 = vmatprep.subr.mxu0 0.0
        %1960 = vmatpush1.msra.mxu0 %v1111
        %1961 = vmatprep.subr.mxu0 0.0
        %1962 = vmatpush1.msra.mxu0 %v1112
        %1963 = vmatprep.subr.mxu0 0.0
        %1964 = vmatpush1.msra.mxu0 %v1113
        %1965 = vmatprep.subr.mxu0 0.0
        %1966 = vmatpush1.msra.mxu0 %v1114
        %1967 = vmatprep.subr.mxu0 0.0
        %1968 = vmatpush1.msra.mxu0 %v1115
        %1969 = vmatprep.subr.mxu0 0.0
        %1970 = vmatpush1.msra.mxu0 %v1116
        %1971 = vmatprep.subr.mxu0 0.0
        %1972 = vmatpush1.msra.mxu0 %v1117
        %1973 = vmatprep.subr.mxu0 0.0
        %1974 = vmatpush1.msra.mxu0 %v1118
        %1975 = vmatprep.subr.mxu0 0.0
        %1976 = vmatpush1.msra.mxu0 %v1119
        %1977 = vmatprep.subr.mxu0 0.0
        %1978 = vmatpush1.msra.mxu0 %v1120
        %1979 = vmatprep.subr.mxu0 0.0
        %1980 = vmatpush1.msra.mxu0 %v1121
        %1981 = vmatprep.subr.mxu0 0.0
        %1982 = vmatpush1.msra.mxu0 %v1122
        %1983 = vmatprep.subr.mxu0 0.0
        %1984 = vmatpush1.msra.mxu0 %v1123
        %1985 = vmatprep.subr.mxu0 0.0
        %1986 = vmatpush1.msra.mxu0 %v1124
        %1987 = vmatprep.mubr.f32.mxu0 %v611
        %1988 = vmatmul.mubr.f32.gmra.mrb[0].mxu0 %v610
        %v1989 = vpop.f32.mrb[0].mxu0
        %v1990 = vadd.f32 0.0, %v1989
        %v1991 = vpop.f32.mrb[0].mxu0
        %1992 = vdwg.mxu0
        %1993 = vmatprep.subr.mxu0 0.0
        %1994 = vmatpush1.msra.mxu0 %v1125
        %1995 = vmatprep.subr.mxu0 0.0
        %1996 = vmatpush1.msra.mxu0 %v1126
        %1997 = vmatprep.subr.mxu0 0.0
        %1998 = vmatpush1.msra.mxu0 %v1127
        %1999 = vmatprep.subr.mxu0 0.0
        %2000 = vmatpush1.msra.mxu0 %v1128
        %2001 = vmatprep.subr.mxu0 0.0
        %2002 = vmatpush1.msra.mxu0 %v1129
        %2003 = vmatprep.subr.mxu0 0.0
        %2004 = vmatpush1.msra.mxu0 %v1130
        %2005 = vmatprep.subr.mxu0 0.0
        %2006 = vmatpush1.msra.mxu0 %v1131
        %2007 = vmatprep.subr.mxu0 0.0
        %2008 = vmatpush1.msra.mxu0 %v1132
        %2009 = vmatprep.subr.mxu0 0.0
        %2010 = vmatpush1.msra.mxu0 %v1133
        %2011 = vmatprep.subr.mxu0 0.0
        %2012 = vmatpush1.msra.mxu0 %v1134
        %2013 = vmatprep.subr.mxu0 0.0
        %2014 = vmatpush1.msra.mxu0 %v1135
        %2015 = vmatprep.subr.mxu0 0.0
        %2016 = vmatpush1.msra.mxu0 %v1136
        %2017 = vmatprep.subr.mxu0 0.0
        %2018 = vmatpush1.msra.mxu0 %v1137
        %2019 = vmatprep.subr.mxu0 0.0
        %2020 = vmatpush1.msra.mxu0 %v1138
        %2021 = vmatprep.subr.mxu0 0.0
        %2022 = vmatpush1.msra.mxu0 %v1139
        %2023 = vmatprep.subr.mxu0 0.0
        %2024 = vmatpush1.msra.mxu0 %v1140
        %2025 = vmatprep.subr.mxu0 0.0
        %2026 = vmatpush1.msra.mxu0 0.0
        %2027 = vmatprep.subr.mxu0 0.0
        %2028 = vmatpush1.msra.mxu0 0.0
        %2029 = vmatprep.subr.mxu0 0.0
        %2030 = vmatpush1.msra.mxu0 0.0
        %2031 = vmatprep.subr.mxu0 0.0
        %2032 = vmatpush1.msra.mxu0 0.0
        %2033 = vmatprep.subr.mxu0 0.0
        %2034 = vmatpush1.msra.mxu0 0.0
        %2035 = vmatprep.subr.mxu0 0.0
        %2036 = vmatpush1.msra.mxu0 0.0
        %2037 = vmatprep.subr.mxu0 0.0
        %2038 = vmatpush1.msra.mxu0 0.0
        %2039 = vmatprep.subr.mxu0 0.0
        %2040 = vmatpush1.msra.mxu0 0.0
        %2041 = vmatprep.subr.mxu0 0.0
        %2042 = vmatpush1.msra.mxu0 0.0
        %2043 = vmatprep.subr.mxu0 0.0
        %2044 = vmatpush1.msra.mxu0 0.0
        %2045 = vmatprep.subr.mxu0 0.0
        %2046 = vmatpush1.msra.mxu0 0.0
        %2047 = vmatprep.subr.mxu0 0.0
        %2048 = vmatpush1.msra.mxu0 0.0
        %2049 = vmatprep.subr.mxu0 0.0
        %2050 = vmatpush1.msra.mxu0 0.0
        %2051 = vmatprep.subr.mxu0 0.0
        %2052 = vmatpush1.msra.mxu0 0.0
        %2053 = vmatprep.subr.mxu0 0.0
        %2054 = vmatpush1.msra.mxu0 0.0
        %2055 = vmatprep.subr.mxu0 0.0
        %2056 = vmatpush1.msra.mxu0 0.0
        %2057 = vmatprep.mubr.f32.mxu0 0.0
        %2058 = vmatmul.mubr.f32.gmra.mrb[0].mxu0 %v612
        %v2059 = vpop.f32.mrb[0].mxu0
        %v2060 = vadd.f32 %v1990, %v2059
        %v2061 = vpop.f32.mrb[0].mxu0
        %2062 = vdwg.mxu0
        %2063 = vmatprep.subr.mxu0 0.0
        %2064 = vmatpush1.msra.mxu0 %v1141
        %2065 = vmatprep.subr.mxu0 0.0
        %2066 = vmatpush1.msra.mxu0 %v1142
        %2067 = vmatprep.subr.mxu0 0.0
        %2068 = vmatpush1.msra.mxu0 %v1143
        %2069 = vmatprep.subr.mxu0 0.0
        %2070 = vmatpush1.msra.mxu0 %v1144
        %2071 = vmatprep.subr.mxu0 0.0
        %2072 = vmatpush1.msra.mxu0 %v1145
        %2073 = vmatprep.subr.mxu0 0.0
        %2074 = vmatpush1.msra.mxu0 %v1146
        %2075 = vmatprep.subr.mxu0 0.0
        %2076 = vmatpush1.msra.mxu0 %v1147
        %2077 = vmatprep.subr.mxu0 0.0
        %2078 = vmatpush1.msra.mxu0 %v1148
        %2079 = vmatprep.subr.mxu0 0.0
        %2080 = vmatpush1.msra.mxu0 %v1149
        %2081 = vmatprep.subr.mxu0 0.0
        %2082 = vmatpush1.msra.mxu0 %v1150
        %2083 = vmatprep.subr.mxu0 0.0
        %2084 = vmatpush1.msra.mxu0 %v1151
        %2085 = vmatprep.subr.mxu0 0.0
        %2086 = vmatpush1.msra.mxu0 %v1152
        %2087 = vmatprep.subr.mxu0 0.0
        %2088 = vmatpush1.msra.mxu0 %v1153
        %2089 = vmatprep.subr.mxu0 0.0
        %2090 = vmatpush1.msra.mxu0 %v1154
        %2091 = vmatprep.subr.mxu0 0.0
        %2092 = vmatpush1.msra.mxu0 %v1155
        %2093 = vmatprep.subr.mxu0 0.0
        %2094 = vmatpush1.msra.mxu0 %v1156
        %2095 = vmatprep.subr.mxu0 0.0
        %2096 = vmatpush1.msra.mxu0 %v1157
        %2097 = vmatprep.subr.mxu0 0.0
        %2098 = vmatpush1.msra.mxu0 %v1158
        %2099 = vmatprep.subr.mxu0 0.0
        %2100 = vmatpush1.msra.mxu0 %v1159
        %2101 = vmatprep.subr.mxu0 0.0
        %2102 = vmatpush1.msra.mxu0 %v1160
        %2103 = vmatprep.subr.mxu0 0.0
        %2104 = vmatpush1.msra.mxu0 %v1161
        %2105 = vmatprep.subr.mxu0 0.0
        %2106 = vmatpush1.msra.mxu0 %v1162
        %2107 = vmatprep.subr.mxu0 0.0
        %2108 = vmatpush1.msra.mxu0 %v1163
        %2109 = vmatprep.subr.mxu0 0.0
        %2110 = vmatpush1.msra.mxu0 %v1164
        %2111 = vmatprep.subr.mxu0 0.0
        %2112 = vmatpush1.msra.mxu0 %v1165
        %2113 = vmatprep.subr.mxu0 0.0
        %2114 = vmatpush1.msra.mxu0 %v1166
        %2115 = vmatprep.subr.mxu0 0.0
        %2116 = vmatpush1.msra.mxu0 %v1167
        %2117 = vmatprep.subr.mxu0 0.0
        %2118 = vmatpush1.msra.mxu0 %v1168
        %2119 = vmatprep.subr.mxu0 0.0
        %2120 = vmatpush1.msra.mxu0 %v1169
        %2121 = vmatprep.subr.mxu0 0.0
        %2122 = vmatpush1.msra.mxu0 %v1170
        %2123 = vmatprep.subr.mxu0 0.0
        %2124 = vmatpush1.msra.mxu0 %v1171
        %2125 = vmatprep.subr.mxu0 0.0
        %2126 = vmatpush1.msra.mxu0 %v1172
        %2127 = vmatprep.mubr.f32.mxu0 %v611
        %2128 = vmatmul.mubr.f32.gmra.mrb[0].mxu0 %v610
        %v2129 = vpop.f32.mrb[0].mxu0
        %v2130 = vadd.f32 0.0, %v2129
        %v2131 = vpop.f32.mrb[0].mxu0
        %2132 = vdwg.mxu0
        %2133 = vmatprep.subr.mxu0 0.0
        %2134 = vmatpush1.msra.mxu0 %v1173
        %2135 = vmatprep.subr.mxu0 0.0
        %2136 = vmatpush1.msra.mxu0 %v1174
        %2137 = vmatprep.subr.mxu0 0.0
        %2138 = vmatpush1.msra.mxu0 %v1175
        %2139 = vmatprep.subr.mxu0 0.0
        %2140 = vmatpush1.msra.mxu0 %v1176
        %2141 = vmatprep.subr.mxu0 0.0
        %2142 = vmatpush1.msra.mxu0 %v1177
        %2143 = vmatprep.subr.mxu0 0.0
        %2144 = vmatpush1.msra.mxu0 %v1178
        %2145 = vmatprep.subr.mxu0 0.0
        %2146 = vmatpush1.msra.mxu0 %v1179
        %2147 = vmatprep.subr.mxu0 0.0
        %2148 = vmatpush1.msra.mxu0 %v1180
        %2149 = vmatprep.subr.mxu0 0.0
        %2150 = vmatpush1.msra.mxu0 %v1181
        %2151 = vmatprep.subr.mxu0 0.0
        %2152 = vmatpush1.msra.mxu0 %v1182
        %2153 = vmatprep.subr.mxu0 0.0
        %2154 = vmatpush1.msra.mxu0 %v1183
        %2155 = vmatprep.subr.mxu0 0.0
        %2156 = vmatpush1.msra.mxu0 %v1184
        %2157 = vmatprep.subr.mxu0 0.0
        %2158 = vmatpush1.msra.mxu0 %v1185
        %2159 = vmatprep.subr.mxu0 0.0
        %2160 = vmatpush1.msra.mxu0 %v1186
        %2161 = vmatprep.subr.mxu0 0.0
        %2162 = vmatpush1.msra.mxu0 %v1187
        %2163 = vmatprep.subr.mxu0 0.0
        %2164 = vmatpush1.msra.mxu0 %v1188
        %2165 = vmatprep.subr.mxu0 0.0
        %2166 = vmatpush1.msra.mxu0 0.0
        %2167 = vmatprep.subr.mxu0 0.0
        %2168 = vmatpush1.msra.mxu0 0.0
        %2169 = vmatprep.subr.mxu0 0.0
        %2170 = vmatpush1.msra.mxu0 0.0
        %2171 = vmatprep.subr.mxu0 0.0
        %2172 = vmatpush1.msra.mxu0 0.0
        %2173 = vmatprep.subr.mxu0 0.0
        %2174 = vmatpush1.msra.mxu0 0.0
        %2175 = vmatprep.subr.mxu0 0.0
        %2176 = vmatpush1.msra.mxu0 0.0
        %2177 = vmatprep.subr.mxu0 0.0
        %2178 = vmatpush1.msra.mxu0 0.0
        %2179 = vmatprep.subr.mxu0 0.0
        %2180 = vmatpush1.msra.mxu0 0.0
        %2181 = vmatprep.subr.mxu0 0.0
        %2182 = vmatpush1.msra.mxu0 0.0
        %2183 = vmatprep.subr.mxu0 0.0
        %2184 = vmatpush1.msra.mxu0 0.0
        %2185 = vmatprep.subr.mxu0 0.0
        %2186 = vmatpush1.msra.mxu0 0.0
        %2187 = vmatprep.subr.mxu0 0.0
        %2188 = vmatpush1.msra.mxu0 0.0
        %2189 = vmatprep.subr.mxu0 0.0
        %2190 = vmatpush1.msra.mxu0 0.0
        %2191 = vmatprep.subr.mxu0 0.0
        %2192 = vmatpush1.msra.mxu0 0.0
        %2193 = vmatprep.subr.mxu0 0.0
        %2194 = vmatpush1.msra.mxu0 0.0
        %2195 = vmatprep.subr.mxu0 0.0
        %2196 = vmatpush1.msra.mxu0 0.0
        %2197 = vmatprep.mubr.f32.mxu0 0.0
        %2198 = vmatmul.mubr.f32.gmra.mrb[0].mxu0 %v612
        %v2199 = vpop.f32.mrb[0].mxu0
        %v2200 = vadd.f32 %v2130, %v2199
        %v2201 = vpop.f32.mrb[0].mxu0
        %2202 = vdwg.mxu0
        %2203 = vmatprep.subr.mxu0 0.0
        %2204 = vmatpush1.msra.mxu0 %v1189
        %2205 = vmatprep.subr.mxu0 0.0
        %2206 = vmatpush1.msra.mxu0 %v1190
        %2207 = vmatprep.subr.mxu0 0.0
        %2208 = vmatpush1.msra.mxu0 %v1191
        %2209 = vmatprep.subr.mxu0 0.0
        %2210 = vmatpush1.msra.mxu0 %v1192
        %2211 = vmatprep.subr.mxu0 0.0
        %2212 = vmatpush1.msra.mxu0 %v1193
        %2213 = vmatprep.subr.mxu0 0.0
        %2214 = vmatpush1.msra.mxu0 %v1194
        %2215 = vmatprep.subr.mxu0 0.0
        %2216 = vmatpush1.msra.mxu0 %v1195
        %2217 = vmatprep.subr.mxu0 0.0
        %2218 = vmatpush1.msra.mxu0 %v1196
        %2219 = vmatprep.subr.mxu0 0.0
        %2220 = vmatpush1.msra.mxu0 %v1197
        %2221 = vmatprep.subr.mxu0 0.0
        %2222 = vmatpush1.msra.mxu0 %v1198
        %2223 = vmatprep.subr.mxu0 0.0
        %2224 = vmatpush1.msra.mxu0 %v1199
        %2225 = vmatprep.subr.mxu0 0.0
        %2226 = vmatpush1.msra.mxu0 %v1200
        %2227 = vmatprep.subr.mxu0 0.0
        %2228 = vmatpush1.msra.mxu0 %v1201
        %2229 = vmatprep.subr.mxu0 0.0
        %2230 = vmatpush1.msra.mxu0 %v1202
        %2231 = vmatprep.subr.mxu0 0.0
        %2232 = vmatpush1.msra.mxu0 %v1203
        %2233 = vmatprep.subr.mxu0 0.0
        %2234 = vmatpush1.msra.mxu0 %v1204
        %2235 = vmatprep.subr.mxu0 0.0
        %2236 = vmatpush1.msra.mxu0 %v1205
        %2237 = vmatprep.subr.mxu0 0.0
        %2238 = vmatpush1.msra.mxu0 %v1206
        %2239 = vmatprep.subr.mxu0 0.0
        %2240 = vmatpush1.msra.mxu0 %v1207
        %2241 = vmatprep.subr.mxu0 0.0
        %2242 = vmatpush1.msra.mxu0 %v1208
        %2243 = vmatprep.subr.mxu0 0.0
        %2244 = vmatpush1.msra.mxu0 %v1209
        %2245 = vmatprep.subr.mxu0 0.0
        %2246 = vmatpush1.msra.mxu0 %v1210
        %2247 = vmatprep.subr.mxu0 0.0
        %2248 = vmatpush1.msra.mxu0 %v1211
        %2249 = vmatprep.subr.mxu0 0.0
        %2250 = vmatpush1.msra.mxu0 %v1212
        %2251 = vmatprep.subr.mxu0 0.0
        %2252 = vmatpush1.msra.mxu0 %v1213
        %2253 = vmatprep.subr.mxu0 0.0
        %2254 = vmatpush1.msra.mxu0 %v1214
        %2255 = vmatprep.subr.mxu0 0.0
        %2256 = vmatpush1.msra.mxu0 %v1215
        %2257 = vmatprep.subr.mxu0 0.0
        %2258 = vmatpush1.msra.mxu0 %v1216
        %2259 = vmatprep.subr.mxu0 0.0
        %2260 = vmatpush1.msra.mxu0 %v1217
        %2261 = vmatprep.subr.mxu0 0.0
        %2262 = vmatpush1.msra.mxu0 %v1218
        %2263 = vmatprep.subr.mxu0 0.0
        %2264 = vmatpush1.msra.mxu0 %v1219
        %2265 = vmatprep.subr.mxu0 0.0
        %2266 = vmatpush1.msra.mxu0 %v1220
        %2267 = vmatprep.mubr.f32.mxu0 %v611
        %2268 = vmatmul.mubr.f32.gmra.mrb[0].mxu0 %v610
        %v2269 = vpop.f32.mrb[0].mxu0
        %v2270 = vadd.f32 0.0, %v2269
        %v2271 = vpop.f32.mrb[0].mxu0
        %2272 = vdwg.mxu0
        %2273 = vmatprep.subr.mxu0 0.0
        %2274 = vmatpush1.msra.mxu0 %v1221
        %2275 = vmatprep.subr.mxu0 0.0
        %2276 = vmatpush1.msra.mxu0 %v1222
        %2277 = vmatprep.subr.mxu0 0.0
        %2278 = vmatpush1.msra.mxu0 %v1223
        %2279 = vmatprep.subr.mxu0 0.0
        %2280 = vmatpush1.msra.mxu0 %v1224
        %2281 = vmatprep.subr.mxu0 0.0
        %2282 = vmatpush1.msra.mxu0 %v1225
        %2283 = vmatprep.subr.mxu0 0.0
        %2284 = vmatpush1.msra.mxu0 %v1226
        %2285 = vmatprep.subr.mxu0 0.0
        %2286 = vmatpush1.msra.mxu0 %v1227
        %2287 = vmatprep.subr.mxu0 0.0
        %2288 = vmatpush1.msra.mxu0 %v1228
        %2289 = vmatprep.subr.mxu0 0.0
        %2290 = vmatpush1.msra.mxu0 %v1229
        %2291 = vmatprep.subr.mxu0 0.0
        %2292 = vmatpush1.msra.mxu0 %v1230
        %2293 = vmatprep.subr.mxu0 0.0
        %2294 = vmatpush1.msra.mxu0 %v1231
        %2295 = vmatprep.subr.mxu0 0.0
        %2296 = vmatpush1.msra.mxu0 %v1232
        %2297 = vmatprep.subr.mxu0 0.0
        %2298 = vmatpush1.msra.mxu0 %v1233
        %2299 = vmatprep.subr.mxu0 0.0
        %2300 = vmatpush1.msra.mxu0 %v1234
        %2301 = vmatprep.subr.mxu0 0.0
        %2302 = vmatpush1.msra.mxu0 %v1235
        %2303 = vmatprep.subr.mxu0 0.0
        %2304 = vmatpush1.msra.mxu0 %v1236
        %2305 = vmatprep.subr.mxu0 0.0
        %2306 = vmatpush1.msra.mxu0 0.0
        %2307 = vmatprep.subr.mxu0 0.0
        %2308 = vmatpush1.msra.mxu0 0.0
        %2309 = vmatprep.subr.mxu0 0.0
        %2310 = vmatpush1.msra.mxu0 0.0
        %2311 = vmatprep.subr.mxu0 0.0
        %2312 = vmatpush1.msra.mxu0 0.0
        %2313 = vmatprep.subr.mxu0 0.0
        %2314 = vmatpush1.msra.mxu0 0.0
        %2315 = vmatprep.subr.mxu0 0.0
        %2316 = vmatpush1.msra.mxu0 0.0
        %2317 = vmatprep.subr.mxu0 0.0
        %2318 = vmatpush1.msra.mxu0 0.0
        %2319 = vmatprep.subr.mxu0 0.0
        %2320 = vmatpush1.msra.mxu0 0.0
        %2321 = vmatprep.subr.mxu0 0.0
        %2322 = vmatpush1.msra.mxu0 0.0
        %2323 = vmatprep.subr.mxu0 0.0
        %2324 = vmatpush1.msra.mxu0 0.0
        %2325 = vmatprep.subr.mxu0 0.0
        %2326 = vmatpush1.msra.mxu0 0.0
        %2327 = vmatprep.subr.mxu0 0.0
        %2328 = vmatpush1.msra.mxu0 0.0
        %2329 = vmatprep.subr.mxu0 0.0
        %2330 = vmatpush1.msra.mxu0 0.0
        %2331 = vmatprep.subr.mxu0 0.0
        %2332 = vmatpush1.msra.mxu0 0.0
        %2333 = vmatprep.subr.mxu0 0.0
        %2334 = vmatpush1.msra.mxu0 0.0
        %2335 = vmatprep.subr.mxu0 0.0
        %2336 = vmatpush1.msra.mxu0 0.0
        %2337 = vmatprep.mubr.f32.mxu0 0.0
        %2338 = vmatmul.mubr.f32.gmra.mrb[0].mxu0 %v612
        %v2339 = vpop.f32.mrb[0].mxu0
        %v2340 = vadd.f32 %v2270, %v2339
        %v2341 = vpop.f32.mrb[0].mxu0
        %2342 = vdwg.mxu0
        %2343 = vmatprep.subr.mxu0 0.0
        %2344 = vmatpush1.msra.mxu0 %v1237
        %2345 = vmatprep.subr.mxu0 0.0
        %2346 = vmatpush1.msra.mxu0 %v1238
        %2347 = vmatprep.subr.mxu0 0.0
        %2348 = vmatpush1.msra.mxu0 %v1239
        %2349 = vmatprep.subr.mxu0 0.0
        %2350 = vmatpush1.msra.mxu0 %v1240
        %2351 = vmatprep.subr.mxu0 0.0
        %2352 = vmatpush1.msra.mxu0 %v1241
        %2353 = vmatprep.subr.mxu0 0.0
        %2354 = vmatpush1.msra.mxu0 %v1242
        %2355 = vmatprep.subr.mxu0 0.0
        %2356 = vmatpush1.msra.mxu0 %v1243
        %2357 = vmatprep.subr.mxu0 0.0
        %2358 = vmatpush1.msra.mxu0 %v1244
        %2359 = vmatprep.subr.mxu0 0.0
        %2360 = vmatpush1.msra.mxu0 %v1245
        %2361 = vmatprep.subr.mxu0 0.0
        %2362 = vmatpush1.msra.mxu0 %v1246
        %2363 = vmatprep.subr.mxu0 0.0
        %2364 = vmatpush1.msra.mxu0 %v1247
        %2365 = vmatprep.subr.mxu0 0.0
        %2366 = vmatpush1.msra.mxu0 %v1248
        %2367 = vmatprep.subr.mxu0 0.0
        %2368 = vmatpush1.msra.mxu0 %v1249
        %2369 = vmatprep.subr.mxu0 0.0
        %2370 = vmatpush1.msra.mxu0 %v1250
        %2371 = vmatprep.subr.mxu0 0.0
        %2372 = vmatpush1.msra.mxu0 %v1251
        %2373 = vmatprep.subr.mxu0 0.0
        %2374 = vmatpush1.msra.mxu0 %v1252
        %2375 = vmatprep.subr.mxu0 0.0
        %2376 = vmatpush1.msra.mxu0 %v1253
        %2377 = vmatprep.subr.mxu0 0.0
        %2378 = vmatpush1.msra.mxu0 %v1254
        %2379 = vmatprep.subr.mxu0 0.0
        %2380 = vmatpush1.msra.mxu0 %v1255
        %2381 = vmatprep.subr.mxu0 0.0
        %2382 = vmatpush1.msra.mxu0 %v1256
        %2383 = vmatprep.subr.mxu0 0.0
        %2384 = vmatpush1.msra.mxu0 %v1257
        %2385 = vmatprep.subr.mxu0 0.0
        %2386 = vmatpush1.msra.mxu0 %v1258
        %2387 = vmatprep.subr.mxu0 0.0
        %2388 = vmatpush1.msra.mxu0 %v1259
        %2389 = vmatprep.subr.mxu0 0.0
        %2390 = vmatpush1.msra.mxu0 %v1260
        %2391 = vmatprep.subr.mxu0 0.0
        %2392 = vmatpush1.msra.mxu0 %v1261
        %2393 = vmatprep.subr.mxu0 0.0
        %2394 = vmatpush1.msra.mxu0 %v1262
        %2395 = vmatprep.subr.mxu0 0.0
        %2396 = vmatpush1.msra.mxu0 %v1263
        %2397 = vmatprep.subr.mxu0 0.0
        %2398 = vmatpush1.msra.mxu0 %v1264
        %2399 = vmatprep.subr.mxu0 0.0
        %2400 = vmatpush1.msra.mxu0 %v1265
        %2401 = vmatprep.subr.mxu0 0.0
        %2402 = vmatpush1.msra.mxu0 %v1266
        %2403 = vmatprep.subr.mxu0 0.0
        %2404 = vmatpush1.msra.mxu0 %v1267
        %2405 = vmatprep.subr.mxu0 0.0
        %2406 = vmatpush1.msra.mxu0 %v1268
        %2407 = vmatprep.mubr.f32.mxu0 %v611
        %2408 = vmatmul.mubr.f32.gmra.mrb[0].mxu0 %v610
        %v2409 = vpop.f32.mrb[0].mxu0
        %v2410 = vadd.f32 0.0, %v2409
        %v2411 = vpop.f32.mrb[0].mxu0
        %2412 = vdwg.mxu0
        %2413 = vmatprep.subr.mxu0 0.0
        %2414 = vmatpush1.msra.mxu0 %v1269
        %2415 = vmatprep.subr.mxu0 0.0
        %2416 = vmatpush1.msra.mxu0 %v1270
        %2417 = vmatprep.subr.mxu0 0.0
        %2418 = vmatpush1.msra.mxu0 %v1271
        %2419 = vmatprep.subr.mxu0 0.0
        %2420 = vmatpush1.msra.mxu0 %v1272
        %2421 = vmatprep.subr.mxu0 0.0
        %2422 = vmatpush1.msra.mxu0 %v1273
        %2423 = vmatprep.subr.mxu0 0.0
        %2424 = vmatpush1.msra.mxu0 %v1274
        %2425 = vmatprep.subr.mxu0 0.0
        %2426 = vmatpush1.msra.mxu0 %v1275
        %2427 = vmatprep.subr.mxu0 0.0
        %2428 = vmatpush1.msra.mxu0 %v1276
        %2429 = vmatprep.subr.mxu0 0.0
        %2430 = vmatpush1.msra.mxu0 %v1277
        %2431 = vmatprep.subr.mxu0 0.0
        %2432 = vmatpush1.msra.mxu0 %v1278
        %2433 = vmatprep.subr.mxu0 0.0
        %2434 = vmatpush1.msra.mxu0 %v1279
        %2435 = vmatprep.subr.mxu0 0.0
        %2436 = vmatpush1.msra.mxu0 %v1280
        %2437 = vmatprep.subr.mxu0 0.0
        %2438 = vmatpush1.msra.mxu0 %v1281
        %2439 = vmatprep.subr.mxu0 0.0
        %2440 = vmatpush1.msra.mxu0 %v1282
        %2441 = vmatprep.subr.mxu0 0.0
        %2442 = vmatpush1.msra.mxu0 %v1283
        %2443 = vmatprep.subr.mxu0 0.0
        %2444 = vmatpush1.msra.mxu0 %v1284
        %2445 = vmatprep.subr.mxu0 0.0
        %2446 = vmatpush1.msra.mxu0 0.0
        %2447 = vmatprep.subr.mxu0 0.0
        %2448 = vmatpush1.msra.mxu0 0.0
        %2449 = vmatprep.subr.mxu0 0.0
        %2450 = vmatpush1.msra.mxu0 0.0
        %2451 = vmatprep.subr.mxu0 0.0
        %2452 = vmatpush1.msra.mxu0 0.0
        %2453 = vmatprep.subr.mxu0 0.0
        %2454 = vmatpush1.msra.mxu0 0.0
        %2455 = vmatprep.subr.mxu0 0.0
        %2456 = vmatpush1.msra.mxu0 0.0
        %2457 = vmatprep.subr.mxu0 0.0
        %2458 = vmatpush1.msra.mxu0 0.0
        %2459 = vmatprep.subr.mxu0 0.0
        %2460 = vmatpush1.msra.mxu0 0.0
        %2461 = vmatprep.subr.mxu0 0.0
        %2462 = vmatpush1.msra.mxu0 0.0
        %2463 = vmatprep.subr.mxu0 0.0
        %2464 = vmatpush1.msra.mxu0 0.0
        %2465 = vmatprep.subr.mxu0 0.0
        %2466 = vmatpush1.msra.mxu0 0.0
        %2467 = vmatprep.subr.mxu0 0.0
        %2468 = vmatpush1.msra.mxu0 0.0
        %2469 = vmatprep.subr.mxu0 0.0
        %2470 = vmatpush1.msra.mxu0 0.0
        %2471 = vmatprep.subr.mxu0 0.0
        %2472 = vmatpush1.msra.mxu0 0.0
        %2473 = vmatprep.subr.mxu0 0.0
        %2474 = vmatpush1.msra.mxu0 0.0
        %2475 = vmatprep.subr.mxu0 0.0
        %2476 = vmatpush1.msra.mxu0 0.0
        %2477 = vmatprep.mubr.f32.mxu0 0.0
        %2478 = vmatmul.mubr.f32.gmra.mrb[0].mxu0 %v612
        %v2479 = vpop.f32.mrb[0].mxu0
        %v2480 = vadd.f32 %v2410, %v2479
        %v2481 = vpop.f32.mrb[0].mxu0
        %2482 = vdwg.mxu0
        %2483 = vmatprep.subr.mxu0 0.0
        %2484 = vmatpush1.msra.mxu0 %v1285
        %2485 = vmatprep.subr.mxu0 0.0
        %2486 = vmatpush1.msra.mxu0 %v1286
        %2487 = vmatprep.subr.mxu0 0.0
        %2488 = vmatpush1.msra.mxu0 %v1287
        %2489 = vmatprep.subr.mxu0 0.0
        %2490 = vmatpush1.msra.mxu0 %v1288
        %2491 = vmatprep.subr.mxu0 0.0
        %2492 = vmatpush1.msra.mxu0 %v1289
        %2493 = vmatprep.subr.mxu0 0.0
        %2494 = vmatpush1.msra.mxu0 %v1290
        %2495 = vmatprep.subr.mxu0 0.0
        %2496 = vmatpush1.msra.mxu0 %v1291
        %2497 = vmatprep.subr.mxu0 0.0
        %2498 = vmatpush1.msra.mxu0 %v1292
        %2499 = vmatprep.subr.mxu0 0.0
        %2500 = vmatpush1.msra.mxu0 %v1293
        %2501 = vmatprep.subr.mxu0 0.0
        %2502 = vmatpush1.msra.mxu0 %v1294
        %2503 = vmatprep.subr.mxu0 0.0
        %2504 = vmatpush1.msra.mxu0 %v1295
        %2505 = vmatprep.subr.mxu0 0.0
        %2506 = vmatpush1.msra.mxu0 %v1296
        %2507 = vmatprep.subr.mxu0 0.0
        %2508 = vmatpush1.msra.mxu0 %v1297
        %2509 = vmatprep.subr.mxu0 0.0
        %2510 = vmatpush1.msra.mxu0 %v1298
        %2511 = vmatprep.subr.mxu0 0.0
        %2512 = vmatpush1.msra.mxu0 %v1299
        %2513 = vmatprep.subr.mxu0 0.0
        %2514 = vmatpush1.msra.mxu0 %v1300
        %2515 = vmatprep.subr.mxu0 0.0
        %2516 = vmatpush1.msra.mxu0 %v1301
        %2517 = vmatprep.subr.mxu0 0.0
        %2518 = vmatpush1.msra.mxu0 %v1302
        %2519 = vmatprep.subr.mxu0 0.0
        %2520 = vmatpush1.msra.mxu0 %v1303
        %2521 = vmatprep.subr.mxu0 0.0
        %2522 = vmatpush1.msra.mxu0 %v1304
        %2523 = vmatprep.subr.mxu0 0.0
        %2524 = vmatpush1.msra.mxu0 %v1305
        %2525 = vmatprep.subr.mxu0 0.0
        %2526 = vmatpush1.msra.mxu0 %v1306
        %2527 = vmatprep.subr.mxu0 0.0
        %2528 = vmatpush1.msra.mxu0 %v1307
        %2529 = vmatprep.subr.mxu0 0.0
        %2530 = vmatpush1.msra.mxu0 %v1308
        %2531 = vmatprep.subr.mxu0 0.0
        %2532 = vmatpush1.msra.mxu0 %v1309
        %2533 = vmatprep.subr.mxu0 0.0
        %2534 = vmatpush1.msra.mxu0 %v1310
        %2535 = vmatprep.subr.mxu0 0.0
        %2536 = vmatpush1.msra.mxu0 %v1311
        %2537 = vmatprep.subr.mxu0 0.0
        %2538 = vmatpush1.msra.mxu0 %v1312
        %2539 = vmatprep.subr.mxu0 0.0
        %2540 = vmatpush1.msra.mxu0 %v1313
        %2541 = vmatprep.subr.mxu0 0.0
        %2542 = vmatpush1.msra.mxu0 %v1314
        %2543 = vmatprep.subr.mxu0 0.0
        %2544 = vmatpush1.msra.mxu0 %v1315
        %2545 = vmatprep.subr.mxu0 0.0
        %2546 = vmatpush1.msra.mxu0 %v1316
        %2547 = vmatprep.mubr.f32.mxu0 %v611
        %2548 = vmatmul.mubr.f32.gmra.mrb[0].mxu0 %v610
        %v2549 = vpop.f32.mrb[0].mxu0
        %v2550 = vadd.f32 0.0, %v2549
        %v2551 = vpop.f32.mrb[0].mxu0
        %2552 = vdwg.mxu0
        %2553 = vmatprep.subr.mxu0 0.0
        %2554 = vmatpush1.msra.mxu0 %v1317
        %2555 = vmatprep.subr.mxu0 0.0
        %2556 = vmatpush1.msra.mxu0 %v1318
        %2557 = vmatprep.subr.mxu0 0.0
        %2558 = vmatpush1.msra.mxu0 %v1319
        %2559 = vmatprep.subr.mxu0 0.0
        %2560 = vmatpush1.msra.mxu0 %v1320
        %2561 = vmatprep.subr.mxu0 0.0
        %2562 = vmatpush1.msra.mxu0 %v1321
        %2563 = vmatprep.subr.mxu0 0.0
        %2564 = vmatpush1.msra.mxu0 %v1322
        %2565 = vmatprep.subr.mxu0 0.0
        %2566 = vmatpush1.msra.mxu0 %v1323
        %2567 = vmatprep.subr.mxu0 0.0
        %2568 = vmatpush1.msra.mxu0 %v1324
        %2569 = vmatprep.subr.mxu0 0.0
        %2570 = vmatpush1.msra.mxu0 %v1325
        %2571 = vmatprep.subr.mxu0 0.0
        %2572 = vmatpush1.msra.mxu0 %v1326
        %2573 = vmatprep.subr.mxu0 0.0
        %2574 = vmatpush1.msra.mxu0 %v1327
        %2575 = vmatprep.subr.mxu0 0.0
        %2576 = vmatpush1.msra.mxu0 %v1328
        %2577 = vmatprep.subr.mxu0 0.0
        %2578 = vmatpush1.msra.mxu0 %v1329
        %2579 = vmatprep.subr.mxu0 0.0
        %2580 = vmatpush1.msra.mxu0 %v1330
        %2581 = vmatprep.subr.mxu0 0.0
        %2582 = vmatpush1.msra.mxu0 %v1331
        %2583 = vmatprep.subr.mxu0 0.0
        %2584 = vmatpush1.msra.mxu0 %v1332
        %2585 = vmatprep.subr.mxu0 0.0
        %2586 = vmatpush1.msra.mxu0 0.0
        %2587 = vmatprep.subr.mxu0 0.0
        %2588 = vmatpush1.msra.mxu0 0.0
        %2589 = vmatprep.subr.mxu0 0.0
        %2590 = vmatpush1.msra.mxu0 0.0
        %2591 = vmatprep.subr.mxu0 0.0
        %2592 = vmatpush1.msra.mxu0 0.0
        %2593 = vmatprep.subr.mxu0 0.0
        %2594 = vmatpush1.msra.mxu0 0.0
        %2595 = vmatprep.subr.mxu0 0.0
        %2596 = vmatpush1.msra.mxu0 0.0
        %2597 = vmatprep.subr.mxu0 0.0
        %2598 = vmatpush1.msra.mxu0 0.0
        %2599 = vmatprep.subr.mxu0 0.0
        %2600 = vmatpush1.msra.mxu0 0.0
        %2601 = vmatprep.subr.mxu0 0.0
        %2602 = vmatpush1.msra.mxu0 0.0
        %2603 = vmatprep.subr.mxu0 0.0
        %2604 = vmatpush1.msra.mxu0 0.0
        %2605 = vmatprep.subr.mxu0 0.0
        %2606 = vmatpush1.msra.mxu0 0.0
        %2607 = vmatprep.subr.mxu0 0.0
        %2608 = vmatpush1.msra.mxu0 0.0
        %2609 = vmatprep.subr.mxu0 0.0
        %2610 = vmatpush1.msra.mxu0 0.0
        %2611 = vmatprep.subr.mxu0 0.0
        %2612 = vmatpush1.msra.mxu0 0.0
        %2613 = vmatprep.subr.mxu0 0.0
        %2614 = vmatpush1.msra.mxu0 0.0
        %2615 = vmatprep.subr.mxu0 0.0
        %2616 = vmatpush1.msra.mxu0 0.0
        %2617 = vmatprep.mubr.f32.mxu0 0.0
        %2618 = vmatmul.mubr.f32.gmra.mrb[0].mxu0 %v612
        %v2619 = vpop.f32.mrb[0].mxu0
        %v2620 = vadd.f32 %v2550, %v2619
        %v2621 = vpop.f32.mrb[0].mxu0
        %2622 = vdwg.mxu0
        %2623 = vmatprep.subr.mxu0 0.0
        %2624 = vmatpush1.msra.mxu0 %v1333
        %2625 = vmatprep.subr.mxu0 0.0
        %2626 = vmatpush1.msra.mxu0 %v1334
        %2627 = vmatprep.subr.mxu0 0.0
        %2628 = vmatpush1.msra.mxu0 %v1335
        %2629 = vmatprep.subr.mxu0 0.0
        %2630 = vmatpush1.msra.mxu0 %v1336
        %2631 = vmatprep.subr.mxu0 0.0
        %2632 = vmatpush1.msra.mxu0 %v1337
        %2633 = vmatprep.subr.mxu0 0.0
        %2634 = vmatpush1.msra.mxu0 %v1338
        %2635 = vmatprep.subr.mxu0 0.0
        %2636 = vmatpush1.msra.mxu0 %v1339
        %2637 = vmatprep.subr.mxu0 0.0
        %2638 = vmatpush1.msra.mxu0 %v1340
        %2639 = vmatprep.subr.mxu0 0.0
        %2640 = vmatpush1.msra.mxu0 %v1341
        %2641 = vmatprep.subr.mxu0 0.0
        %2642 = vmatpush1.msra.mxu0 %v1342
        %2643 = vmatprep.subr.mxu0 0.0
        %2644 = vmatpush1.msra.mxu0 %v1343
        %2645 = vmatprep.subr.mxu0 0.0
        %2646 = vmatpush1.msra.mxu0 %v1344
        %2647 = vmatprep.subr.mxu0 0.0
        %2648 = vmatpush1.msra.mxu0 %v1345
        %2649 = vmatprep.subr.mxu0 0.0
        %2650 = vmatpush1.msra.mxu0 %v1346
        %2651 = vmatprep.subr.mxu0 0.0
        %2652 = vmatpush1.msra.mxu0 %v1347
        %2653 = vmatprep.subr.mxu0 0.0
        %2654 = vmatpush1.msra.mxu0 %v1348
        %2655 = vmatprep.subr.mxu0 0.0
        %2656 = vmatpush1.msra.mxu0 %v1349
        %2657 = vmatprep.subr.mxu0 0.0
        %2658 = vmatpush1.msra.mxu0 %v1350
        %2659 = vmatprep.subr.mxu0 0.0
        %2660 = vmatpush1.msra.mxu0 %v1351
        %2661 = vmatprep.subr.mxu0 0.0
        %2662 = vmatpush1.msra.mxu0 %v1352
        %2663 = vmatprep.subr.mxu0 0.0
        %2664 = vmatpush1.msra.mxu0 %v1353
        %2665 = vmatprep.subr.mxu0 0.0
        %2666 = vmatpush1.msra.mxu0 %v1354
        %2667 = vmatprep.subr.mxu0 0.0
        %2668 = vmatpush1.msra.mxu0 %v1355
        %2669 = vmatprep.subr.mxu0 0.0
        %2670 = vmatpush1.msra.mxu0 %v1356
        %2671 = vmatprep.subr.mxu0 0.0
        %2672 = vmatpush1.msra.mxu0 %v1357
        %2673 = vmatprep.subr.mxu0 0.0
        %2674 = vmatpush1.msra.mxu0 %v1358
        %2675 = vmatprep.subr.mxu0 0.0
        %2676 = vmatpush1.msra.mxu0 %v1359
        %2677 = vmatprep.subr.mxu0 0.0
        %2678 = vmatpush1.msra.mxu0 %v1360
        %2679 = vmatprep.subr.mxu0 0.0
        %2680 = vmatpush1.msra.mxu0 %v1361
        %2681 = vmatprep.subr.mxu0 0.0
        %2682 = vmatpush1.msra.mxu0 %v1362
        %2683 = vmatprep.subr.mxu0 0.0
        %2684 = vmatpush1.msra.mxu0 %v1363
        %2685 = vmatprep.subr.mxu0 0.0
        %2686 = vmatpush1.msra.mxu0 %v1364
        %2687 = vmatprep.mubr.f32.mxu0 %v611
        %2688 = vmatmul.mubr.f32.gmra.mrb[0].mxu0 %v610
        %v2689 = vpop.f32.mrb[0].mxu0
        %v2690 = vadd.f32 0.0, %v2689
        %v2691 = vpop.f32.mrb[0].mxu0
        %2692 = vdwg.mxu0
        %2693 = vmatprep.subr.mxu0 0.0
        %2694 = vmatpush1.msra.mxu0 %v1365
        %2695 = vmatprep.subr.mxu0 0.0
        %2696 = vmatpush1.msra.mxu0 %v1366
        %2697 = vmatprep.subr.mxu0 0.0
        %2698 = vmatpush1.msra.mxu0 %v1367
        %2699 = vmatprep.subr.mxu0 0.0
        %2700 = vmatpush1.msra.mxu0 %v1368
        %2701 = vmatprep.subr.mxu0 0.0
        %2702 = vmatpush1.msra.mxu0 %v1369
        %2703 = vmatprep.subr.mxu0 0.0
        %2704 = vmatpush1.msra.mxu0 %v1370
        %2705 = vmatprep.subr.mxu0 0.0
        %2706 = vmatpush1.msra.mxu0 %v1371
        %2707 = vmatprep.subr.mxu0 0.0
        %2708 = vmatpush1.msra.mxu0 %v1372
        %2709 = vmatprep.subr.mxu0 0.0
        %2710 = vmatpush1.msra.mxu0 %v1373
        %2711 = vmatprep.subr.mxu0 0.0
        %2712 = vmatpush1.msra.mxu0 %v1374
        %2713 = vmatprep.subr.mxu0 0.0
        %2714 = vmatpush1.msra.mxu0 %v1375
        %2715 = vmatprep.subr.mxu0 0.0
        %2716 = vmatpush1.msra.mxu0 %v1376
        %2717 = vmatprep.subr.mxu0 0.0
        %2718 = vmatpush1.msra.mxu0 %v1377
        %2719 = vmatprep.subr.mxu0 0.0
        %2720 = vmatpush1.msra.mxu0 %v1378
        %2721 = vmatprep.subr.mxu0 0.0
        %2722 = vmatpush1.msra.mxu0 %v1379
        %2723 = vmatprep.subr.mxu0 0.0
        %2724 = vmatpush1.msra.mxu0 %v1380
        %2725 = vmatprep.subr.mxu0 0.0
        %2726 = vmatpush1.msra.mxu0 0.0
        %2727 = vmatprep.subr.mxu0 0.0
        %2728 = vmatpush1.msra.mxu0 0.0
        %2729 = vmatprep.subr.mxu0 0.0
        %2730 = vmatpush1.msra.mxu0 0.0
        %2731 = vmatprep.subr.mxu0 0.0
        %2732 = vmatpush1.msra.mxu0 0.0
        %2733 = vmatprep.subr.mxu0 0.0
        %2734 = vmatpush1.msra.mxu0 0.0
        %2735 = vmatprep.subr.mxu0 0.0
        %2736 = vmatpush1.msra.mxu0 0.0
        %2737 = vmatprep.subr.mxu0 0.0
        %2738 = vmatpush1.msra.mxu0 0.0
        %2739 = vmatprep.subr.mxu0 0.0
        %2740 = vmatpush1.msra.mxu0 0.0
        %2741 = vmatprep.subr.mxu0 0.0
        %2742 = vmatpush1.msra.mxu0 0.0
        %2743 = vmatprep.subr.mxu0 0.0
        %2744 = vmatpush1.msra.mxu0 0.0
        %2745 = vmatprep.subr.mxu0 0.0
        %2746 = vmatpush1.msra.mxu0 0.0
        %2747 = vmatprep.subr.mxu0 0.0
        %2748 = vmatpush1.msra.mxu0 0.0
        %2749 = vmatprep.subr.mxu0 0.0
        %2750 = vmatpush1.msra.mxu0 0.0
        %2751 = vmatprep.subr.mxu0 0.0
        %2752 = vmatpush1.msra.mxu0 0.0
        %2753 = vmatprep.subr.mxu0 0.0
        %2754 = vmatpush1.msra.mxu0 0.0
        %2755 = vmatprep.subr.mxu0 0.0
        %2756 = vmatpush1.msra.mxu0 0.0
        %2757 = vmatprep.mubr.f32.mxu0 0.0
        %2758 = vmatmul.mubr.f32.gmra.mrb[0].mxu0 %v612
        %v2759 = vpop.f32.mrb[0].mxu0
        %v2760 = vadd.f32 %v2690, %v2759
        %v2761 = vpop.f32.mrb[0].mxu0
        %2762 = vdwg.mxu0
        %2763 = vmatprep.subr.mxu0 0.0
        %2764 = vmatpush1.msra.mxu0 %v1381
        %2765 = vmatprep.subr.mxu0 0.0
        %2766 = vmatpush1.msra.mxu0 %v1382
        %2767 = vmatprep.subr.mxu0 0.0
        %2768 = vmatpush1.msra.mxu0 %v1383
        %2769 = vmatprep.subr.mxu0 0.0
        %2770 = vmatpush1.msra.mxu0 %v1384
        %2771 = vmatprep.subr.mxu0 0.0
        %2772 = vmatpush1.msra.mxu0 %v1385
        %2773 = vmatprep.subr.mxu0 0.0
        %2774 = vmatpush1.msra.mxu0 %v1386
        %2775 = vmatprep.subr.mxu0 0.0
        %2776 = vmatpush1.msra.mxu0 %v1387
        %2777 = vmatprep.subr.mxu0 0.0
        %2778 = vmatpush1.msra.mxu0 %v1388
        %2779 = vmatprep.subr.mxu0 0.0
        %2780 = vmatpush1.msra.mxu0 %v1389
        %2781 = vmatprep.subr.mxu0 0.0
        %2782 = vmatpush1.msra.mxu0 %v1390
        %2783 = vmatprep.subr.mxu0 0.0
        %2784 = vmatpush1.msra.mxu0 %v1391
        %2785 = vmatprep.subr.mxu0 0.0
        %2786 = vmatpush1.msra.mxu0 %v1392
        %2787 = vmatprep.subr.mxu0 0.0
        %2788 = vmatpush1.msra.mxu0 %v1393
        %2789 = vmatprep.subr.mxu0 0.0
        %2790 = vmatpush1.msra.mxu0 %v1394
        %2791 = vmatprep.subr.mxu0 0.0
        %2792 = vmatpush1.msra.mxu0 %v1395
        %2793 = vmatprep.subr.mxu0 0.0
        %2794 = vmatpush1.msra.mxu0 %v1396
        %2795 = vmatprep.subr.mxu0 0.0
        %2796 = vmatpush1.msra.mxu0 %v1397
        %2797 = vmatprep.subr.mxu0 0.0
        %2798 = vmatpush1.msra.mxu0 %v1398
        %2799 = vmatprep.subr.mxu0 0.0
        %2800 = vmatpush1.msra.mxu0 %v1399
        %2801 = vmatprep.subr.mxu0 0.0
        %2802 = vmatpush1.msra.mxu0 %v1400
        %2803 = vmatprep.subr.mxu0 0.0
        %2804 = vmatpush1.msra.mxu0 %v1401
        %2805 = vmatprep.subr.mxu0 0.0
        %2806 = vmatpush1.msra.mxu0 %v1402
        %2807 = vmatprep.subr.mxu0 0.0
        %2808 = vmatpush1.msra.mxu0 %v1403
        %2809 = vmatprep.subr.mxu0 0.0
        %2810 = vmatpush1.msra.mxu0 %v1404
        %2811 = vmatprep.subr.mxu0 0.0
        %2812 = vmatpush1.msra.mxu0 %v1405
        %2813 = vmatprep.subr.mxu0 0.0
        %2814 = vmatpush1.msra.mxu0 %v1406
        %2815 = vmatprep.subr.mxu0 0.0
        %2816 = vmatpush1.msra.mxu0 %v1407
        %2817 = vmatprep.subr.mxu0 0.0
        %2818 = vmatpush1.msra.mxu0 %v1408
        %2819 = vmatprep.subr.mxu0 0.0
        %2820 = vmatpush1.msra.mxu0 %v1409
        %2821 = vmatprep.subr.mxu0 0.0
        %2822 = vmatpush1.msra.mxu0 %v1410
        %2823 = vmatprep.subr.mxu0 0.0
        %2824 = vmatpush1.msra.mxu0 %v1411
        %2825 = vmatprep.subr.mxu0 0.0
        %2826 = vmatpush1.msra.mxu0 %v1412
        %2827 = vmatprep.mubr.f32.mxu0 %v611
        %2828 = vmatmul.mubr.f32.gmra.mrb[0].mxu0 %v610
        %v2829 = vpop.f32.mrb[0].mxu0
        %v2830 = vadd.f32 0.0, %v2829
        %v2831 = vpop.f32.mrb[0].mxu0
        %2832 = vdwg.mxu0
        %2833 = vmatprep.subr.mxu0 0.0
        %2834 = vmatpush1.msra.mxu0 %v1413
        %2835 = vmatprep.subr.mxu0 0.0
        %2836 = vmatpush1.msra.mxu0 %v1414
        %2837 = vmatprep.subr.mxu0 0.0
        %2838 = vmatpush1.msra.mxu0 %v1415
        %2839 = vmatprep.subr.mxu0 0.0
        %2840 = vmatpush1.msra.mxu0 %v1416
        %2841 = vmatprep.subr.mxu0 0.0
        %2842 = vmatpush1.msra.mxu0 %v1417
        %2843 = vmatprep.subr.mxu0 0.0
        %2844 = vmatpush1.msra.mxu0 %v1418
        %2845 = vmatprep.subr.mxu0 0.0
        %2846 = vmatpush1.msra.mxu0 %v1419
        %2847 = vmatprep.subr.mxu0 0.0
        %2848 = vmatpush1.msra.mxu0 %v1420
        %2849 = vmatprep.subr.mxu0 0.0
        %2850 = vmatpush1.msra.mxu0 %v1421
        %2851 = vmatprep.subr.mxu0 0.0
        %2852 = vmatpush1.msra.mxu0 %v1422
        %2853 = vmatprep.subr.mxu0 0.0
        %2854 = vmatpush1.msra.mxu0 %v1423
        %2855 = vmatprep.subr.mxu0 0.0
        %2856 = vmatpush1.msra.mxu0 %v1424
        %2857 = vmatprep.subr.mxu0 0.0
        %2858 = vmatpush1.msra.mxu0 %v1425
        %2859 = vmatprep.subr.mxu0 0.0
        %2860 = vmatpush1.msra.mxu0 %v1426
        %2861 = vmatprep.subr.mxu0 0.0
        %2862 = vmatpush1.msra.mxu0 %v1427
        %2863 = vmatprep.subr.mxu0 0.0
        %2864 = vmatpush1.msra.mxu0 %v1428
        %2865 = vmatprep.subr.mxu0 0.0
        %2866 = vmatpush1.msra.mxu0 0.0
        %2867 = vmatprep.subr.mxu0 0.0
        %2868 = vmatpush1.msra.mxu0 0.0
        %2869 = vmatprep.subr.mxu0 0.0
        %2870 = vmatpush1.msra.mxu0 0.0
        %2871 = vmatprep.subr.mxu0 0.0
        %2872 = vmatpush1.msra.mxu0 0.0
        %2873 = vmatprep.subr.mxu0 0.0
        %2874 = vmatpush1.msra.mxu0 0.0
        %2875 = vmatprep.subr.mxu0 0.0
        %2876 = vmatpush1.msra.mxu0 0.0
        %2877 = vmatprep.subr.mxu0 0.0
        %2878 = vmatpush1.msra.mxu0 0.0
        %2879 = vmatprep.subr.mxu0 0.0
        %2880 = vmatpush1.msra.mxu0 0.0
        %2881 = vmatprep.subr.mxu0 0.0
        %2882 = vmatpush1.msra.mxu0 0.0
        %2883 = vmatprep.subr.mxu0 0.0
        %2884 = vmatpush1.msra.mxu0 0.0
        %2885 = vmatprep.subr.mxu0 0.0
        %2886 = vmatpush1.msra.mxu0 0.0
        %2887 = vmatprep.subr.mxu0 0.0
        %2888 = vmatpush1.msra.mxu0 0.0
        %2889 = vmatprep.subr.mxu0 0.0
        %2890 = vmatpush1.msra.mxu0 0.0
        %2891 = vmatprep.subr.mxu0 0.0
        %2892 = vmatpush1.msra.mxu0 0.0
        %2893 = vmatprep.subr.mxu0 0.0
        %2894 = vmatpush1.msra.mxu0 0.0
        %2895 = vmatprep.subr.mxu0 0.0
        %2896 = vmatpush1.msra.mxu0 0.0
        %2897 = vmatprep.mubr.f32.mxu0 0.0
        %2898 = vmatmul.mubr.f32.gmra.mrb[0].mxu0 %v612
        %v2899 = vpop.f32.mrb[0].mxu0
        %v2900 = vadd.f32 %v2830, %v2899
        %v2901 = vpop.f32.mrb[0].mxu0
        %2902 = vdwg.mxu0
        %2903 = vmatprep.subr.mxu0 0.0
        %2904 = vmatpush1.msra.mxu0 %v1429
        %2905 = vmatprep.subr.mxu0 0.0
        %2906 = vmatpush1.msra.mxu0 %v1430
        %2907 = vmatprep.subr.mxu0 0.0
        %2908 = vmatpush1.msra.mxu0 %v1431
        %2909 = vmatprep.subr.mxu0 0.0
        %2910 = vmatpush1.msra.mxu0 %v1432
        %2911 = vmatprep.subr.mxu0 0.0
        %2912 = vmatpush1.msra.mxu0 %v1433
        %2913 = vmatprep.subr.mxu0 0.0
        %2914 = vmatpush1.msra.mxu0 %v1434
        %2915 = vmatprep.subr.mxu0 0.0
        %2916 = vmatpush1.msra.mxu0 %v1435
        %2917 = vmatprep.subr.mxu0 0.0
        %2918 = vmatpush1.msra.mxu0 %v1436
        %2919 = vmatprep.subr.mxu0 0.0
        %2920 = vmatpush1.msra.mxu0 %v1437
        %2921 = vmatprep.subr.mxu0 0.0
        %2922 = vmatpush1.msra.mxu0 %v1438
        %2923 = vmatprep.subr.mxu0 0.0
        %2924 = vmatpush1.msra.mxu0 %v1439
        %2925 = vmatprep.subr.mxu0 0.0
        %2926 = vmatpush1.msra.mxu0 %v1440
        %2927 = vmatprep.subr.mxu0 0.0
        %2928 = vmatpush1.msra.mxu0 %v1441
        %2929 = vmatprep.subr.mxu0 0.0
        %2930 = vmatpush1.msra.mxu0 %v1442
        %2931 = vmatprep.subr.mxu0 0.0
        %2932 = vmatpush1.msra.mxu0 %v1443
        %2933 = vmatprep.subr.mxu0 0.0
        %2934 = vmatpush1.msra.mxu0 %v1444
        %2935 = vmatprep.subr.mxu0 0.0
        %2936 = vmatpush1.msra.mxu0 %v1445
        %2937 = vmatprep.subr.mxu0 0.0
        %2938 = vmatpush1.msra.mxu0 %v1446
        %2939 = vmatprep.subr.mxu0 0.0
        %2940 = vmatpush1.msra.mxu0 %v1447
        %2941 = vmatprep.subr.mxu0 0.0
        %2942 = vmatpush1.msra.mxu0 %v1448
        %2943 = vmatprep.subr.mxu0 0.0
        %2944 = vmatpush1.msra.mxu0 %v1449
        %2945 = vmatprep.subr.mxu0 0.0
        %2946 = vmatpush1.msra.mxu0 %v1450
        %2947 = vmatprep.subr.mxu0 0.0
        %2948 = vmatpush1.msra.mxu0 %v1451
        %2949 = vmatprep.subr.mxu0 0.0
        %2950 = vmatpush1.msra.mxu0 %v1452
        %2951 = vmatprep.subr.mxu0 0.0
        %2952 = vmatpush1.msra.mxu0 %v1453
        %2953 = vmatprep.subr.mxu0 0.0
        %2954 = vmatpush1.msra.mxu0 %v1454
        %2955 = vmatprep.subr.mxu0 0.0
        %2956 = vmatpush1.msra.mxu0 %v1455
        %2957 = vmatprep.subr.mxu0 0.0
        %2958 = vmatpush1.msra.mxu0 %v1456
        %2959 = vmatprep.subr.mxu0 0.0
        %2960 = vmatpush1.msra.mxu0 %v1457
        %2961 = vmatprep.subr.mxu0 0.0
        %2962 = vmatpush1.msra.mxu0 %v1458
        %2963 = vmatprep.subr.mxu0 0.0
        %2964 = vmatpush1.msra.mxu0 %v1459
        %2965 = vmatprep.subr.mxu0 0.0
        %2966 = vmatpush1.msra.mxu0 %v1460
        %2967 = vmatprep.mubr.f32.mxu0 %v611
        %2968 = vmatmul.mubr.f32.gmra.mrb[0].mxu0 %v610
        %v2969 = vpop.f32.mrb[0].mxu0
        %v2970 = vadd.f32 0.0, %v2969
        %v2971 = vpop.f32.mrb[0].mxu0
        %2972 = vdwg.mxu0
        %2973 = vmatprep.subr.mxu0 0.0
        %2974 = vmatpush1.msra.mxu0 %v1461
        %2975 = vmatprep.subr.mxu0 0.0
        %2976 = vmatpush1.msra.mxu0 %v1462
        %2977 = vmatprep.subr.mxu0 0.0
        %2978 = vmatpush1.msra.mxu0 %v1463
        %2979 = vmatprep.subr.mxu0 0.0
        %2980 = vmatpush1.msra.mxu0 %v1464
        %2981 = vmatprep.subr.mxu0 0.0
        %2982 = vmatpush1.msra.mxu0 %v1465
        %2983 = vmatprep.subr.mxu0 0.0
        %2984 = vmatpush1.msra.mxu0 %v1466
        %2985 = vmatprep.subr.mxu0 0.0
        %2986 = vmatpush1.msra.mxu0 %v1467
        %2987 = vmatprep.subr.mxu0 0.0
        %2988 = vmatpush1.msra.mxu0 %v1468
        %2989 = vmatprep.subr.mxu0 0.0
        %2990 = vmatpush1.msra.mxu0 %v1469
        %2991 = vmatprep.subr.mxu0 0.0
        %2992 = vmatpush1.msra.mxu0 %v1470
        %2993 = vmatprep.subr.mxu0 0.0
        %2994 = vmatpush1.msra.mxu0 %v1471
        %2995 = vmatprep.subr.mxu0 0.0
        %2996 = vmatpush1.msra.mxu0 %v1472
        %2997 = vmatprep.subr.mxu0 0.0
        %2998 = vmatpush1.msra.mxu0 %v1473
        %2999 = vmatprep.subr.mxu0 0.0
        %3000 = vmatpush1.msra.mxu0 %v1474
        %3001 = vmatprep.subr.mxu0 0.0
        %3002 = vmatpush1.msra.mxu0 %v1475
        %3003 = vmatprep.subr.mxu0 0.0
        %3004 = vmatpush1.msra.mxu0 %v1476
        %3005 = vmatprep.subr.mxu0 0.0
        %3006 = vmatpush1.msra.mxu0 0.0
        %3007 = vmatprep.subr.mxu0 0.0
        %3008 = vmatpush1.msra.mxu0 0.0
        %3009 = vmatprep.subr.mxu0 0.0
        %3010 = vmatpush1.msra.mxu0 0.0
        %3011 = vmatprep.subr.mxu0 0.0
        %3012 = vmatpush1.msra.mxu0 0.0
        %3013 = vmatprep.subr.mxu0 0.0
        %3014 = vmatpush1.msra.mxu0 0.0
        %3015 = vmatprep.subr.mxu0 0.0
        %3016 = vmatpush1.msra.mxu0 0.0
        %3017 = vmatprep.subr.mxu0 0.0
        %3018 = vmatpush1.msra.mxu0 0.0
        %3019 = vmatprep.subr.mxu0 0.0
        %3020 = vmatpush1.msra.mxu0 0.0
        %3021 = vmatprep.subr.mxu0 0.0
        %3022 = vmatpush1.msra.mxu0 0.0
        %3023 = vmatprep.subr.mxu0 0.0
        %3024 = vmatpush1.msra.mxu0 0.0
        %3025 = vmatprep.subr.mxu0 0.0
        %3026 = vmatpush1.msra.mxu0 0.0
        %3027 = vmatprep.subr.mxu0 0.0
        %3028 = vmatpush1.msra.mxu0 0.0
        %3029 = vmatprep.subr.mxu0 0.0
        %3030 = vmatpush1.msra.mxu0 0.0
        %3031 = vmatprep.subr.mxu0 0.0
        %3032 = vmatpush1.msra.mxu0 0.0
        %3033 = vmatprep.subr.mxu0 0.0
        %3034 = vmatpush1.msra.mxu0 0.0
        %3035 = vmatprep.subr.mxu0 0.0
        %3036 = vmatpush1.msra.mxu0 0.0
        %3037 = vmatprep.mubr.f32.mxu0 0.0
        %3038 = vmatmul.mubr.f32.gmra.mrb[0].mxu0 %v612
        %v3039 = vpop.f32.mrb[0].mxu0
        %v3040 = vadd.f32 %v2970, %v3039
        %v3041 = vpop.f32.mrb[0].mxu0
        %3042 = vdwg.mxu0
        %v3043 = vld [vmem:[%s5] sm:$0xff]
        %v3044 = vld [vmem:[%s5 + $0x8] sm:$0xff]
        %3046 = vset.pattern.permute.xlu0 0
        %3047 = vperm.xlu0 %3046, %v3043
        %v3048 = vpop.permute.xlu0 %3047
        %3051 = vset.pattern.permute.xlu0 0
        %3052 = vperm.xlu0 %3051, %v3044
        %v3053 = vpop.permute.xlu0 %3052
        %vm3055 = vcmask 588800
        %v3057 = vsel %vm3055, %v1765, 0
        %v3060 = vsel %vm3055, %v1766, 0
        %3062 = vmatprep.subr.mxu0 0.0
        %3063 = vmatpush1.msra.mxu0 %v1920
        %3064 = vmatprep.subr.mxu0 0.0
        %3065 = vmatpush1.msra.mxu0 %v2060
        %3066 = vmatprep.subr.mxu0 0.0
        %3067 = vmatpush1.msra.mxu0 %v2200
        %3068 = vmatprep.subr.mxu0 0.0
        %3069 = vmatpush1.msra.mxu0 %v2340
        %3070 = vmatprep.subr.mxu0 0.0
        %3071 = vmatpush1.msra.mxu0 %v2480
        %3072 = vmatprep.subr.mxu0 0.0
        %3073 = vmatpush1.msra.mxu0 %v2620
        %3074 = vmatprep.subr.mxu0 0.0
        %3075 = vmatpush1.msra.mxu0 %v2760
        %3076 = vmatprep.subr.mxu0 0.0
        %3077 = vmatpush1.msra.mxu0 %v2900
        %3078 = vmatprep.subr.mxu0 0.0
        %3079 = vmatpush1.msra.mxu0 %v3040
        %3080 = vmatprep.subr.mxu0 0.0
        %3081 = vmatpush1.msra.mxu0 0.0
        %3082 = vmatprep.subr.mxu0 0.0
        %3083 = vmatpush1.msra.mxu0 0.0
        %3084 = vmatprep.subr.mxu0 0.0
        %3085 = vmatpush1.msra.mxu0 0.0
        %3086 = vmatprep.subr.mxu0 0.0
        %3087 = vmatpush1.msra.mxu0 0.0
        %3088 = vmatprep.subr.mxu0 0.0
        %3089 = vmatpush1.msra.mxu0 0.0
        %3090 = vmatprep.subr.mxu0 0.0
        %3091 = vmatpush1.msra.mxu0 0.0
        %3092 = vmatprep.subr.mxu0 0.0
        %3093 = vmatpush1.msra.mxu0 0.0
        %3094 = vmatprep.subr.mxu0 0.0
        %3095 = vmatpush1.msra.mxu0 0.0
        %3096 = vmatprep.subr.mxu0 0.0
        %3097 = vmatpush1.msra.mxu0 0.0
        %3098 = vmatprep.subr.mxu0 0.0
        %3099 = vmatpush1.msra.mxu0 0.0
        %3100 = vmatprep.subr.mxu0 0.0
        %3101 = vmatpush1.msra.mxu0 0.0
        %3102 = vmatprep.subr.mxu0 0.0
        %3103 = vmatpush1.msra.mxu0 0.0
        %3104 = vmatprep.subr.mxu0 0.0
        %3105 = vmatpush1.msra.mxu0 0.0
        %3106 = vmatprep.subr.mxu0 0.0
        %3107 = vmatpush1.msra.mxu0 0.0
        %3108 = vmatprep.subr.mxu0 0.0
        %3109 = vmatpush1.msra.mxu0 0.0
        %3110 = vmatprep.subr.mxu0 0.0
        %3111 = vmatpush1.msra.mxu0 0.0
        %3112 = vmatprep.subr.mxu0 0.0
        %3113 = vmatpush1.msra.mxu0 0.0
        %3114 = vmatprep.subr.mxu0 0.0
        %3115 = vmatpush1.msra.mxu0 0.0
        %3116 = vmatprep.subr.mxu0 0.0
        %3117 = vmatpush1.msra.mxu0 0.0
        %3118 = vmatprep.subr.mxu0 0.0
        %3119 = vmatpush1.msra.mxu0 0.0
        %3120 = vmatprep.subr.mxu0 0.0
        %3121 = vmatpush1.msra.mxu0 0.0
        %3122 = vmatprep.subr.mxu0 0.0
        %3123 = vmatpush1.msra.mxu0 0.0
        %3124 = vmatprep.subr.mxu0 0.0
        %3125 = vmatpush1.msra.mxu0 0.0
        %3126 = vmatprep.mubr.f32.mxu0 0.0
        %3127 = vmatmul.mubr.f32.gmra.mrb[0].mxu0 %v3057
        %v3128 = vpop.f32.mrb[0].mxu0
        %v3129 = vadd.f32 %v3048, %v3128
        %v3130 = vpop.f32.mrb[0].mxu0
        %3131 = vmatprep.mubr.f32.mxu0 0.0
        %3132 = vmatmul.mubr.f32.gmra.mrb[0].mxu0 %v3060
        %v3133 = vpop.f32.mrb[0].mxu0
        %v3134 = vadd.f32 %v3053, %v3133
        %v3135 = vpop.f32.mrb[0].mxu0
        %3136 = vdwg.mxu0
        %v3137 = vmax.f32 %v3129, 0.0
        %v3138 = vmax.f32 %v3134, 0.0
        %3139 = vmatprep.subr.mxu0 0.0
        %3140 = vmatpush1.msra.mxu0 %v1621
        %3141 = vmatprep.subr.mxu0 0.0
        %3142 = vmatpush1.msra.mxu0 %v1622
        %3143 = vmatprep.subr.mxu0 0.0
        %3144 = vmatpush1.msra.mxu0 %v1623
        %3145 = vmatprep.subr.mxu0 0.0
        %3146 = vmatpush1.msra.mxu0 %v1624
        %3147 = vmatprep.subr.mxu0 0.0
        %3148 = vmatpush1.msra.mxu0 %v1625
        %3149 = vmatprep.subr.mxu0 0.0
        %3150 = vmatpush1.msra.mxu0 %v1626
        %3151 = vmatprep.subr.mxu0 0.0
        %3152 = vmatpush1.msra.mxu0 %v1627
        %3153 = vmatprep.subr.mxu0 0.0
        %3154 = vmatpush1.msra.mxu0 %v1628
        %3155 = vmatprep.subr.mxu0 0.0
        %3156 = vmatpush1.msra.mxu0 %v1629
        %3157 = vmatprep.subr.mxu0 0.0
        %3158 = vmatpush1.msra.mxu0 %v1630
        %3159 = vmatprep.subr.mxu0 0.0
        %3160 = vmatpush1.msra.mxu0 %v1631
        %3161 = vmatprep.subr.mxu0 0.0
        %3162 = vmatpush1.msra.mxu0 %v1632
        %3163 = vmatprep.subr.mxu0 0.0
        %3164 = vmatpush1.msra.mxu0 %v1633
        %3165 = vmatprep.subr.mxu0 0.0
        %3166 = vmatpush1.msra.mxu0 %v1634
        %3167 = vmatprep.subr.mxu0 0.0
        %3168 = vmatpush1.msra.mxu0 %v1635
        %3169 = vmatprep.subr.mxu0 0.0
        %3170 = vmatpush1.msra.mxu0 %v1636
        %3171 = vmatprep.subr.mxu0 0.0
        %3172 = vmatpush1.msra.mxu0 0.0
        %3173 = vmatprep.subr.mxu0 0.0
        %3174 = vmatpush1.msra.mxu0 0.0
        %3175 = vmatprep.subr.mxu0 0.0
        %3176 = vmatpush1.msra.mxu0 0.0
        %3177 = vmatprep.subr.mxu0 0.0
        %3178 = vmatpush1.msra.mxu0 0.0
        %3179 = vmatprep.subr.mxu0 0.0
        %3180 = vmatpush1.msra.mxu0 0.0
        %3181 = vmatprep.subr.mxu0 0.0
        %3182 = vmatpush1.msra.mxu0 0.0
        %3183 = vmatprep.subr.mxu0 0.0
        %3184 = vmatpush1.msra.mxu0 0.0
        %3185 = vmatprep.subr.mxu0 0.0
        %3186 = vmatpush1.msra.mxu0 0.0
        %3187 = vmatprep.subr.mxu0 0.0
        %3188 = vmatpush1.msra.mxu0 0.0
        %3189 = vmatprep.subr.mxu0 0.0
        %3190 = vmatpush1.msra.mxu0 0.0
        %3191 = vmatprep.subr.mxu0 0.0
        %3192 = vmatpush1.msra.mxu0 0.0
        %3193 = vmatprep.subr.mxu0 0.0
        %3194 = vmatpush1.msra.mxu0 0.0
        %3195 = vmatprep.subr.mxu0 0.0
        %3196 = vmatpush1.msra.mxu0 0.0
        %3197 = vmatprep.subr.mxu0 0.0
        %3198 = vmatpush1.msra.mxu0 0.0
        %3199 = vmatprep.subr.mxu0 0.0
        %3200 = vmatpush1.msra.mxu0 0.0
        %3201 = vmatprep.subr.mxu0 0.0
        %3202 = vmatpush1.msra.mxu0 0.0
        %3203 = vmatprep.mubr.f32.mxu0 0.0
        %3204 = vmatmul.mubr.f32.gmra.mrb[0].mxu0 %v3137
        %v3205 = vpop.f32.mrb[0].mxu0
        %v3206 = vadd.f32 0.0, %v3205
        %v3207 = vpop.f32.mrb[0].mxu0
        %3208 = vmatprep.mubr.f32.mxu0 0.0
        %3209 = vmatmul.mubr.f32.gmra.mrb[0].mxu0 %v3138
        %v3210 = vpop.f32.mrb[0].mxu0
        %v3211 = vadd.f32 0.0, %v3210
        %v3212 = vpop.f32.mrb[0].mxu0
        %3213 = vdwg.mxu0
        %3214 = vmatprep.subr.mxu0 0.0
        %3215 = vmatpush1.msra.mxu0 %v1637
        %3216 = vmatprep.subr.mxu0 0.0
        %3217 = vmatpush1.msra.mxu0 %v1638
        %3218 = vmatprep.subr.mxu0 0.0
        %3219 = vmatpush1.msra.mxu0 %v1639
        %3220 = vmatprep.subr.mxu0 0.0
        %3221 = vmatpush1.msra.mxu0 %v1640
        %3222 = vmatprep.subr.mxu0 0.0
        %3223 = vmatpush1.msra.mxu0 %v1641
        %3224 = vmatprep.subr.mxu0 0.0
        %3225 = vmatpush1.msra.mxu0 %v1642
        %3226 = vmatprep.subr.mxu0 0.0
        %3227 = vmatpush1.msra.mxu0 %v1643
        %3228 = vmatprep.subr.mxu0 0.0
        %3229 = vmatpush1.msra.mxu0 %v1644
        %3230 = vmatprep.subr.mxu0 0.0
        %3231 = vmatpush1.msra.mxu0 %v1645
        %3232 = vmatprep.subr.mxu0 0.0
        %3233 = vmatpush1.msra.mxu0 %v1646
        %3234 = vmatprep.subr.mxu0 0.0
        %3235 = vmatpush1.msra.mxu0 %v1647
        %3236 = vmatprep.subr.mxu0 0.0
        %3237 = vmatpush1.msra.mxu0 %v1648
        %3238 = vmatprep.subr.mxu0 0.0
        %3239 = vmatpush1.msra.mxu0 %v1649
        %3240 = vmatprep.subr.mxu0 0.0
        %3241 = vmatpush1.msra.mxu0 %v1650
        %3242 = vmatprep.subr.mxu0 0.0
        %3243 = vmatpush1.msra.mxu0 %v1651
        %3244 = vmatprep.subr.mxu0 0.0
        %3245 = vmatpush1.msra.mxu0 %v1652
        %3246 = vmatprep.subr.mxu0 0.0
        %3247 = vmatpush1.msra.mxu0 0.0
        %3248 = vmatprep.subr.mxu0 0.0
        %3249 = vmatpush1.msra.mxu0 0.0
        %3250 = vmatprep.subr.mxu0 0.0
        %3251 = vmatpush1.msra.mxu0 0.0
        %3252 = vmatprep.subr.mxu0 0.0
        %3253 = vmatpush1.msra.mxu0 0.0
        %3254 = vmatprep.subr.mxu0 0.0
        %3255 = vmatpush1.msra.mxu0 0.0
        %3256 = vmatprep.subr.mxu0 0.0
        %3257 = vmatpush1.msra.mxu0 0.0
        %3258 = vmatprep.subr.mxu0 0.0
        %3259 = vmatpush1.msra.mxu0 0.0
        %3260 = vmatprep.subr.mxu0 0.0
        %3261 = vmatpush1.msra.mxu0 0.0
        %3262 = vmatprep.subr.mxu0 0.0
        %3263 = vmatpush1.msra.mxu0 0.0
        %3264 = vmatprep.subr.mxu0 0.0
        %3265 = vmatpush1.msra.mxu0 0.0
        %3266 = vmatprep.subr.mxu0 0.0
        %3267 = vmatpush1.msra.mxu0 0.0
        %3268 = vmatprep.subr.mxu0 0.0
        %3269 = vmatpush1.msra.mxu0 0.0
        %3270 = vmatprep.subr.mxu0 0.0
        %3271 = vmatpush1.msra.mxu0 0.0
        %3272 = vmatprep.subr.mxu0 0.0
        %3273 = vmatpush1.msra.mxu0 0.0
        %3274 = vmatprep.subr.mxu0 0.0
        %3275 = vmatpush1.msra.mxu0 0.0
        %3276 = vmatprep.subr.mxu0 0.0
        %3277 = vmatpush1.msra.mxu0 0.0
        %3278 = vmatprep.mubr.f32.mxu0 0.0
        %3279 = vmatmul.mubr.f32.gmra.mrb[0].mxu0 %v3137
        %v3280 = vpop.f32.mrb[0].mxu0
        %v3281 = vadd.f32 0.0, %v3280
        %v3282 = vpop.f32.mrb[0].mxu0
        %3283 = vmatprep.mubr.f32.mxu0 0.0
        %3284 = vmatmul.mubr.f32.gmra.mrb[0].mxu0 %v3138
        %v3285 = vpop.f32.mrb[0].mxu0
        %v3286 = vadd.f32 0.0, %v3285
        %v3287 = vpop.f32.mrb[0].mxu0
        %3288 = vdwg.mxu0
        %3289 = vmatprep.subr.mxu0 0.0
        %3290 = vmatpush1.msra.mxu0 %v1653
        %3291 = vmatprep.subr.mxu0 0.0
        %3292 = vmatpush1.msra.mxu0 %v1654
        %3293 = vmatprep.subr.mxu0 0.0
        %3294 = vmatpush1.msra.mxu0 %v1655
        %3295 = vmatprep.subr.mxu0 0.0
        %3296 = vmatpush1.msra.mxu0 %v1656
        %3297 = vmatprep.subr.mxu0 0.0
        %3298 = vmatpush1.msra.mxu0 %v1657
        %3299 = vmatprep.subr.mxu0 0.0
        %3300 = vmatpush1.msra.mxu0 %v1658
        %3301 = vmatprep.subr.mxu0 0.0
        %3302 = vmatpush1.msra.mxu0 %v1659
        %3303 = vmatprep.subr.mxu0 0.0
        %3304 = vmatpush1.msra.mxu0 %v1660
        %3305 = vmatprep.subr.mxu0 0.0
        %3306 = vmatpush1.msra.mxu0 %v1661
        %3307 = vmatprep.subr.mxu0 0.0
        %3308 = vmatpush1.msra.mxu0 %v1662
        %3309 = vmatprep.subr.mxu0 0.0
        %3310 = vmatpush1.msra.mxu0 %v1663
        %3311 = vmatprep.subr.mxu0 0.0
        %3312 = vmatpush1.msra.mxu0 %v1664
        %3313 = vmatprep.subr.mxu0 0.0
        %3314 = vmatpush1.msra.mxu0 %v1665
        %3315 = vmatprep.subr.mxu0 0.0
        %3316 = vmatpush1.msra.mxu0 %v1666
        %3317 = vmatprep.subr.mxu0 0.0
        %3318 = vmatpush1.msra.mxu0 %v1667
        %3319 = vmatprep.subr.mxu0 0.0
        %3320 = vmatpush1.msra.mxu0 %v1668
        %3321 = vmatprep.subr.mxu0 0.0
        %3322 = vmatpush1.msra.mxu0 0.0
        %3323 = vmatprep.subr.mxu0 0.0
        %3324 = vmatpush1.msra.mxu0 0.0
        %3325 = vmatprep.subr.mxu0 0.0
        %3326 = vmatpush1.msra.mxu0 0.0
        %3327 = vmatprep.subr.mxu0 0.0
        %3328 = vmatpush1.msra.mxu0 0.0
        %3329 = vmatprep.subr.mxu0 0.0
        %3330 = vmatpush1.msra.mxu0 0.0
        %3331 = vmatprep.subr.mxu0 0.0
        %3332 = vmatpush1.msra.mxu0 0.0
        %3333 = vmatprep.subr.mxu0 0.0
        %3334 = vmatpush1.msra.mxu0 0.0
        %3335 = vmatprep.subr.mxu0 0.0
        %3336 = vmatpush1.msra.mxu0 0.0
        %3337 = vmatprep.subr.mxu0 0.0
        %3338 = vmatpush1.msra.mxu0 0.0
        %3339 = vmatprep.subr.mxu0 0.0
        %3340 = vmatpush1.msra.mxu0 0.0
        %3341 = vmatprep.subr.mxu0 0.0
        %3342 = vmatpush1.msra.mxu0 0.0
        %3343 = vmatprep.subr.mxu0 0.0
        %3344 = vmatpush1.msra.mxu0 0.0
        %3345 = vmatprep.subr.mxu0 0.0
        %3346 = vmatpush1.msra.mxu0 0.0
        %3347 = vmatprep.subr.mxu0 0.0
        %3348 = vmatpush1.msra.mxu0 0.0
        %3349 = vmatprep.subr.mxu0 0.0
        %3350 = vmatpush1.msra.mxu0 0.0
        %3351 = vmatprep.subr.mxu0 0.0
        %3352 = vmatpush1.msra.mxu0 0.0
        %3353 = vmatprep.mubr.f32.mxu0 0.0
        %3354 = vmatmul.mubr.f32.gmra.mrb[0].mxu0 %v3137
        %v3355 = vpop.f32.mrb[0].mxu0
        %v3356 = vadd.f32 0.0, %v3355
        %v3357 = vpop.f32.mrb[0].mxu0
        %3358 = vmatprep.mubr.f32.mxu0 0.0
        %3359 = vmatmul.mubr.f32.gmra.mrb[0].mxu0 %v3138
        %v3360 = vpop.f32.mrb[0].mxu0
        %v3361 = vadd.f32 0.0, %v3360
        %v3362 = vpop.f32.mrb[0].mxu0
        %3363 = vdwg.mxu0
        %3364 = vmatprep.subr.mxu0 0.0
        %3365 = vmatpush1.msra.mxu0 %v1669
        %3366 = vmatprep.subr.mxu0 0.0
        %3367 = vmatpush1.msra.mxu0 %v1670
        %3368 = vmatprep.subr.mxu0 0.0
        %3369 = vmatpush1.msra.mxu0 %v1671
        %3370 = vmatprep.subr.mxu0 0.0
        %3371 = vmatpush1.msra.mxu0 %v1672
        %3372 = vmatprep.subr.mxu0 0.0
        %3373 = vmatpush1.msra.mxu0 %v1673
        %3374 = vmatprep.subr.mxu0 0.0
        %3375 = vmatpush1.msra.mxu0 %v1674
        %3376 = vmatprep.subr.mxu0 0.0
        %3377 = vmatpush1.msra.mxu0 %v1675
        %3378 = vmatprep.subr.mxu0 0.0
        %3379 = vmatpush1.msra.mxu0 %v1676
        %3380 = vmatprep.subr.mxu0 0.0
        %3381 = vmatpush1.msra.mxu0 %v1677
        %3382 = vmatprep.subr.mxu0 0.0
        %3383 = vmatpush1.msra.mxu0 %v1678
        %3384 = vmatprep.subr.mxu0 0.0
        %3385 = vmatpush1.msra.mxu0 %v1679
        %3386 = vmatprep.subr.mxu0 0.0
        %3387 = vmatpush1.msra.mxu0 %v1680
        %3388 = vmatprep.subr.mxu0 0.0
        %3389 = vmatpush1.msra.mxu0 %v1681
        %3390 = vmatprep.subr.mxu0 0.0
        %3391 = vmatpush1.msra.mxu0 %v1682
        %3392 = vmatprep.subr.mxu0 0.0
        %3393 = vmatpush1.msra.mxu0 %v1683
        %3394 = vmatprep.subr.mxu0 0.0
        %3395 = vmatpush1.msra.mxu0 %v1684
        %3396 = vmatprep.subr.mxu0 0.0
        %3397 = vmatpush1.msra.mxu0 0.0
        %3398 = vmatprep.subr.mxu0 0.0
        %3399 = vmatpush1.msra.mxu0 0.0
        %3400 = vmatprep.subr.mxu0 0.0
        %3401 = vmatpush1.msra.mxu0 0.0
        %3402 = vmatprep.subr.mxu0 0.0
        %3403 = vmatpush1.msra.mxu0 0.0
        %3404 = vmatprep.subr.mxu0 0.0
        %3405 = vmatpush1.msra.mxu0 0.0
        %3406 = vmatprep.subr.mxu0 0.0
        %3407 = vmatpush1.msra.mxu0 0.0
        %3408 = vmatprep.subr.mxu0 0.0
        %3409 = vmatpush1.msra.mxu0 0.0
        %3410 = vmatprep.subr.mxu0 0.0
        %3411 = vmatpush1.msra.mxu0 0.0
        %3412 = vmatprep.subr.mxu0 0.0
        %3413 = vmatpush1.msra.mxu0 0.0
        %3414 = vmatprep.subr.mxu0 0.0
        %3415 = vmatpush1.msra.mxu0 0.0
        %3416 = vmatprep.subr.mxu0 0.0
        %3417 = vmatpush1.msra.mxu0 0.0
        %3418 = vmatprep.subr.mxu0 0.0
        %3419 = vmatpush1.msra.mxu0 0.0
        %3420 = vmatprep.subr.mxu0 0.0
        %3421 = vmatpush1.msra.mxu0 0.0
        %3422 = vmatprep.subr.mxu0 0.0
        %3423 = vmatpush1.msra.mxu0 0.0
        %3424 = vmatprep.subr.mxu0 0.0
        %3425 = vmatpush1.msra.mxu0 0.0
        %3426 = vmatprep.subr.mxu0 0.0
        %3427 = vmatpush1.msra.mxu0 0.0
        %3428 = vmatprep.mubr.f32.mxu0 0.0
        %3429 = vmatmul.mubr.f32.gmra.mrb[0].mxu0 %v3137
        %v3430 = vpop.f32.mrb[0].mxu0
        %v3431 = vadd.f32 0.0, %v3430
        %v3432 = vpop.f32.mrb[0].mxu0
        %3433 = vmatprep.mubr.f32.mxu0 0.0
        %3434 = vmatmul.mubr.f32.gmra.mrb[0].mxu0 %v3138
        %v3435 = vpop.f32.mrb[0].mxu0
        %v3436 = vadd.f32 0.0, %v3435
        %v3437 = vpop.f32.mrb[0].mxu0
        %3438 = vdwg.mxu0
        %3439 = vmatprep.subr.mxu0 0.0
        %3440 = vmatpush1.msra.mxu0 %v1685
        %3441 = vmatprep.subr.mxu0 0.0
        %3442 = vmatpush1.msra.mxu0 %v1686
        %3443 = vmatprep.subr.mxu0 0.0
        %3444 = vmatpush1.msra.mxu0 %v1687
        %3445 = vmatprep.subr.mxu0 0.0
        %3446 = vmatpush1.msra.mxu0 %v1688
        %3447 = vmatprep.subr.mxu0 0.0
        %3448 = vmatpush1.msra.mxu0 %v1689
        %3449 = vmatprep.subr.mxu0 0.0
        %3450 = vmatpush1.msra.mxu0 %v1690
        %3451 = vmatprep.subr.mxu0 0.0
        %3452 = vmatpush1.msra.mxu0 %v1691
        %3453 = vmatprep.subr.mxu0 0.0
        %3454 = vmatpush1.msra.mxu0 %v1692
        %3455 = vmatprep.subr.mxu0 0.0
        %3456 = vmatpush1.msra.mxu0 %v1693
        %3457 = vmatprep.subr.mxu0 0.0
        %3458 = vmatpush1.msra.mxu0 %v1694
        %3459 = vmatprep.subr.mxu0 0.0
        %3460 = vmatpush1.msra.mxu0 %v1695
        %3461 = vmatprep.subr.mxu0 0.0
        %3462 = vmatpush1.msra.mxu0 %v1696
        %3463 = vmatprep.subr.mxu0 0.0
        %3464 = vmatpush1.msra.mxu0 %v1697
        %3465 = vmatprep.subr.mxu0 0.0
        %3466 = vmatpush1.msra.mxu0 %v1698
        %3467 = vmatprep.subr.mxu0 0.0
        %3468 = vmatpush1.msra.mxu0 %v1699
        %3469 = vmatprep.subr.mxu0 0.0
        %3470 = vmatpush1.msra.mxu0 %v1700
        %3471 = vmatprep.subr.mxu0 0.0
        %3472 = vmatpush1.msra.mxu0 0.0
        %3473 = vmatprep.subr.mxu0 0.0
        %3474 = vmatpush1.msra.mxu0 0.0
        %3475 = vmatprep.subr.mxu0 0.0
        %3476 = vmatpush1.msra.mxu0 0.0
        %3477 = vmatprep.subr.mxu0 0.0
        %3478 = vmatpush1.msra.mxu0 0.0
        %3479 = vmatprep.subr.mxu0 0.0
        %3480 = vmatpush1.msra.mxu0 0.0
        %3481 = vmatprep.subr.mxu0 0.0
        %3482 = vmatpush1.msra.mxu0 0.0
        %3483 = vmatprep.subr.mxu0 0.0
        %3484 = vmatpush1.msra.mxu0 0.0
        %3485 = vmatprep.subr.mxu0 0.0
        %3486 = vmatpush1.msra.mxu0 0.0
        %3487 = vmatprep.subr.mxu0 0.0
        %3488 = vmatpush1.msra.mxu0 0.0
        %3489 = vmatprep.subr.mxu0 0.0
        %3490 = vmatpush1.msra.mxu0 0.0
        %3491 = vmatprep.subr.mxu0 0.0
        %3492 = vmatpush1.msra.mxu0 0.0
        %3493 = vmatprep.subr.mxu0 0.0
        %3494 = vmatpush1.msra.mxu0 0.0
        %3495 = vmatprep.subr.mxu0 0.0
        %3496 = vmatpush1.msra.mxu0 0.0
        %3497 = vmatprep.subr.mxu0 0.0
        %3498 = vmatpush1.msra.mxu0 0.0
        %3499 = vmatprep.subr.mxu0 0.0
        %3500 = vmatpush1.msra.mxu0 0.0
        %3501 = vmatprep.subr.mxu0 0.0
        %3502 = vmatpush1.msra.mxu0 0.0
        %3503 = vmatprep.mubr.f32.mxu0 0.0
        %3504 = vmatmul.mubr.f32.gmra.mrb[0].mxu0 %v3137
        %v3505 = vpop.f32.mrb[0].mxu0
        %v3506 = vadd.f32 0.0, %v3505
        %v3507 = vpop.f32.mrb[0].mxu0
        %3508 = vmatprep.mubr.f32.mxu0 0.0
        %3509 = vmatmul.mubr.f32.gmra.mrb[0].mxu0 %v3138
        %v3510 = vpop.f32.mrb[0].mxu0
        %v3511 = vadd.f32 0.0, %v3510
        %v3512 = vpop.f32.mrb[0].mxu0
        %3513 = vdwg.mxu0
        %3514 = vmatprep.subr.mxu0 0.0
        %3515 = vmatpush1.msra.mxu0 %v1701
        %3516 = vmatprep.subr.mxu0 0.0
        %3517 = vmatpush1.msra.mxu0 %v1702
        %3518 = vmatprep.subr.mxu0 0.0
        %3519 = vmatpush1.msra.mxu0 %v1703
        %3520 = vmatprep.subr.mxu0 0.0
        %3521 = vmatpush1.msra.mxu0 %v1704
        %3522 = vmatprep.subr.mxu0 0.0
        %3523 = vmatpush1.msra.mxu0 %v1705
        %3524 = vmatprep.subr.mxu0 0.0
        %3525 = vmatpush1.msra.mxu0 %v1706
        %3526 = vmatprep.subr.mxu0 0.0
        %3527 = vmatpush1.msra.mxu0 %v1707
        %3528 = vmatprep.subr.mxu0 0.0
        %3529 = vmatpush1.msra.mxu0 %v1708
        %3530 = vmatprep.subr.mxu0 0.0
        %3531 = vmatpush1.msra.mxu0 %v1709
        %3532 = vmatprep.subr.mxu0 0.0
        %3533 = vmatpush1.msra.mxu0 %v1710
        %3534 = vmatprep.subr.mxu0 0.0
        %3535 = vmatpush1.msra.mxu0 %v1711
        %3536 = vmatprep.subr.mxu0 0.0
        %3537 = vmatpush1.msra.mxu0 %v1712
        %3538 = vmatprep.subr.mxu0 0.0
        %3539 = vmatpush1.msra.mxu0 %v1713
        %3540 = vmatprep.subr.mxu0 0.0
        %3541 = vmatpush1.msra.mxu0 %v1714
        %3542 = vmatprep.subr.mxu0 0.0
        %3543 = vmatpush1.msra.mxu0 %v1715
        %3544 = vmatprep.subr.mxu0 0.0
        %3545 = vmatpush1.msra.mxu0 %v1716
        %3546 = vmatprep.subr.mxu0 0.0
        %3547 = vmatpush1.msra.mxu0 0.0
        %3548 = vmatprep.subr.mxu0 0.0
        %3549 = vmatpush1.msra.mxu0 0.0
        %3550 = vmatprep.subr.mxu0 0.0
        %3551 = vmatpush1.msra.mxu0 0.0
        %3552 = vmatprep.subr.mxu0 0.0
        %3553 = vmatpush1.msra.mxu0 0.0
        %3554 = vmatprep.subr.mxu0 0.0
        %3555 = vmatpush1.msra.mxu0 0.0
        %3556 = vmatprep.subr.mxu0 0.0
        %3557 = vmatpush1.msra.mxu0 0.0
        %3558 = vmatprep.subr.mxu0 0.0
        %3559 = vmatpush1.msra.mxu0 0.0
        %3560 = vmatprep.subr.mxu0 0.0
        %3561 = vmatpush1.msra.mxu0 0.0
        %3562 = vmatprep.subr.mxu0 0.0
        %3563 = vmatpush1.msra.mxu0 0.0
        %3564 = vmatprep.subr.mxu0 0.0
        %3565 = vmatpush1.msra.mxu0 0.0
        %3566 = vmatprep.subr.mxu0 0.0
        %3567 = vmatpush1.msra.mxu0 0.0
        %3568 = vmatprep.subr.mxu0 0.0
        %3569 = vmatpush1.msra.mxu0 0.0
        %3570 = vmatprep.subr.mxu0 0.0
        %3571 = vmatpush1.msra.mxu0 0.0
        %3572 = vmatprep.subr.mxu0 0.0
        %3573 = vmatpush1.msra.mxu0 0.0
        %3574 = vmatprep.subr.mxu0 0.0
        %3575 = vmatpush1.msra.mxu0 0.0
        %3576 = vmatprep.subr.mxu0 0.0
        %3577 = vmatpush1.msra.mxu0 0.0
        %3578 = vmatprep.mubr.f32.mxu0 0.0
        %3579 = vmatmul.mubr.f32.gmra.mrb[0].mxu0 %v3137
        %v3580 = vpop.f32.mrb[0].mxu0
        %v3581 = vadd.f32 0.0, %v3580
        %v3582 = vpop.f32.mrb[0].mxu0
        %3583 = vmatprep.mubr.f32.mxu0 0.0
        %3584 = vmatmul.mubr.f32.gmra.mrb[0].mxu0 %v3138
        %v3585 = vpop.f32.mrb[0].mxu0
        %v3586 = vadd.f32 0.0, %v3585
        %v3587 = vpop.f32.mrb[0].mxu0
        %3588 = vdwg.mxu0
        %3589 = vmatprep.subr.mxu0 0.0
        %3590 = vmatpush1.msra.mxu0 %v1717
        %3591 = vmatprep.subr.mxu0 0.0
        %3592 = vmatpush1.msra.mxu0 %v1718
        %3593 = vmatprep.subr.mxu0 0.0
        %3594 = vmatpush1.msra.mxu0 %v1719
        %3595 = vmatprep.subr.mxu0 0.0
        %3596 = vmatpush1.msra.mxu0 %v1720
        %3597 = vmatprep.subr.mxu0 0.0
        %3598 = vmatpush1.msra.mxu0 %v1721
        %3599 = vmatprep.subr.mxu0 0.0
        %3600 = vmatpush1.msra.mxu0 %v1722
        %3601 = vmatprep.subr.mxu0 0.0
        %3602 = vmatpush1.msra.mxu0 %v1723
        %3603 = vmatprep.subr.mxu0 0.0
        %3604 = vmatpush1.msra.mxu0 %v1724
        %3605 = vmatprep.subr.mxu0 0.0
        %3606 = vmatpush1.msra.mxu0 %v1725
        %3607 = vmatprep.subr.mxu0 0.0
        %3608 = vmatpush1.msra.mxu0 %v1726
        %3609 = vmatprep.subr.mxu0 0.0
        %3610 = vmatpush1.msra.mxu0 %v1727
        %3611 = vmatprep.subr.mxu0 0.0
        %3612 = vmatpush1.msra.mxu0 %v1728
        %3613 = vmatprep.subr.mxu0 0.0
        %3614 = vmatpush1.msra.mxu0 %v1729
        %3615 = vmatprep.subr.mxu0 0.0
        %3616 = vmatpush1.msra.mxu0 %v1730
        %3617 = vmatprep.subr.mxu0 0.0
        %3618 = vmatpush1.msra.mxu0 %v1731
        %3619 = vmatprep.subr.mxu0 0.0
        %3620 = vmatpush1.msra.mxu0 %v1732
        %3621 = vmatprep.subr.mxu0 0.0
        %3622 = vmatpush1.msra.mxu0 0.0
        %3623 = vmatprep.subr.mxu0 0.0
        %3624 = vmatpush1.msra.mxu0 0.0
        %3625 = vmatprep.subr.mxu0 0.0
        %3626 = vmatpush1.msra.mxu0 0.0
        %3627 = vmatprep.subr.mxu0 0.0
        %3628 = vmatpush1.msra.mxu0 0.0
        %3629 = vmatprep.subr.mxu0 0.0
        %3630 = vmatpush1.msra.mxu0 0.0
        %3631 = vmatprep.subr.mxu0 0.0
        %3632 = vmatpush1.msra.mxu0 0.0
        %3633 = vmatprep.subr.mxu0 0.0
        %3634 = vmatpush1.msra.mxu0 0.0
        %3635 = vmatprep.subr.mxu0 0.0
        %3636 = vmatpush1.msra.mxu0 0.0
        %3637 = vmatprep.subr.mxu0 0.0
        %3638 = vmatpush1.msra.mxu0 0.0
        %3639 = vmatprep.subr.mxu0 0.0
        %3640 = vmatpush1.msra.mxu0 0.0
        %3641 = vmatprep.subr.mxu0 0.0
        %3642 = vmatpush1.msra.mxu0 0.0
        %3643 = vmatprep.subr.mxu0 0.0
        %3644 = vmatpush1.msra.mxu0 0.0
        %3645 = vmatprep.subr.mxu0 0.0
        %3646 = vmatpush1.msra.mxu0 0.0
        %3647 = vmatprep.subr.mxu0 0.0
        %3648 = vmatpush1.msra.mxu0 0.0
        %3649 = vmatprep.subr.mxu0 0.0
        %3650 = vmatpush1.msra.mxu0 0.0
        %3651 = vmatprep.subr.mxu0 0.0
        %3652 = vmatpush1.msra.mxu0 0.0
        %3653 = vmatprep.mubr.f32.mxu0 0.0
        %3654 = vmatmul.mubr.f32.gmra.mrb[0].mxu0 %v3137
        %v3655 = vpop.f32.mrb[0].mxu0
        %v3656 = vadd.f32 0.0, %v3655
        %v3657 = vpop.f32.mrb[0].mxu0
        %3658 = vmatprep.mubr.f32.mxu0 0.0
        %3659 = vmatmul.mubr.f32.gmra.mrb[0].mxu0 %v3138
        %v3660 = vpop.f32.mrb[0].mxu0
        %v3661 = vadd.f32 0.0, %v3660
        %v3662 = vpop.f32.mrb[0].mxu0
        %3663 = vdwg.mxu0
        %3664 = vmatprep.subr.mxu0 0.0
        %3665 = vmatpush1.msra.mxu0 %v1733
        %3666 = vmatprep.subr.mxu0 0.0
        %3667 = vmatpush1.msra.mxu0 %v1734
        %3668 = vmatprep.subr.mxu0 0.0
        %3669 = vmatpush1.msra.mxu0 %v1735
        %3670 = vmatprep.subr.mxu0 0.0
        %3671 = vmatpush1.msra.mxu0 %v1736
        %3672 = vmatprep.subr.mxu0 0.0
        %3673 = vmatpush1.msra.mxu0 %v1737
        %3674 = vmatprep.subr.mxu0 0.0
        %3675 = vmatpush1.msra.mxu0 %v1738
        %3676 = vmatprep.subr.mxu0 0.0
        %3677 = vmatpush1.msra.mxu0 %v1739
        %3678 = vmatprep.subr.mxu0 0.0
        %3679 = vmatpush1.msra.mxu0 %v1740
        %3680 = vmatprep.subr.mxu0 0.0
        %3681 = vmatpush1.msra.mxu0 %v1741
        %3682 = vmatprep.subr.mxu0 0.0
        %3683 = vmatpush1.msra.mxu0 %v1742
        %3684 = vmatprep.subr.mxu0 0.0
        %3685 = vmatpush1.msra.mxu0 %v1743
        %3686 = vmatprep.subr.mxu0 0.0
        %3687 = vmatpush1.msra.mxu0 %v1744
        %3688 = vmatprep.subr.mxu0 0.0
        %3689 = vmatpush1.msra.mxu0 %v1745
        %3690 = vmatprep.subr.mxu0 0.0
        %3691 = vmatpush1.msra.mxu0 %v1746
        %3692 = vmatprep.subr.mxu0 0.0
        %3693 = vmatpush1.msra.mxu0 %v1747
        %3694 = vmatprep.subr.mxu0 0.0
        %3695 = vmatpush1.msra.mxu0 %v1748
        %3696 = vmatprep.subr.mxu0 0.0
        %3697 = vmatpush1.msra.mxu0 0.0
        %3698 = vmatprep.subr.mxu0 0.0
        %3699 = vmatpush1.msra.mxu0 0.0
        %3700 = vmatprep.subr.mxu0 0.0
        %3701 = vmatpush1.msra.mxu0 0.0
        %3702 = vmatprep.subr.mxu0 0.0
        %3703 = vmatpush1.msra.mxu0 0.0
        %3704 = vmatprep.subr.mxu0 0.0
        %3705 = vmatpush1.msra.mxu0 0.0
        %3706 = vmatprep.subr.mxu0 0.0
        %3707 = vmatpush1.msra.mxu0 0.0
        %3708 = vmatprep.subr.mxu0 0.0
        %3709 = vmatpush1.msra.mxu0 0.0
        %3710 = vmatprep.subr.mxu0 0.0
        %3711 = vmatpush1.msra.mxu0 0.0
        %3712 = vmatprep.subr.mxu0 0.0
        %3713 = vmatpush1.msra.mxu0 0.0
        %3714 = vmatprep.subr.mxu0 0.0
        %3715 = vmatpush1.msra.mxu0 0.0
        %3716 = vmatprep.subr.mxu0 0.0
        %3717 = vmatpush1.msra.mxu0 0.0
        %3718 = vmatprep.subr.mxu0 0.0
        %3719 = vmatpush1.msra.mxu0 0.0
        %3720 = vmatprep.subr.mxu0 0.0
        %3721 = vmatpush1.msra.mxu0 0.0
        %3722 = vmatprep.subr.mxu0 0.0
        %3723 = vmatpush1.msra.mxu0 0.0
        %3724 = vmatprep.subr.mxu0 0.0
        %3725 = vmatpush1.msra.mxu0 0.0
        %3726 = vmatprep.subr.mxu0 0.0
        %3727 = vmatpush1.msra.mxu0 0.0
        %3728 = vmatprep.mubr.f32.mxu0 0.0
        %3729 = vmatmul.mubr.f32.gmra.mrb[0].mxu0 %v3137
        %v3730 = vpop.f32.mrb[0].mxu0
        %v3731 = vadd.f32 0.0, %v3730
        %v3732 = vpop.f32.mrb[0].mxu0
        %3733 = vmatprep.mubr.f32.mxu0 0.0
        %3734 = vmatmul.mubr.f32.gmra.mrb[0].mxu0 %v3138
        %v3735 = vpop.f32.mrb[0].mxu0
        %v3736 = vadd.f32 0.0, %v3735
        %v3737 = vpop.f32.mrb[0].mxu0
        %3738 = vdwg.mxu0
        %3739 = vmatprep.subr.mxu0 0.0
        %3740 = vmatpush1.msra.mxu0 %v1749
        %3741 = vmatprep.subr.mxu0 0.0
        %3742 = vmatpush1.msra.mxu0 %v1750
        %3743 = vmatprep.subr.mxu0 0.0
        %3744 = vmatpush1.msra.mxu0 %v1751
        %3745 = vmatprep.subr.mxu0 0.0
        %3746 = vmatpush1.msra.mxu0 %v1752
        %3747 = vmatprep.subr.mxu0 0.0
        %3748 = vmatpush1.msra.mxu0 %v1753
        %3749 = vmatprep.subr.mxu0 0.0
        %3750 = vmatpush1.msra.mxu0 %v1754
        %3751 = vmatprep.subr.mxu0 0.0
        %3752 = vmatpush1.msra.mxu0 %v1755
        %3753 = vmatprep.subr.mxu0 0.0
        %3754 = vmatpush1.msra.mxu0 %v1756
        %3755 = vmatprep.subr.mxu0 0.0
        %3756 = vmatpush1.msra.mxu0 %v1757
        %3757 = vmatprep.subr.mxu0 0.0
        %3758 = vmatpush1.msra.mxu0 %v1758
        %3759 = vmatprep.subr.mxu0 0.0
        %3760 = vmatpush1.msra.mxu0 %v1759
        %3761 = vmatprep.subr.mxu0 0.0
        %3762 = vmatpush1.msra.mxu0 %v1760
        %3763 = vmatprep.subr.mxu0 0.0
        %3764 = vmatpush1.msra.mxu0 %v1761
        %3765 = vmatprep.subr.mxu0 0.0
        %3766 = vmatpush1.msra.mxu0 %v1762
        %3767 = vmatprep.subr.mxu0 0.0
        %3768 = vmatpush1.msra.mxu0 %v1763
        %3769 = vmatprep.subr.mxu0 0.0
        %3770 = vmatpush1.msra.mxu0 %v1764
        %3771 = vmatprep.subr.mxu0 0.0
        %3772 = vmatpush1.msra.mxu0 0.0
        %3773 = vmatprep.subr.mxu0 0.0
        %3774 = vmatpush1.msra.mxu0 0.0
        %3775 = vmatprep.subr.mxu0 0.0
        %3776 = vmatpush1.msra.mxu0 0.0
        %3777 = vmatprep.subr.mxu0 0.0
        %3778 = vmatpush1.msra.mxu0 0.0
        %3779 = vmatprep.subr.mxu0 0.0
        %3780 = vmatpush1.msra.mxu0 0.0
        %3781 = vmatprep.subr.mxu0 0.0
        %3782 = vmatpush1.msra.mxu0 0.0
        %3783 = vmatprep.subr.mxu0 0.0
        %3784 = vmatpush1.msra.mxu0 0.0
        %3785 = vmatprep.subr.mxu0 0.0
        %3786 = vmatpush1.msra.mxu0 0.0
        %3787 = vmatprep.subr.mxu0 0.0
        %3788 = vmatpush1.msra.mxu0 0.0
        %3789 = vmatprep.subr.mxu0 0.0
        %3790 = vmatpush1.msra.mxu0 0.0
        %3791 = vmatprep.subr.mxu0 0.0
        %3792 = vmatpush1.msra.mxu0 0.0
        %3793 = vmatprep.subr.mxu0 0.0
        %3794 = vmatpush1.msra.mxu0 0.0
        %3795 = vmatprep.subr.mxu0 0.0
        %3796 = vmatpush1.msra.mxu0 0.0
        %3797 = vmatprep.subr.mxu0 0.0
        %3798 = vmatpush1.msra.mxu0 0.0
        %3799 = vmatprep.subr.mxu0 0.0
        %3800 = vmatpush1.msra.mxu0 0.0
        %3801 = vmatprep.subr.mxu0 0.0
        %3802 = vmatpush1.msra.mxu0 0.0
        %3803 = vmatprep.mubr.f32.mxu0 0.0
        %3804 = vmatmul.mubr.f32.gmra.mrb[0].mxu0 %v3137
        %v3805 = vpop.f32.mrb[0].mxu0
        %v3806 = vadd.f32 0.0, %v3805
        %v3807 = vpop.f32.mrb[0].mxu0
        %3808 = vmatprep.mubr.f32.mxu0 0.0
        %3809 = vmatmul.mubr.f32.gmra.mrb[0].mxu0 %v3138
        %v3810 = vpop.f32.mrb[0].mxu0
        %v3811 = vadd.f32 0.0, %v3810
        %v3812 = vpop.f32.mrb[0].mxu0
        %3813 = vdwg.mxu0
        %v3814 = vld [vmem:[%s8] sm:$0xff]
        %v3815 = vld [vmem:[%s8 + $0x8] sm:$0xff]
        %v3816 = vld [vmem:[%s8 + $0x10] sm:$0xff]
        %v3817 = vld [vmem:[%s8 + $0x18] sm:$0xff]
        %3819 = vset.pattern.permute.xlu0 0
        %3820 = vperm.xlu0 %3819, %v3814
        %v3821 = vpop.permute.xlu0 %3820
        %3824 = vset.pattern.permute.xlu0 0
        %3825 = vperm.xlu0 %3824, %v3815
        %v3826 = vpop.permute.xlu0 %3825
        %3829 = vset.pattern.permute.xlu0 0
        %3830 = vperm.xlu0 %3829, %v3816
        %v3831 = vpop.permute.xlu0 %3830
        %3834 = vset.pattern.permute.xlu0 0
        %3835 = vperm.xlu0 %3834, %v3817
        %v3836 = vpop.permute.xlu0 %3835
        %vm3838 = vcmask 130048
        %v3840 = vsel %vm3838, %v1768, 0
        %v3843 = vsel %vm3838, %v1770, 0
        %v3846 = vsel %vm3838, %v1772, 0
        %v3849 = vsel %vm3838, %v1774, 0
        %3851 = vmatprep.subr.mxu0 0.0
        %3852 = vmatpush1.msra.mxu0 %v3206
        %3853 = vmatprep.subr.mxu0 0.0
        %3854 = vmatpush1.msra.mxu0 %v3211
        %3855 = vmatprep.subr.mxu0 0.0
        %3856 = vmatpush1.msra.mxu0 %v3281
        %3857 = vmatprep.subr.mxu0 0.0
        %3858 = vmatpush1.msra.mxu0 %v3286
        %3859 = vmatprep.subr.mxu0 0.0
        %3860 = vmatpush1.msra.mxu0 %v3356
        %3861 = vmatprep.subr.mxu0 0.0
        %3862 = vmatpush1.msra.mxu0 %v3361
        %3863 = vmatprep.subr.mxu0 0.0
        %3864 = vmatpush1.msra.mxu0 %v3431
        %3865 = vmatprep.subr.mxu0 0.0
        %3866 = vmatpush1.msra.mxu0 %v3436
        %3867 = vmatprep.subr.mxu0 0.0
        %3868 = vmatpush1.msra.mxu0 %v3506
        %3869 = vmatprep.subr.mxu0 0.0
        %3870 = vmatpush1.msra.mxu0 %v3511
        %3871 = vmatprep.subr.mxu0 0.0
        %3872 = vmatpush1.msra.mxu0 %v3581
        %3873 = vmatprep.subr.mxu0 0.0
        %3874 = vmatpush1.msra.mxu0 %v3586
        %3875 = vmatprep.subr.mxu0 0.0
        %3876 = vmatpush1.msra.mxu0 %v3656
        %3877 = vmatprep.subr.mxu0 0.0
        %3878 = vmatpush1.msra.mxu0 %v3661
        %3879 = vmatprep.subr.mxu0 0.0
        %3880 = vmatpush1.msra.mxu0 %v3731
        %3881 = vmatprep.subr.mxu0 0.0
        %3882 = vmatpush1.msra.mxu0 %v3736
        %3883 = vmatprep.subr.mxu0 0.0
        %3884 = vmatpush1.msra.mxu0 %v3806
        %3885 = vmatprep.subr.mxu0 0.0
        %3886 = vmatpush1.msra.mxu0 %v3811
        %3887 = vmatprep.subr.mxu0 0.0
        %3888 = vmatpush1.msra.mxu0 0.0
        %3889 = vmatprep.subr.mxu0 0.0
        %3890 = vmatpush1.msra.mxu0 0.0
        %3891 = vmatprep.subr.mxu0 0.0
        %3892 = vmatpush1.msra.mxu0 0.0
        %3893 = vmatprep.subr.mxu0 0.0
        %3894 = vmatpush1.msra.mxu0 0.0
        %3895 = vmatprep.subr.mxu0 0.0
        %3896 = vmatpush1.msra.mxu0 0.0
        %3897 = vmatprep.subr.mxu0 0.0
        %3898 = vmatpush1.msra.mxu0 0.0
        %3899 = vmatprep.subr.mxu0 0.0
        %3900 = vmatpush1.msra.mxu0 0.0
        %3901 = vmatprep.subr.mxu0 0.0
        %3902 = vmatpush1.msra.mxu0 0.0
        %3903 = vmatprep.subr.mxu0 0.0
        %3904 = vmatpush1.msra.mxu0 0.0
        %3905 = vmatprep.subr.mxu0 0.0
        %3906 = vmatpush1.msra.mxu0 0.0
        %3907 = vmatprep.subr.mxu0 0.0
        %3908 = vmatpush1.msra.mxu0 0.0
        %3909 = vmatprep.subr.mxu0 0.0
        %3910 = vmatpush1.msra.mxu0 0.0
        %3911 = vmatprep.subr.mxu0 0.0
        %3912 = vmatpush1.msra.mxu0 0.0
        %3913 = vmatprep.subr.mxu0 0.0
        %3914 = vmatpush1.msra.mxu0 0.0
        %3915 = vmatprep.mubr.f32.mxu0 %v3840
        %3916 = vmatmul.mubr.f32.gmra.mrb[0].mxu0 %v1767
        %v3917 = vpop.f32.mrb[0].mxu0
        %v3918 = vadd.f32 %v3821, %v3917
        %v3919 = vpop.f32.mrb[0].mxu0
        %3920 = vmatprep.mubr.f32.mxu0 %v3843
        %3921 = vmatmul.mubr.f32.gmra.mrb[0].mxu0 %v1769
        %v3922 = vpop.f32.mrb[0].mxu0
        %v3923 = vadd.f32 %v3826, %v3922
        %v3924 = vpop.f32.mrb[0].mxu0
        %3925 = vmatprep.mubr.f32.mxu0 %v3846
        %3926 = vmatmul.mubr.f32.gmra.mrb[0].mxu0 %v1771
        %v3927 = vpop.f32.mrb[0].mxu0
        %v3928 = vadd.f32 %v3831, %v3927
        %v3929 = vpop.f32.mrb[0].mxu0
        %3930 = vmatprep.mubr.f32.mxu0 %v3849
        %3931 = vmatmul.mubr.f32.gmra.mrb[0].mxu0 %v1773
        %v3932 = vpop.f32.mrb[0].mxu0
        %v3933 = vadd.f32 %v3836, %v3932
        %v3934 = vpop.f32.mrb[0].mxu0
        %3935 = vdwg.mxu0
        %v3936 = vmax.f32 %v3918, 0.0
        %v3937 = vmax.f32 %v3923, 0.0
        %v3938 = vmax.f32 %v3928, 0.0
        %v3939 = vmax.f32 %v3933, 0.0
        %v3940 = vmul.f32 %v1775, %v3936
        %v3941 = vmul.f32 %v1776, %v3937
        %v3942 = vmul.f32 %v1777, %v3938
        %v3943 = vmul.f32 %v1778, %v3939
        %v3944 = vmul.f32 %v1779, %v3936
        %v3945 = vmul.f32 %v1780, %v3937
        %v3946 = vmul.f32 %v1781, %v3938
        %v3947 = vmul.f32 %v1782, %v3939
        %v3948 = vsel %vm3838, %v3940, 0.0
        %3949 = vadd.xlane.f32.xlu0 %v3948
        %v3950 = vpop.xlane.xlu0 %3949
        %v3951 = vsel %vm3838, %v3941, 0.0
        %3952 = vadd.xlane.f32.xlu0 %v3951
        %v3953 = vpop.xlane.xlu0 %3952
        %v3954 = vsel %vm3838, %v3942, 0.0
        %3955 = vadd.xlane.f32.xlu0 %v3954
        %v3956 = vpop.xlane.xlu0 %3955
        %v3957 = vsel %vm3838, %v3943, 0.0
        %3958 = vadd.xlane.f32.xlu0 %v3957
        %v3959 = vpop.xlane.xlu0 %3958
        %v3960 = vsel %vm3838, %v3944, 0.0
        %3961 = vadd.xlane.f32.xlu0 %v3960
        %v3962 = vpop.xlane.xlu0 %3961
        %v3963 = vsel %vm3838, %v3945, 0.0
        %3964 = vadd.xlane.f32.xlu0 %v3963
        %v3965 = vpop.xlane.xlu0 %3964
        %v3966 = vsel %vm3838, %v3946, 0.0
        %3967 = vadd.xlane.f32.xlu0 %v3966
        %v3968 = vpop.xlane.xlu0 %3967
        %v3969 = vsel %vm3838, %v3947, 0.0
        %3970 = vadd.xlane.f32.xlu0 %v3969
        %v3971 = vpop.xlane.xlu0 %3970
        %v3980 = vlaneseq
        %v3981 = vand.u32 %v3980, 127
        %v3982 = vlaneseq
        %v3983 = vshrl.u32 %v3982, 7
        %v3984 = vsub.s32 %v3981, %v3983
        %v3985 = vrot.slane %v3950, %v3984
        %v3986 = vadd.s32 %v3981, 4294967288
        %v3987 = vlaneseq
        %v3988 = vshrl.u32 %v3987, 7
        %v3989 = vsub.s32 %v3986, %v3988
        %v3990 = vrot.slane %v3953, %v3989
        %vm3991 = vcmask 130112
        %v3992 = vsel %vm3991, %v3990, %v3985
        %v3993 = vadd.s32 %v3981, 4294967280
        %v3994 = vlaneseq
        %v3995 = vshrl.u32 %v3994, 7
        %v3996 = vsub.s32 %v3993, %v3995
        %v3997 = vrot.slane %v3956, %v3996
        %vm3998 = vcmask 195712
        %v3999 = vsel %vm3998, %v3997, %v3992
        %v4000 = vadd.s32 %v3981, 4294967272
        %v4001 = vlaneseq
        %v4002 = vshrl.u32 %v4001, 7
        %v4003 = vsub.s32 %v4000, %v4002
        %v4004 = vrot.slane %v3959, %v4003
        %vm4005 = vcmask 261312
        %v4006 = vsel %vm4005, %v4004, %v3999
        %v4007 = vlaneseq
        %v4008 = vshrl.u32 %v4007, 7
        %v4009 = vsub.s32 %v3981, %v4008
        %v4010 = vrot.slane %v3962, %v4009
        %v4011 = vlaneseq
        %v4012 = vshrl.u32 %v4011, 7
        %v4013 = vsub.s32 %v3986, %v4012
        %v4014 = vrot.slane %v3965, %v4013
        %v4015 = vsel %vm3991, %v4014, %v4010
        %v4016 = vlaneseq
        %v4017 = vshrl.u32 %v4016, 7
        %v4018 = vsub.s32 %v3993, %v4017
        %v4019 = vrot.slane %v3968, %v4018
        %v4020 = vsel %vm3998, %v4019, %v4015
        %v4021 = vlaneseq
        %v4022 = vshrl.u32 %v4021, 7
        %v4023 = vsub.s32 %v4000, %v4022
        %v4024 = vrot.slane %v3971, %v4023
        %v4025 = vsel %vm4005, %v4024, %v4020
        %vm4026 = vcmask 1041409
        %v4027 = vsel %vm4026, %v4025, %v4006
        %vm4029 = vcmask 254976
        %v4030 = vsel %vm4029, %v4027, 0.0
        %4031 = vadd.xlane.f32.xlu0 %v4030
        %v4032 = vpop.xlane.xlu0 %4031
        %v4033 = vld [vmem:[%s10] sm:$0x3]
        %v4034 = vadd.f32 %v4032, %v4033
        %vm4035 = vcmask 1024
        %4036 = vst.msk [vmem:[%s439] sm:$0x3] %vm4035, %v4034
        %p4037 = scmp.lt.s32.totalorder %s22, 1
        %s4038 = scalar_select %p4037, %s22, 1
        %s4039 = smul.addr %s4038, 2
        %s4040 = scalar_lea.vmem %s11, %s4039
        // Predicated region
        $region88: #{cnn_net_forward.1} parent=82 // pred_check
          %p4041 = pneg %p276
        $region89: #{cnn_net_forward.1} parent=82 // pred_check_branch
          %4043 = sbr.rel (%p4041) target = $region91
        $region90: #{cnn_net_forward.1} parent=82 // pred_region
          _
        $region91: #{cnn_net_forward.1} parent=82 // pred_fallthru
          _
      $region83: #{cnn_net_forward.1} parent=5 // pred_fallthru
        _
      %p4044 = scmp.le.s32.totalorder 2, %s17
      // Predicated region
      $region92: #{cnn_net_forward.1} parent=5 // pred_check
        %p4045 = pneg %p4044
      $region93: #{cnn_net_forward.1} parent=5 // pred_check_branch
        %4047 = sbr.rel (%p4045) target = $region95
      $region94: #{cnn_net_forward.1} parent=5 // pred_region
        %s4048 = ssub.s32 %s17, 2
        // Predicated region
        $region96: #{cnn_net_forward.1} parent=94 // pred_check
          %p4049 = pneg %p282
        $region97: #{cnn_net_forward.1} parent=94 // pred_check_branch
          %4051 = sbr.rel (%p4049) target = $region99
        $region98: #{cnn_net_forward.1} parent=94 // pred_region
          %p4052 = scmp.lt.s32.totalorder %s23, 1
          %s4053 = scalar_select %p4052, %s23, 1
          %s4054 = smul.addr %s4053, 2
          %s4055 = scalar_lea.vmem %s11, %s4054
        $region99: #{cnn_net_forward.1} parent=94 // pred_fallthru
          _
      $region95: #{cnn_net_forward.1} parent=5 // pred_fallthru
        _
    $region6: #{cnn_net_forward.1} parent=1 // loop_footer
      %s21 = sadd.s32 1, %s17
    $region7: #{cnn_net_forward.1} parent=1 // loop_footer_branch
      %16 = sbr.rel target = $region3
    $region8: #{cnn_net_forward.1} parent=1 // loop_exit
      _

</llo_original>
